<compile_context>
chip_gen: v6e
topology: v6e:2x2x1
jax: 0.10.0
libtpu: 0.0.40
codegen_flags: <defaults>
</compile_context>

<pallas_src>
import jax
import jax.numpy as jnp
import numpy as np
from jax.experimental import pallas as pl
from jax.experimental.pallas import tpu as pltpu


def resnet_pointnet_kernel(p_ref, fcpos_w_ref, fcpos_b_ref,
                           b0_fc0_w_ref, b0_fc0_b_ref,
                           b0_scfc1_w_ref, b0_fc1_b_ref,
                           fc0_top_ref, fc0_b_ref,
                           row_w_ref, scfc1_w_ref, fc1_b_ref,
                           out_ref):
    BB, T, dim = p_ref.shape              # BB point clouds per grid step
    H = out_ref.shape[-1]
    M = BB * T
    f32, bf16 = jnp.float32, jnp.bfloat16
    relu = lambda x: jnp.maximum(x, 0.0)

    # ---- fc_pos: K = dim (=3) would be a nearly empty MXU pass -> VPU FMAs --
    # TODO(synk): for very large T, pass p transposed as (B, dim, T) so the
    # HBM->VMEM block is lane-dense instead of padding dim 3 -> 128 lanes.
    p2 = p_ref[...].reshape(M, dim)                       # (M, dim) f32
    fcpos_w = fcpos_w_ref[...]                            # (dim, 2H) f32
    net = p2[:, 0:1] * fcpos_w[0:1, :]
    for d in range(1, dim):
        net = net + p2[:, d:d + 1] * fcpos_w[d:d + 1, :]
    net = net + fcpos_b_ref[...]                          # (M, 2H) f32

    # ---- block_0 (true 2H-wide input) ---------------------------------------
    # Shortcut and fc_1 K-fused: xs + dx = [net | relu(h)] @ [sc_w ; fc1_w].
    net_bf = net.astype(bf16)                             # cast once
    rb = relu(net_bf)                                     # relu commutes with downcast
    h = jnp.dot(rb, b0_fc0_w_ref[...], preferred_element_type=f32) + b0_fc0_b_ref[...]
    a = relu(h).astype(bf16)
    lhs0 = jnp.concatenate([net_bf, a], axis=-1)          # (M, 3H) bf16
    x2 = jnp.dot(lhs0, b0_scfc1_w_ref[...], preferred_element_type=f32) + b0_fc1_b_ref[...]
    pooled = jnp.max(x2.reshape(BB, T, H), axis=1)        # (BB, H) per-cloud max

    # ---- blocks 1, 3, 4: input is cat([x, pooled_broadcast]) ----------------
    # cat([x, m]) @ W == x @ W_top + m @ W_bot; the pooled row m is identical
    # for all T points of a cloud, so its fc_0 and shortcut contributions are
    # single (BB, H) rows.  Both row matmuls are merged into ONE small MXU
    # pass ([relu(m); m] @ [fc0_bot | sc_bot]); the per-point shortcut and
    # fc_1 matmuls are K-fused into one (M, 2H) x (2H, H) pass.
    for i in range(3):     # kept unrolled: only 3 iterations, no spill pressure
        x2_bf = x2.astype(bf16)                           # cast once per block
        rx = relu(x2_bf)                                  # (M, H) bf16
        row_lhs = jnp.concatenate([relu(pooled), pooled], axis=0).astype(bf16)  # (2BB, H)
        rows = jnp.dot(row_lhs, row_w_ref[i], preferred_element_type=f32)       # (2BB, 2H)
        h_row = rows[:BB, :H] + fc0_b_ref[i]              # relu(pooled) @ fc0_bot + b
        xs_row = rows[BB:, H:]                            # pooled @ sc_bot
        h_top = jnp.dot(rx, fc0_top_ref[i], preferred_element_type=f32)         # (M, H)
        h3 = h_top.reshape(BB, T, H) + h_row[:, None, :]                        # (BB,T,H)
        a = relu(h3).reshape(M, H).astype(bf16)
        lhs = jnp.concatenate([x2_bf, a], axis=-1)        # (M, 2H) bf16
        y = jnp.dot(lhs, scfc1_w_ref[i], preferred_element_type=f32) + fc1_b_ref[i]
        x3 = y.reshape(BB, T, H) + xs_row[:, None, :]     # shortcut + dx
        x2 = x3.reshape(M, H)
        pooled = jnp.max(x3, axis=1)                      # (BB, H)

    # pooled after block_4 is the per-point-cloud feature; relu + fc_c run as
    # one dense (B, H) x (H, out_dim) matmul outside the kernel.
    out_ref[...] = pooled


def resnet_pointnet(p, params, *, batch_block=None):
    """Pallas TPU forward of ResnetPointnet. p: (B, T, dim) float32."""
    B, T, dim = p.shape
    H2, H = params["blk_fc0_w"].shape[1], params["blk_fc0_w"].shape[2]
    out_dim = params["fcc_w"].shape[1]
    assert H2 == 2 * H
    # TODO(synk): support T not a multiple of 8 (pad + mask padded rows to -inf
    # before each max-pool) and chunk T with a running max inside the kernel so
    # a single huge point cloud still fits v7x's 64 MiB VMEM.
    assert T % 8 == 0, "this kernel requires T to be a multiple of 8"

    f32, bf16 = jnp.float32, jnp.bfloat16
    fc0_w, fc0_b = params["blk_fc0_w"], params["blk_fc0_b"]   # (4,2H,H), (4,H)
    fc1_w, fc1_b = params["blk_fc1_w"], params["blk_fc1_b"]   # (4,H,H),  (4,H)
    sc_w = params["blk_sc_w"]                                 # (4,2H,H)

    weights = [
        params["fcpos_w"].astype(f32),                        # (dim,2H)  VPU path -> f32
        params["fcpos_b"].reshape(1, 2 * H).astype(f32),      # (1,2H)
        fc0_w[0].astype(bf16),                                # (2H,H)    block_0 fc_0
        fc0_b[0].reshape(1, H).astype(f32),                   # (1,H)
        jnp.concatenate([sc_w[0], fc1_w[0]], axis=0).astype(bf16),               # (3H,H) K-fused sc+fc1
        fc1_b[0].reshape(1, H).astype(f32),                   # (1,H)
        fc0_w[1:, :H, :].astype(bf16),                        # (3,H,H)   fc_0 top half
        fc0_b[1:].reshape(3, 1, H).astype(f32),               # (3,1,H)
        jnp.concatenate([fc0_w[1:, H:, :], sc_w[1:, H:, :]], axis=2).astype(bf16),  # (3,H,2H) merged row matmul
        jnp.concatenate([sc_w[1:, :H, :], fc1_w[1:]], axis=1).astype(bf16),         # (3,2H,H) K-fused sc_top+fc1
        fc1_b[1:].reshape(3, 1, H).astype(f32),               # (3,1,H)
    ]
    w_bytes = sum(int(w.size) * w.dtype.itemsize for w in weights)

    # Physical VMEM per generation -> scoped limit (~85%) instead of a fixed cap.
    try:
        vmem_phys = int(pltpu.get_tpu_info().vmem_capacity_bytes)
    except Exception:
        vmem_phys = 64 << 20                     # conservative (v7x per-core) fallback
    vmem_limit = int(0.85 * vmem_phys)

    # ---- BB (point clouds per grid step) selection ---------------------------
    # Live f32/bf16 temporaries per cloud (block_0 region dominates) plus the
    # double-buffered, lane-padded (T, dim -> 128 lanes) input block.
    act_per_cloud = 36 * T * H
    io_per_cloud = 2 * T * 128 * 4
    budget = vmem_limit - w_bytes - (4 << 20)    # headroom for compiler scratch
    bb_vmem = max(1, budget // (act_per_cloud + io_per_cloud))
    bb_mxu = -(-512 // T)                        # target M = BB*T >= 512 (2x256 MXU)
    bb = min(bb_vmem, bb_mxu)
    if batch_block is not None:
        bb = min(bb, batch_block)
    if B >= 2:
        bb = min(bb, -(-B // 2))                 # keep grid >= 2 (both v7x TCs busy)
    bb = max(1, bb)
    if (bb * T) % 16 != 0 and bb > 1 and bb % 2 == 1:
        bb -= 1                                  # keep BB*T a multiple of 16 for bf16
    grid = -(-B // bb)
    b_pad = grid * bb

    p_f32 = p.astype(f32)
    if b_pad != B:                               # pad B instead of shrinking BB
        p_f32 = jnp.pad(p_f32, ((0, b_pad - B), (0, 0), (0, 0)))

    # Whole-array, single-copy VMEM residency for the grid-invariant weights
    # (no block_shape/index_map -> nothing for the pipeliner to double-buffer).
    weight_specs = [pl.BlockSpec(memory_space=pltpu.MemorySpace.VMEM)
                    for _ in weights]

    feats = pl.pallas_call(
        resnet_pointnet_kernel,
        out_shape=jax.ShapeDtypeStruct((b_pad, H), jnp.float32),
        grid_spec=pltpu.PrefetchScalarGridSpec(
            num_scalar_prefetch=0,
            grid=(grid,),
            in_specs=[pl.BlockSpec((bb, T, dim), lambda g: (g, 0, 0))]
                     + weight_specs,
            out_specs=pl.BlockSpec((bb, H), lambda g: (g, 0)),
        ),
        compiler_params=pltpu.CompilerParams(
            dimension_semantics=("parallel",),
            vmem_limit_bytes=vmem_limit),
    )(p_f32, *weights)

    feats = feats[:B]
    # fc_c(relu(.)) hoisted out of the kernel: one dense, lane/sublane-friendly
    # (B, H) x (H, out_dim) matmul in XLA.
    return jnp.maximum(feats, 0.0) @ params["fcc_w"] + params["fcc_b"].reshape(1, out_dim)


def init_params(key, dim, hidden_dim, out_dim):
    """Deterministic synthetic init.  NOTE: unlike the PyTorch __init__ (which
    zero-initializes fc_1 weights), fc_1 weights are non-zero here so the test
    numerically exercises the fused shortcut+fc_1 matmul path."""
    H, H2 = hidden_dim, 2 * hidden_dim
    keys = jax.random.split(key, 10)
    s = 0.1
    return {
        "fcpos_w": s * jax.random.normal(keys[0], (dim, H2), jnp.float32),
        "fcpos_b": s * jax.random.normal(keys[1], (1, H2), jnp.float32),
        # 4 blocks used in forward (block_0, block_1, block_3, block_4), all 2H->H
        "blk_fc0_w": s * jax.random.normal(keys[2], (4, H2, H), jnp.float32),
        "blk_fc0_b": s * jax.random.normal(keys[3], (4, H), jnp.float32),
        "blk_fc1_w": 0.05 * jax.random.normal(keys[4], (4, H, H), jnp.float32),
        "blk_fc1_b": s * jax.random.normal(keys[5], (4, H), jnp.float32),
        "blk_sc_w": s * jax.random.normal(keys[6], (4, H2, H), jnp.float32),
        "fcc_w": s * jax.random.normal(keys[7], (H, out_dim), jnp.float32),
        "fcc_b": s * jax.random.normal(keys[8], (1, out_dim), jnp.float32),
    }


def resnet_pointnet_ref(p, params):
    """Pure-JAX f32 reference of the PyTorch forward pass (for validation)."""
    relu = lambda x: jnp.maximum(x, 0.0)

    def resblock(i, x):
        h = relu(x) @ params["blk_fc0_w"][i] + params["blk_fc0_b"][i]
        dx = relu(h) @ params["blk_fc1_w"][i] + params["blk_fc1_b"][i]
        xs = x @ params["blk_sc_w"][i]
        return xs + dx

    net = p @ params["fcpos_w"] + params["fcpos_b"]         # (B, T, 2H)
    for i in range(3):
        net = resblock(i, net)                              # (B, T, H)
        pooled = jnp.max(net, axis=1, keepdims=True)
        pooled = jnp.broadcast_to(pooled, net.shape)
        net = jnp.concatenate([net, pooled], axis=2)        # (B, T, 2H)
    net = resblock(3, net)                                  # (B, T, H)
    net = jnp.max(net, axis=1)                              # (B, H)
    return relu(net) @ params["fcc_w"] + params["fcc_b"]    # (B, out_dim)


if __name__ == "__main__":
    B, T, dim = 16, 16, 3
    hidden_dim, out_dim = 32, 16

    key = jax.random.PRNGKey(0)
    k_p, k_w = jax.random.split(key)
    p = jax.random.normal(k_p, (B, T, dim), jnp.float32)
    params = init_params(k_w, dim, hidden_dim, out_dim)

    c = resnet_pointnet(p, params)
    c = jax.block_until_ready(c)

    c_ref = resnet_pointnet_ref(p, params)
    # Kernel runs the matmuls with bf16 MXU inputs (f32 accumulation); compare
    # against the f32 reference with bf16-level tolerance.
    np.testing.assert_allclose(np.asarray(c), np.asarray(c_ref),
                               rtol=2e-2, atol=2e-2)
    print("KERNEL_OK")
</pallas_src>

<mosaic_0001>
module attributes {stable_mosaic.version = 11 : i64} {
  func.func @resnet_pointnet_kernel(%arg0: i32, %arg1: memref<8x16x3xf32, #tpu.memory_space<vmem>>, %arg2: memref<3x64xf32, #tpu.memory_space<vmem>>, %arg3: memref<1x64xf32, #tpu.memory_space<vmem>>, %arg4: memref<64x32xbf16, #tpu.memory_space<vmem>>, %arg5: memref<1x32xf32, #tpu.memory_space<vmem>>, %arg6: memref<96x32xbf16, #tpu.memory_space<vmem>>, %arg7: memref<1x32xf32, #tpu.memory_space<vmem>>, %arg8: memref<3x32x32xbf16, #tpu.memory_space<vmem>>, %arg9: memref<3x1x32xf32, #tpu.memory_space<vmem>>, %arg10: memref<3x32x64xbf16, #tpu.memory_space<vmem>>, %arg11: memref<3x64x32xbf16, #tpu.memory_space<vmem>>, %arg12: memref<3x1x32xf32, #tpu.memory_space<vmem>>, %arg13: memref<8x32xf32, #tpu.memory_space<vmem>>) attributes {dimension_semantics = [#tpu.dimension_semantics<parallel>], iteration_bounds = array<i64: 2>, scalar_prefetch = 0 : i64, scratch_operands = 0 : i64, tpu.core_type = #tpu.core_type<tc>, window_params = [{transform_indices = @transform_0, window_bounds = array<i64: 8, 16, 3>}, {pipeline_mode = #tpu.pipeline_mode<synchronous>, transform_indices = @transform_1, window_bounds = array<i64: 3, 64>}, {pipeline_mode = #tpu.pipeline_mode<synchronous>, transform_indices = @transform_2, window_bounds = array<i64: 1, 64>}, {pipeline_mode = #tpu.pipeline_mode<synchronous>, transform_indices = @transform_3, window_bounds = array<i64: 64, 32>}, {pipeline_mode = #tpu.pipeline_mode<synchronous>, transform_indices = @transform_4, window_bounds = array<i64: 1, 32>}, {pipeline_mode = #tpu.pipeline_mode<synchronous>, transform_indices = @transform_5, window_bounds = array<i64: 96, 32>}, {pipeline_mode = #tpu.pipeline_mode<synchronous>, transform_indices = @transform_6, window_bounds = array<i64: 1, 32>}, {pipeline_mode = #tpu.pipeline_mode<synchronous>, transform_indices = @transform_7, window_bounds = array<i64: 3, 32, 32>}, {pipeline_mode = #tpu.pipeline_mode<synchronous>, transform_indices = @transform_8, window_bounds = array<i64: 3, 1, 32>}, {pipeline_mode = #tpu.pipeline_mode<synchronous>, transform_indices = @transform_9, window_bounds = array<i64: 3, 32, 64>}, {pipeline_mode = #tpu.pipeline_mode<synchronous>, transform_indices = @transform_10, window_bounds = array<i64: 3, 64, 32>}, {pipeline_mode = #tpu.pipeline_mode<synchronous>, transform_indices = @transform_11, window_bounds = array<i64: 3, 1, 32>}, {transform_indices = @transform_12, window_bounds = array<i64: 8, 32>}]} {
    %c0 = arith.constant 0 : index
    %c0_0 = arith.constant 0 : index
    %c0_1 = arith.constant 0 : index
    %0 = vector.load %arg1[%c0, %c0_0, %c0_1] : memref<8x16x3xf32, #tpu.memory_space<vmem>>, vector<8x16x3xf32>
    %1 = vector.shape_cast %0 : vector<8x16x3xf32> to vector<128x3xf32>
    %c0_2 = arith.constant 0 : index
    %c0_3 = arith.constant 0 : index
    %2 = vector.load %arg2[%c0_2, %c0_3] : memref<3x64xf32, #tpu.memory_space<vmem>>, vector<3x64xf32>
    %3 = vector.extract_strided_slice %1 {offsets = [0, 0], sizes = [128, 1], strides = [1, 1]} : vector<128x3xf32> to vector<128x1xf32>
    %4 = vector.extract_strided_slice %2 {offsets = [0, 0], sizes = [1, 64], strides = [1, 1]} : vector<3x64xf32> to vector<1x64xf32>
    %5 = vector.broadcast %3 : vector<128x1xf32> to vector<128x64xf32>
    %6 = vector.broadcast %4 : vector<1x64xf32> to vector<128x64xf32>
    %7 = arith.mulf %5, %6 : vector<128x64xf32>
    %8 = vector.extract_strided_slice %1 {offsets = [0, 1], sizes = [128, 1], strides = [1, 1]} : vector<128x3xf32> to vector<128x1xf32>
    %9 = vector.extract_strided_slice %2 {offsets = [1, 0], sizes = [1, 64], strides = [1, 1]} : vector<3x64xf32> to vector<1x64xf32>
    %10 = vector.broadcast %8 : vector<128x1xf32> to vector<128x64xf32>
    %11 = vector.broadcast %9 : vector<1x64xf32> to vector<128x64xf32>
    %12 = arith.mulf %10, %11 : vector<128x64xf32>
    %13 = arith.addf %7, %12 : vector<128x64xf32>
    %14 = vector.extract_strided_slice %1 {offsets = [0, 2], sizes = [128, 1], strides = [1, 1]} : vector<128x3xf32> to vector<128x1xf32>
    %15 = vector.extract_strided_slice %2 {offsets = [2, 0], sizes = [1, 64], strides = [1, 1]} : vector<3x64xf32> to vector<1x64xf32>
    %16 = vector.broadcast %14 : vector<128x1xf32> to vector<128x64xf32>
    %17 = vector.broadcast %15 : vector<1x64xf32> to vector<128x64xf32>
    %18 = arith.mulf %16, %17 : vector<128x64xf32>
    %19 = arith.addf %13, %18 : vector<128x64xf32>
    %c0_4 = arith.constant 0 : index
    %c0_5 = arith.constant 0 : index
    %20 = vector.load %arg3[%c0_4, %c0_5] : memref<1x64xf32, #tpu.memory_space<vmem>>, vector<1x64xf32>
    %21 = vector.broadcast %20 : vector<1x64xf32> to vector<128x64xf32>
    %22 = arith.addf %19, %21 : vector<128x64xf32>
    %23 = arith.truncf %22 : vector<128x64xf32> to vector<128x64xbf16>
    %cst = arith.constant 0.000000e+00 : bf16
    %24 = vector.broadcast %cst : bf16 to vector<128x64xbf16>
    %25 = arith.maximumf %23, %24 : vector<128x64xbf16>
    %c0_6 = arith.constant 0 : index
    %c0_7 = arith.constant 0 : index
    %26 = vector.load %arg4[%c0_6, %c0_7] : memref<64x32xbf16, #tpu.memory_space<vmem>>, vector<64x32xbf16>
    %cst_8 = arith.constant dense<0.000000e+00> : vector<128x32xf32>
    %27 = tpu.matmul %25, %26, %cst_8 {dimension_numbers = #tpu.dot_dimension_numbers<[1], [0], [0], [1], [0, 0, 1, 1], [], []>} : vector<128x64xbf16>, vector<64x32xbf16>, vector<128x32xf32> -> vector<128x32xf32>
    %c0_9 = arith.constant 0 : index
    %c0_10 = arith.constant 0 : index
    %28 = vector.load %arg5[%c0_9, %c0_10] : memref<1x32xf32, #tpu.memory_space<vmem>>, vector<1x32xf32>
    %29 = vector.broadcast %28 : vector<1x32xf32> to vector<128x32xf32>
    %30 = arith.addf %27, %29 : vector<128x32xf32>
    %cst_11 = arith.constant 0.000000e+00 : f32
    %31 = vector.broadcast %cst_11 : f32 to vector<128x32xf32>
    %32 = arith.maximumf %30, %31 : vector<128x32xf32>
    %33 = arith.truncf %32 : vector<128x32xf32> to vector<128x32xbf16>
    %34 = tpu.concatenate %23, %33 in 1 : vector<128x64xbf16>, vector<128x32xbf16> -> vector<128x96xbf16>
    %c0_12 = arith.constant 0 : index
    %c0_13 = arith.constant 0 : index
    %35 = vector.load %arg6[%c0_12, %c0_13] : memref<96x32xbf16, #tpu.memory_space<vmem>>, vector<96x32xbf16>
    %cst_14 = arith.constant dense<0.000000e+00> : vector<128x32xf32>
    %36 = tpu.matmul %34, %35, %cst_14 {dimension_numbers = #tpu.dot_dimension_numbers<[1], [0], [0], [1], [0, 0, 1, 1], [], []>} : vector<128x96xbf16>, vector<96x32xbf16>, vector<128x32xf32> -> vector<128x32xf32>
    %c0_15 = arith.constant 0 : index
    %c0_16 = arith.constant 0 : index
    %37 = vector.load %arg7[%c0_15, %c0_16] : memref<1x32xf32, #tpu.memory_space<vmem>>, vector<1x32xf32>
    %38 = vector.broadcast %37 : vector<1x32xf32> to vector<128x32xf32>
    %39 = arith.addf %36, %38 : vector<128x32xf32>
    %40 = vector.shape_cast %39 : vector<128x32xf32> to vector<8x16x32xf32>
    %cst_17 = arith.constant dense<0xFF800000> : vector<8x32xf32>
    %41 = vector.multi_reduction <maximumf>, %40, %cst_17 [1] : vector<8x16x32xf32> to vector<8x32xf32>
    %42 = arith.truncf %39 : vector<128x32xf32> to vector<128x32xbf16>
    %cst_18 = arith.constant 0.000000e+00 : bf16
    %43 = vector.broadcast %cst_18 : bf16 to vector<128x32xbf16>
    %44 = arith.maximumf %42, %43 : vector<128x32xbf16>
    %cst_19 = arith.constant 0.000000e+00 : f32
    %45 = vector.broadcast %cst_19 : f32 to vector<8x32xf32>
    %46 = arith.maximumf %41, %45 : vector<8x32xf32>
    %47 = tpu.concatenate %46, %41 in 0 : vector<8x32xf32>, vector<8x32xf32> -> vector<16x32xf32>
    %48 = arith.truncf %47 : vector<16x32xf32> to vector<16x32xbf16>
    %c0_20 = arith.constant 0 : index
    %c0_21 = arith.constant 0 : index
    %c0_22 = arith.constant 0 : index
    %49 = vector.load %arg10[%c0_20, %c0_21, %c0_22] : memref<3x32x64xbf16, #tpu.memory_space<vmem>>, vector<1x32x64xbf16>
    %50 = vector.shape_cast %49 : vector<1x32x64xbf16> to vector<32x64xbf16>
    %cst_23 = arith.constant dense<0.000000e+00> : vector<16x64xf32>
    %51 = tpu.matmul %48, %50, %cst_23 {dimension_numbers = #tpu.dot_dimension_numbers<[1], [0], [0], [1], [0, 0, 1, 1], [], []>} : vector<16x32xbf16>, vector<32x64xbf16>, vector<16x64xf32> -> vector<16x64xf32>
    %52 = vector.extract_strided_slice %51 {offsets = [0, 0], sizes = [8, 32], strides = [1, 1]} : vector<16x64xf32> to vector<8x32xf32>
    %c0_24 = arith.constant 0 : index
    %c0_25 = arith.constant 0 : index
    %c0_26 = arith.constant 0 : index
    %53 = vector.load %arg9[%c0_24, %c0_25, %c0_26] : memref<3x1x32xf32, #tpu.memory_space<vmem>>, vector<1x1x32xf32>
    %54 = vector.shape_cast %53 : vector<1x1x32xf32> to vector<1x32xf32>
    %55 = vector.broadcast %54 : vector<1x32xf32> to vector<8x32xf32>
    %56 = arith.addf %52, %55 : vector<8x32xf32>
    %57 = vector.extract_strided_slice %51 {offsets = [8, 32], sizes = [8, 32], strides = [1, 1]} : vector<16x64xf32> to vector<8x32xf32>
    %c0_27 = arith.constant 0 : index
    %c0_28 = arith.constant 0 : index
    %c0_29 = arith.constant 0 : index
    %58 = vector.load %arg8[%c0_27, %c0_28, %c0_29] : memref<3x32x32xbf16, #tpu.memory_space<vmem>>, vector<1x32x32xbf16>
    %59 = vector.shape_cast %58 : vector<1x32x32xbf16> to vector<32x32xbf16>
    %cst_30 = arith.constant dense<0.000000e+00> : vector<128x32xf32>
    %60 = tpu.matmul %44, %59, %cst_30 {dimension_numbers = #tpu.dot_dimension_numbers<[1], [0], [0], [1], [0, 0, 1, 1], [], []>} : vector<128x32xbf16>, vector<32x32xbf16>, vector<128x32xf32> -> vector<128x32xf32>
    %61 = vector.shape_cast %60 : vector<128x32xf32> to vector<8x16x32xf32>
    %62 = vector.shape_cast %56 : vector<8x32xf32> to vector<8x1x32xf32>
    %63 = vector.broadcast %62 : vector<8x1x32xf32> to vector<8x16x32xf32>
    %64 = arith.addf %61, %63 : vector<8x16x32xf32>
    %cst_31 = arith.constant 0.000000e+00 : f32
    %65 = vector.broadcast %cst_31 : f32 to vector<8x16x32xf32>
    %66 = arith.maximumf %64, %65 : vector<8x16x32xf32>
    %67 = vector.shape_cast %66 : vector<8x16x32xf32> to vector<128x32xf32>
    %68 = arith.truncf %67 : vector<128x32xf32> to vector<128x32xbf16>
    %69 = tpu.concatenate %42, %68 in 1 : vector<128x32xbf16>, vector<128x32xbf16> -> vector<128x64xbf16>
    %c0_32 = arith.constant 0 : index
    %c0_33 = arith.constant 0 : index
    %c0_34 = arith.constant 0 : index
    %70 = vector.load %arg11[%c0_32, %c0_33, %c0_34] : memref<3x64x32xbf16, #tpu.memory_space<vmem>>, vector<1x64x32xbf16>
    %71 = vector.shape_cast %70 : vector<1x64x32xbf16> to vector<64x32xbf16>
    %cst_35 = arith.constant dense<0.000000e+00> : vector<128x32xf32>
    %72 = tpu.matmul %69, %71, %cst_35 {dimension_numbers = #tpu.dot_dimension_numbers<[1], [0], [0], [1], [0, 0, 1, 1], [], []>} : vector<128x64xbf16>, vector<64x32xbf16>, vector<128x32xf32> -> vector<128x32xf32>
    %c0_36 = arith.constant 0 : index
    %c0_37 = arith.constant 0 : index
    %c0_38 = arith.constant 0 : index
    %73 = vector.load %arg12[%c0_36, %c0_37, %c0_38] : memref<3x1x32xf32, #tpu.memory_space<vmem>>, vector<1x1x32xf32>
    %74 = vector.shape_cast %73 : vector<1x1x32xf32> to vector<1x32xf32>
    %75 = vector.broadcast %74 : vector<1x32xf32> to vector<128x32xf32>
    %76 = arith.addf %72, %75 : vector<128x32xf32>
    %77 = vector.shape_cast %76 : vector<128x32xf32> to vector<8x16x32xf32>
    %78 = vector.shape_cast %57 : vector<8x32xf32> to vector<8x1x32xf32>
    %79 = vector.broadcast %78 : vector<8x1x32xf32> to vector<8x16x32xf32>
    %80 = arith.addf %77, %79 : vector<8x16x32xf32>
    %81 = vector.shape_cast %80 : vector<8x16x32xf32> to vector<128x32xf32>
    %cst_39 = arith.constant dense<0xFF800000> : vector<8x32xf32>
    %82 = vector.multi_reduction <maximumf>, %80, %cst_39 [1] : vector<8x16x32xf32> to vector<8x32xf32>
    %83 = arith.truncf %81 : vector<128x32xf32> to vector<128x32xbf16>
    %cst_40 = arith.constant 0.000000e+00 : bf16
    %84 = vector.broadcast %cst_40 : bf16 to vector<128x32xbf16>
    %85 = arith.maximumf %83, %84 : vector<128x32xbf16>
    %cst_41 = arith.constant 0.000000e+00 : f32
    %86 = vector.broadcast %cst_41 : f32 to vector<8x32xf32>
    %87 = arith.maximumf %82, %86 : vector<8x32xf32>
    %88 = tpu.concatenate %87, %82 in 0 : vector<8x32xf32>, vector<8x32xf32> -> vector<16x32xf32>
    %89 = arith.truncf %88 : vector<16x32xf32> to vector<16x32xbf16>
    %c1 = arith.constant 1 : index
    %c0_42 = arith.constant 0 : index
    %c0_43 = arith.constant 0 : index
    %90 = vector.load %arg10[%c1, %c0_42, %c0_43] : memref<3x32x64xbf16, #tpu.memory_space<vmem>>, vector<1x32x64xbf16>
    %91 = vector.shape_cast %90 : vector<1x32x64xbf16> to vector<32x64xbf16>
    %cst_44 = arith.constant dense<0.000000e+00> : vector<16x64xf32>
    %92 = tpu.matmul %89, %91, %cst_44 {dimension_numbers = #tpu.dot_dimension_numbers<[1], [0], [0], [1], [0, 0, 1, 1], [], []>} : vector<16x32xbf16>, vector<32x64xbf16>, vector<16x64xf32> -> vector<16x64xf32>
    %93 = vector.extract_strided_slice %92 {offsets = [0, 0], sizes = [8, 32], strides = [1, 1]} : vector<16x64xf32> to vector<8x32xf32>
    %c1_45 = arith.constant 1 : index
    %c0_46 = arith.constant 0 : index
    %c0_47 = arith.constant 0 : index
    %94 = vector.load %arg9[%c1_45, %c0_46, %c0_47] : memref<3x1x32xf32, #tpu.memory_space<vmem>>, vector<1x1x32xf32>
    %95 = vector.shape_cast %94 : vector<1x1x32xf32> to vector<1x32xf32>
    %96 = vector.broadcast %95 : vector<1x32xf32> to vector<8x32xf32>
    %97 = arith.addf %93, %96 : vector<8x32xf32>
    %98 = vector.extract_strided_slice %92 {offsets = [8, 32], sizes = [8, 32], strides = [1, 1]} : vector<16x64xf32> to vector<8x32xf32>
    %c1_48 = arith.constant 1 : index
    %c0_49 = arith.constant 0 : index
    %c0_50 = arith.constant 0 : index
    %99 = vector.load %arg8[%c1_48, %c0_49, %c0_50] : memref<3x32x32xbf16, #tpu.memory_space<vmem>>, vector<1x32x32xbf16>
    %100 = vector.shape_cast %99 : vector<1x32x32xbf16> to vector<32x32xbf16>
    %cst_51 = arith.constant dense<0.000000e+00> : vector<128x32xf32>
    %101 = tpu.matmul %85, %100, %cst_51 {dimension_numbers = #tpu.dot_dimension_numbers<[1], [0], [0], [1], [0, 0, 1, 1], [], []>} : vector<128x32xbf16>, vector<32x32xbf16>, vector<128x32xf32> -> vector<128x32xf32>
    %102 = vector.shape_cast %101 : vector<128x32xf32> to vector<8x16x32xf32>
    %103 = vector.shape_cast %97 : vector<8x32xf32> to vector<8x1x32xf32>
    %104 = vector.broadcast %103 : vector<8x1x32xf32> to vector<8x16x32xf32>
    %105 = arith.addf %102, %104 : vector<8x16x32xf32>
    %cst_52 = arith.constant 0.000000e+00 : f32
    %106 = vector.broadcast %cst_52 : f32 to vector<8x16x32xf32>
    %107 = arith.maximumf %105, %106 : vector<8x16x32xf32>
    %108 = vector.shape_cast %107 : vector<8x16x32xf32> to vector<128x32xf32>
    %109 = arith.truncf %108 : vector<128x32xf32> to vector<128x32xbf16>
    %110 = tpu.concatenate %83, %109 in 1 : vector<128x32xbf16>, vector<128x32xbf16> -> vector<128x64xbf16>
    %c1_53 = arith.constant 1 : index
    %c0_54 = arith.constant 0 : index
    %c0_55 = arith.constant 0 : index
    %111 = vector.load %arg11[%c1_53, %c0_54, %c0_55] : memref<3x64x32xbf16, #tpu.memory_space<vmem>>, vector<1x64x32xbf16>
    %112 = vector.shape_cast %111 : vector<1x64x32xbf16> to vector<64x32xbf16>
    %cst_56 = arith.constant dense<0.000000e+00> : vector<128x32xf32>
    %113 = tpu.matmul %110, %112, %cst_56 {dimension_numbers = #tpu.dot_dimension_numbers<[1], [0], [0], [1], [0, 0, 1, 1], [], []>} : vector<128x64xbf16>, vector<64x32xbf16>, vector<128x32xf32> -> vector<128x32xf32>
    %c1_57 = arith.constant 1 : index
    %c0_58 = arith.constant 0 : index
    %c0_59 = arith.constant 0 : index
    %114 = vector.load %arg12[%c1_57, %c0_58, %c0_59] : memref<3x1x32xf32, #tpu.memory_space<vmem>>, vector<1x1x32xf32>
    %115 = vector.shape_cast %114 : vector<1x1x32xf32> to vector<1x32xf32>
    %116 = vector.broadcast %115 : vector<1x32xf32> to vector<128x32xf32>
    %117 = arith.addf %113, %116 : vector<128x32xf32>
    %118 = vector.shape_cast %117 : vector<128x32xf32> to vector<8x16x32xf32>
    %119 = vector.shape_cast %98 : vector<8x32xf32> to vector<8x1x32xf32>
    %120 = vector.broadcast %119 : vector<8x1x32xf32> to vector<8x16x32xf32>
    %121 = arith.addf %118, %120 : vector<8x16x32xf32>
    %122 = vector.shape_cast %121 : vector<8x16x32xf32> to vector<128x32xf32>
    %cst_60 = arith.constant dense<0xFF800000> : vector<8x32xf32>
    %123 = vector.multi_reduction <maximumf>, %121, %cst_60 [1] : vector<8x16x32xf32> to vector<8x32xf32>
    %124 = arith.truncf %122 : vector<128x32xf32> to vector<128x32xbf16>
    %cst_61 = arith.constant 0.000000e+00 : bf16
    %125 = vector.broadcast %cst_61 : bf16 to vector<128x32xbf16>
    %126 = arith.maximumf %124, %125 : vector<128x32xbf16>
    %cst_62 = arith.constant 0.000000e+00 : f32
    %127 = vector.broadcast %cst_62 : f32 to vector<8x32xf32>
    %128 = arith.maximumf %123, %127 : vector<8x32xf32>
    %129 = tpu.concatenate %128, %123 in 0 : vector<8x32xf32>, vector<8x32xf32> -> vector<16x32xf32>
    %130 = arith.truncf %129 : vector<16x32xf32> to vector<16x32xbf16>
    %c2 = arith.constant 2 : index
    %c0_63 = arith.constant 0 : index
    %c0_64 = arith.constant 0 : index
    %131 = vector.load %arg10[%c2, %c0_63, %c0_64] : memref<3x32x64xbf16, #tpu.memory_space<vmem>>, vector<1x32x64xbf16>
    %132 = vector.shape_cast %131 : vector<1x32x64xbf16> to vector<32x64xbf16>
    %cst_65 = arith.constant dense<0.000000e+00> : vector<16x64xf32>
    %133 = tpu.matmul %130, %132, %cst_65 {dimension_numbers = #tpu.dot_dimension_numbers<[1], [0], [0], [1], [0, 0, 1, 1], [], []>} : vector<16x32xbf16>, vector<32x64xbf16>, vector<16x64xf32> -> vector<16x64xf32>
    %134 = vector.extract_strided_slice %133 {offsets = [0, 0], sizes = [8, 32], strides = [1, 1]} : vector<16x64xf32> to vector<8x32xf32>
    %c2_66 = arith.constant 2 : index
    %c0_67 = arith.constant 0 : index
    %c0_68 = arith.constant 0 : index
    %135 = vector.load %arg9[%c2_66, %c0_67, %c0_68] : memref<3x1x32xf32, #tpu.memory_space<vmem>>, vector<1x1x32xf32>
    %136 = vector.shape_cast %135 : vector<1x1x32xf32> to vector<1x32xf32>
    %137 = vector.broadcast %136 : vector<1x32xf32> to vector<8x32xf32>
    %138 = arith.addf %134, %137 : vector<8x32xf32>
    %139 = vector.extract_strided_slice %133 {offsets = [8, 32], sizes = [8, 32], strides = [1, 1]} : vector<16x64xf32> to vector<8x32xf32>
    %c2_69 = arith.constant 2 : index
    %c0_70 = arith.constant 0 : index
    %c0_71 = arith.constant 0 : index
    %140 = vector.load %arg8[%c2_69, %c0_70, %c0_71] : memref<3x32x32xbf16, #tpu.memory_space<vmem>>, vector<1x32x32xbf16>
    %141 = vector.shape_cast %140 : vector<1x32x32xbf16> to vector<32x32xbf16>
    %cst_72 = arith.constant dense<0.000000e+00> : vector<128x32xf32>
    %142 = tpu.matmul %126, %141, %cst_72 {dimension_numbers = #tpu.dot_dimension_numbers<[1], [0], [0], [1], [0, 0, 1, 1], [], []>} : vector<128x32xbf16>, vector<32x32xbf16>, vector<128x32xf32> -> vector<128x32xf32>
    %143 = vector.shape_cast %142 : vector<128x32xf32> to vector<8x16x32xf32>
    %144 = vector.shape_cast %138 : vector<8x32xf32> to vector<8x1x32xf32>
    %145 = vector.broadcast %144 : vector<8x1x32xf32> to vector<8x16x32xf32>
    %146 = arith.addf %143, %145 : vector<8x16x32xf32>
    %cst_73 = arith.constant 0.000000e+00 : f32
    %147 = vector.broadcast %cst_73 : f32 to vector<8x16x32xf32>
    %148 = arith.maximumf %146, %147 : vector<8x16x32xf32>
    %149 = vector.shape_cast %148 : vector<8x16x32xf32> to vector<128x32xf32>
    %150 = arith.truncf %149 : vector<128x32xf32> to vector<128x32xbf16>
    %151 = tpu.concatenate %124, %150 in 1 : vector<128x32xbf16>, vector<128x32xbf16> -> vector<128x64xbf16>
    %c2_74 = arith.constant 2 : index
    %c0_75 = arith.constant 0 : index
    %c0_76 = arith.constant 0 : index
    %152 = vector.load %arg11[%c2_74, %c0_75, %c0_76] : memref<3x64x32xbf16, #tpu.memory_space<vmem>>, vector<1x64x32xbf16>
    %153 = vector.shape_cast %152 : vector<1x64x32xbf16> to vector<64x32xbf16>
    %cst_77 = arith.constant dense<0.000000e+00> : vector<128x32xf32>
    %154 = tpu.matmul %151, %153, %cst_77 {dimension_numbers = #tpu.dot_dimension_numbers<[1], [0], [0], [1], [0, 0, 1, 1], [], []>} : vector<128x64xbf16>, vector<64x32xbf16>, vector<128x32xf32> -> vector<128x32xf32>
    %c2_78 = arith.constant 2 : index
    %c0_79 = arith.constant 0 : index
    %c0_80 = arith.constant 0 : index
    %155 = vector.load %arg12[%c2_78, %c0_79, %c0_80] : memref<3x1x32xf32, #tpu.memory_space<vmem>>, vector<1x1x32xf32>
    %156 = vector.shape_cast %155 : vector<1x1x32xf32> to vector<1x32xf32>
    %157 = vector.broadcast %156 : vector<1x32xf32> to vector<128x32xf32>
    %158 = arith.addf %154, %157 : vector<128x32xf32>
    %159 = vector.shape_cast %158 : vector<128x32xf32> to vector<8x16x32xf32>
    %160 = vector.shape_cast %139 : vector<8x32xf32> to vector<8x1x32xf32>
    %161 = vector.broadcast %160 : vector<8x1x32xf32> to vector<8x16x32xf32>
    %162 = arith.addf %159, %161 : vector<8x16x32xf32>
    %cst_81 = arith.constant dense<0xFF800000> : vector<8x32xf32>
    %163 = vector.multi_reduction <maximumf>, %162, %cst_81 [1] : vector<8x16x32xf32> to vector<8x32xf32>
    %c0_82 = arith.constant 0 : index
    %c0_83 = arith.constant 0 : index
    %164 = vector.load %arg13[%c0_82, %c0_83] : memref<8x32xf32, #tpu.memory_space<vmem>>, vector<8x32xf32>
    tpu.vector_store %arg13[%c0_82, %c0_83], %163 {strides = array<i32>} : memref<8x32xf32, #tpu.memory_space<vmem>>, vector<8x32xf32>,
    return
  }
  func.func @transform_0(%arg0: i32) -> (i32, i32, i32) {
    %c0_i32 = arith.constant 0 : i32
    %c0_i32_0 = arith.constant 0 : i32
    %c0_i32_1 = arith.constant 0 : i32
    return %arg0, %c0_i32, %c0_i32_0 : i32, i32, i32
  }
  func.func @transform_1(%arg0: i32) -> (i32, i32) {
    %c0_i32 = arith.constant 0 : i32
    %c0_i32_0 = arith.constant 0 : i32
    %c0_i32_1 = arith.constant 0 : i32
    return %c0_i32, %c0_i32_0 : i32, i32
  }
  func.func @transform_2(%arg0: i32) -> (i32, i32) {
    %c0_i32 = arith.constant 0 : i32
    %c0_i32_0 = arith.constant 0 : i32
    %c0_i32_1 = arith.constant 0 : i32
    return %c0_i32, %c0_i32_0 : i32, i32
  }
  func.func @transform_3(%arg0: i32) -> (i32, i32) {
    %c0_i32 = arith.constant 0 : i32
    %c0_i32_0 = arith.constant 0 : i32
    %c0_i32_1 = arith.constant 0 : i32
    return %c0_i32, %c0_i32_0 : i32, i32
  }
  func.func @transform_4(%arg0: i32) -> (i32, i32) {
    %c0_i32 = arith.constant 0 : i32
    %c0_i32_0 = arith.constant 0 : i32
    %c0_i32_1 = arith.constant 0 : i32
    return %c0_i32, %c0_i32_0 : i32, i32
  }
  func.func @transform_5(%arg0: i32) -> (i32, i32) {
    %c0_i32 = arith.constant 0 : i32
    %c0_i32_0 = arith.constant 0 : i32
    %c0_i32_1 = arith.constant 0 : i32
    return %c0_i32, %c0_i32_0 : i32, i32
  }
  func.func @transform_6(%arg0: i32) -> (i32, i32) {
    %c0_i32 = arith.constant 0 : i32
    %c0_i32_0 = arith.constant 0 : i32
    %c0_i32_1 = arith.constant 0 : i32
    return %c0_i32, %c0_i32_0 : i32, i32
  }
  func.func @transform_7(%arg0: i32) -> (i32, i32, i32) {
    %c0_i32 = arith.constant 0 : i32
    %c0_i32_0 = arith.constant 0 : i32
    %c0_i32_1 = arith.constant 0 : i32
    %c0_i32_2 = arith.constant 0 : i32
    return %c0_i32, %c0_i32_0, %c0_i32_1 : i32, i32, i32
  }
  func.func @transform_8(%arg0: i32) -> (i32, i32, i32) {
    %c0_i32 = arith.constant 0 : i32
    %c0_i32_0 = arith.constant 0 : i32
    %c0_i32_1 = arith.constant 0 : i32
    %c0_i32_2 = arith.constant 0 : i32
    return %c0_i32, %c0_i32_0, %c0_i32_1 : i32, i32, i32
  }
  func.func @transform_9(%arg0: i32) -> (i32, i32, i32) {
    %c0_i32 = arith.constant 0 : i32
    %c0_i32_0 = arith.constant 0 : i32
    %c0_i32_1 = arith.constant 0 : i32
    %c0_i32_2 = arith.constant 0 : i32
    return %c0_i32, %c0_i32_0, %c0_i32_1 : i32, i32, i32
  }
  func.func @transform_10(%arg0: i32) -> (i32, i32, i32) {
    %c0_i32 = arith.constant 0 : i32
    %c0_i32_0 = arith.constant 0 : i32
    %c0_i32_1 = arith.constant 0 : i32
    %c0_i32_2 = arith.constant 0 : i32
    return %c0_i32, %c0_i32_0, %c0_i32_1 : i32, i32, i32
  }
  func.func @transform_11(%arg0: i32) -> (i32, i32, i32) {
    %c0_i32 = arith.constant 0 : i32
    %c0_i32_0 = arith.constant 0 : i32
    %c0_i32_1 = arith.constant 0 : i32
    %c0_i32_2 = arith.constant 0 : i32
    return %c0_i32, %c0_i32_0, %c0_i32_1 : i32, i32, i32
  }
  func.func @transform_12(%arg0: i32) -> (i32, i32) {
    %c0_i32 = arith.constant 0 : i32
    %c0_i32_0 = arith.constant 0 : i32
    return %arg0, %c0_i32 : i32, i32
  }
}

</mosaic_0001>

<llo_original>
// kernel: tpu_custom_call.1
$region0: #{tpu_custom_call.1}
  #allocation0 [shape = 'u32[]', space=smem, size = 0x4, offset = 0x4, fixed_abs, tag = 'smem constant byte address 0x4 - core index']
  #allocation1 [shape = 'u32[144,128]{1,0:T(1,128)}', space=vmem, size = 0x12000, scoped, tag = 'internal scratch']
  %s0 = inlined_call_operand.vmem [shape: f32[16,16,3], index: 0, kind: input, shape index: {}]
  %s1 = inlined_call_operand.vmem [shape: f32[3,64], index: 1, kind: input, shape index: {}]
  %s2 = inlined_call_operand.vmem [shape: f32[1,64], index: 2, kind: input, shape index: {}]
  %s3 = inlined_call_operand.vmem [shape: bf16[64,32], index: 3, kind: input, shape index: {}]
  %s4 = inlined_call_operand.vmem [shape: f32[1,32], index: 4, kind: input, shape index: {}]
  %s5 = inlined_call_operand.vmem [shape: bf16[96,32], index: 5, kind: input, shape index: {}]
  %s6 = inlined_call_operand.vmem [shape: f32[1,32], index: 6, kind: input, shape index: {}]
  %s7 = inlined_call_operand.vmem [shape: bf16[3,32,32], index: 7, kind: input, shape index: {}]
  %s8 = inlined_call_operand.vmem [shape: f32[3,1,32], index: 8, kind: input, shape index: {}]
  %s9 = inlined_call_operand.vmem [shape: bf16[3,32,64], index: 9, kind: input, shape index: {}]
  %s10 = inlined_call_operand.vmem [shape: bf16[3,64,32], index: 10, kind: input, shape index: {}]
  %s11 = inlined_call_operand.vmem [shape: f32[3,1,32], index: 11, kind: input, shape index: {}]
  %s12 = inlined_call_operand.hbm [shape: f32[16,32], index: 12, kind: output, shape index: {}]
  %s13 = sld [smem:[#allocation0]]
  $region81: #{tpu_custom_call.1} parent=0
    _
  %s15 = ssub.s32 1, %s13
  %s16 = scalar_select 0, %s15, %s13
  $region1: #{tpu_custom_call.1} parent=0
    #allocation2 [shape = 'u8[8192]{0}', space=vmem, size = 0x2000, scoped, tag = 'output window, operand 0']
    #allocation3 [shape = 's32[2]{0}', space=sflag, size = 0x8, scoped, tag = 'scoped memory for tpu_custom_call.1']
    %17 = vsyncpa [#allocation3], 0
    %s18 = scalar_lea.sflag [#allocation3], 1
    %19 = vsyncpa %s18, 0
    loop: start=0, step=1, limit=4
    $region2: #{tpu_custom_call.1} parent=1 // loop_pre_header
      _
    $region3: #{tpu_custom_call.1} parent=1 // loop_header
      %s21 = sphi 0, %s25
      %p22 = scmp.ge.s32.totalorder %s21, 4
      %s31 = sphi 0, %s33
      %s34 = sphi 0, %s31
      %s35 = sphi 0, %s34
      %s51 = sphi 0, %s35
      %s55 = sphi 0, %s55
      %s57 = sphi 0, %s55
      %s58 = sphi 0, %s57
      %s72 = sphi 0, %s58
      %s76 = sphi 0, %s76
      %s78 = sphi 0, %s76
      %s79 = sphi 0, %s78
      %s93 = sphi 0, %s79
      %s97 = sphi 0, %s97
      %s99 = sphi 0, %s97
      %s100 = sphi 0, %s99
      %s114 = sphi 0, %s100
      %s118 = sphi 0, %s118
      %s120 = sphi 0, %s118
      %s121 = sphi 0, %s120
      %s135 = sphi 0, %s121
      %s139 = sphi 0, %s139
      %s141 = sphi 0, %s139
      %s142 = sphi 0, %s141
      %s156 = sphi 0, %s142
      %s160 = sphi 0, %s160
      %s162 = sphi 0, %s160
      %s163 = sphi 0, %s162
      %s177 = sphi 0, %s163
      %s181 = sphi 0, %s181
      %s183 = sphi 0, %s181
      %s184 = sphi 0, %s183
      %s198 = sphi 0, %s184
      %s202 = sphi 0, %s202
      %s204 = sphi 0, %s202
      %s205 = sphi 0, %s204
      %s219 = sphi 0, %s205
      %s223 = sphi 0, %s223
      %s225 = sphi 0, %s223
      %s226 = sphi 0, %s225
      %s240 = sphi 0, %s226
      %s244 = sphi 0, %s244
      %s246 = sphi 0, %s244
      %s247 = sphi 0, %s246
      %s261 = sphi 0, %s247
      %s265 = sphi 0, %s265
      %s267 = sphi 0, %s265
      %s268 = sphi 0, %s267
      %s282 = sphi 0, %s268
      %s288 = sphi 0, %s290
      %s291 = sphi 0, %s288
      %s292 = sphi 0, %s291
      %s308 = sphi 0, %s292
    $region4: #{tpu_custom_call.1} parent=1 // loop_header_branch
      %24 = sbr.rel (%p22) target = $region8
    $region5: #{tpu_custom_call.1} parent=1 // loop_body
      %s26 = ssub.s32 %s21, 1
      %s27 = ssub.s32 %s21, 2
      %s28 = sadd.s32 %s21, 1
      %s29 = ssub.s32 %s21, %s28
      %p30 = scmp.eq.s32.totalorder %s29, 0
      %s32 = sadd.s32 %s31, 1
      %s33 = scalar_select %p30, %s31, %s32
      %p36 = pneg %p30
      %p37 = scmp.eq.s32.totalorder %s21, 1
      %p38 = por %p36, %p37
      %p39 = scmp.ne.s32.totalorder %s31, %s34
      %p40 = scmp.eq.s32.totalorder %s21, 0
      %p41 = por %p39, %p40
      %p42 = scmp.ne.s32.totalorder %s31, %s34
      %p43 = scmp.eq.s32.totalorder %s26, 1
      %p44 = por %p42, %p43
      %p45 = scmp.ne.s32.totalorder %s34, %s35
      %p46 = scmp.eq.s32.totalorder %s26, 0
      %p47 = por %p45, %p46
      %p48 = scmp.ne.s32.totalorder %s34, %s35
      %p49 = scmp.eq.s32.totalorder %s27, 1
      %p50 = por %p48, %p49
      %p52 = scmp.ne.s32.totalorder %s35, %s51
      %p53 = scmp.eq.s32.totalorder %s27, 0
      %p54 = por %p52, %p53
      %s56 = sadd.s32 %s55, 1
      %p59 = scmp.eq.s32.totalorder %s21, 1
      %p60 = scmp.ne.s32.totalorder %s55, %s57
      %p61 = scmp.eq.s32.totalorder %s21, 0
      %p62 = por %p60, %p61
      %p63 = scmp.ne.s32.totalorder %s55, %s57
      %p64 = scmp.eq.s32.totalorder %s26, 1
      %p65 = por %p63, %p64
      %p66 = scmp.ne.s32.totalorder %s57, %s58
      %p67 = scmp.eq.s32.totalorder %s26, 0
      %p68 = por %p66, %p67
      %p69 = scmp.ne.s32.totalorder %s57, %s58
      %p70 = scmp.eq.s32.totalorder %s27, 1
      %p71 = por %p69, %p70
      %p73 = scmp.ne.s32.totalorder %s58, %s72
      %p74 = scmp.eq.s32.totalorder %s27, 0
      %p75 = por %p73, %p74
      %s77 = sadd.s32 %s76, 1
      %p80 = scmp.eq.s32.totalorder %s21, 1
      %p81 = scmp.ne.s32.totalorder %s76, %s78
      %p82 = scmp.eq.s32.totalorder %s21, 0
      %p83 = por %p81, %p82
      %p84 = scmp.ne.s32.totalorder %s76, %s78
      %p85 = scmp.eq.s32.totalorder %s26, 1
      %p86 = por %p84, %p85
      %p87 = scmp.ne.s32.totalorder %s78, %s79
      %p88 = scmp.eq.s32.totalorder %s26, 0
      %p89 = por %p87, %p88
      %p90 = scmp.ne.s32.totalorder %s78, %s79
      %p91 = scmp.eq.s32.totalorder %s27, 1
      %p92 = por %p90, %p91
      %p94 = scmp.ne.s32.totalorder %s79, %s93
      %p95 = scmp.eq.s32.totalorder %s27, 0
      %p96 = por %p94, %p95
      %s98 = sadd.s32 %s97, 1
      %p101 = scmp.eq.s32.totalorder %s21, 1
      %p102 = scmp.ne.s32.totalorder %s97, %s99
      %p103 = scmp.eq.s32.totalorder %s21, 0
      %p104 = por %p102, %p103
      %p105 = scmp.ne.s32.totalorder %s97, %s99
      %p106 = scmp.eq.s32.totalorder %s26, 1
      %p107 = por %p105, %p106
      %p108 = scmp.ne.s32.totalorder %s99, %s100
      %p109 = scmp.eq.s32.totalorder %s26, 0
      %p110 = por %p108, %p109
      %p111 = scmp.ne.s32.totalorder %s99, %s100
      %p112 = scmp.eq.s32.totalorder %s27, 1
      %p113 = por %p111, %p112
      %p115 = scmp.ne.s32.totalorder %s100, %s114
      %p116 = scmp.eq.s32.totalorder %s27, 0
      %p117 = por %p115, %p116
      %s119 = sadd.s32 %s118, 1
      %p122 = scmp.eq.s32.totalorder %s21, 1
      %p123 = scmp.ne.s32.totalorder %s118, %s120
      %p124 = scmp.eq.s32.totalorder %s21, 0
      %p125 = por %p123, %p124
      %p126 = scmp.ne.s32.totalorder %s118, %s120
      %p127 = scmp.eq.s32.totalorder %s26, 1
      %p128 = por %p126, %p127
      %p129 = scmp.ne.s32.totalorder %s120, %s121
      %p130 = scmp.eq.s32.totalorder %s26, 0
      %p131 = por %p129, %p130
      %p132 = scmp.ne.s32.totalorder %s120, %s121
      %p133 = scmp.eq.s32.totalorder %s27, 1
      %p134 = por %p132, %p133
      %p136 = scmp.ne.s32.totalorder %s121, %s135
      %p137 = scmp.eq.s32.totalorder %s27, 0
      %p138 = por %p136, %p137
      %s140 = sadd.s32 %s139, 1
      %p143 = scmp.eq.s32.totalorder %s21, 1
      %p144 = scmp.ne.s32.totalorder %s139, %s141
      %p145 = scmp.eq.s32.totalorder %s21, 0
      %p146 = por %p144, %p145
      %p147 = scmp.ne.s32.totalorder %s139, %s141
      %p148 = scmp.eq.s32.totalorder %s26, 1
      %p149 = por %p147, %p148
      %p150 = scmp.ne.s32.totalorder %s141, %s142
      %p151 = scmp.eq.s32.totalorder %s26, 0
      %p152 = por %p150, %p151
      %p153 = scmp.ne.s32.totalorder %s141, %s142
      %p154 = scmp.eq.s32.totalorder %s27, 1
      %p155 = por %p153, %p154
      %p157 = scmp.ne.s32.totalorder %s142, %s156
      %p158 = scmp.eq.s32.totalorder %s27, 0
      %p159 = por %p157, %p158
      %s161 = sadd.s32 %s160, 1
      %p164 = scmp.eq.s32.totalorder %s21, 1
      %p165 = scmp.ne.s32.totalorder %s160, %s162
      %p166 = scmp.eq.s32.totalorder %s21, 0
      %p167 = por %p165, %p166
      %p168 = scmp.ne.s32.totalorder %s160, %s162
      %p169 = scmp.eq.s32.totalorder %s26, 1
      %p170 = por %p168, %p169
      %p171 = scmp.ne.s32.totalorder %s162, %s163
      %p172 = scmp.eq.s32.totalorder %s26, 0
      %p173 = por %p171, %p172
      %p174 = scmp.ne.s32.totalorder %s162, %s163
      %p175 = scmp.eq.s32.totalorder %s27, 1
      %p176 = por %p174, %p175
      %p178 = scmp.ne.s32.totalorder %s163, %s177
      %p179 = scmp.eq.s32.totalorder %s27, 0
      %p180 = por %p178, %p179
      %s182 = sadd.s32 %s181, 1
      %p185 = scmp.eq.s32.totalorder %s21, 1
      %p186 = scmp.ne.s32.totalorder %s181, %s183
      %p187 = scmp.eq.s32.totalorder %s21, 0
      %p188 = por %p186, %p187
      %p189 = scmp.ne.s32.totalorder %s181, %s183
      %p190 = scmp.eq.s32.totalorder %s26, 1
      %p191 = por %p189, %p190
      %p192 = scmp.ne.s32.totalorder %s183, %s184
      %p193 = scmp.eq.s32.totalorder %s26, 0
      %p194 = por %p192, %p193
      %p195 = scmp.ne.s32.totalorder %s183, %s184
      %p196 = scmp.eq.s32.totalorder %s27, 1
      %p197 = por %p195, %p196
      %p199 = scmp.ne.s32.totalorder %s184, %s198
      %p200 = scmp.eq.s32.totalorder %s27, 0
      %p201 = por %p199, %p200
      %s203 = sadd.s32 %s202, 1
      %p206 = scmp.eq.s32.totalorder %s21, 1
      %p207 = scmp.ne.s32.totalorder %s202, %s204
      %p208 = scmp.eq.s32.totalorder %s21, 0
      %p209 = por %p207, %p208
      %p210 = scmp.ne.s32.totalorder %s202, %s204
      %p211 = scmp.eq.s32.totalorder %s26, 1
      %p212 = por %p210, %p211
      %p213 = scmp.ne.s32.totalorder %s204, %s205
      %p214 = scmp.eq.s32.totalorder %s26, 0
      %p215 = por %p213, %p214
      %p216 = scmp.ne.s32.totalorder %s204, %s205
      %p217 = scmp.eq.s32.totalorder %s27, 1
      %p218 = por %p216, %p217
      %p220 = scmp.ne.s32.totalorder %s205, %s219
      %p221 = scmp.eq.s32.totalorder %s27, 0
      %p222 = por %p220, %p221
      %s224 = sadd.s32 %s223, 1
      %p227 = scmp.eq.s32.totalorder %s21, 1
      %p228 = scmp.ne.s32.totalorder %s223, %s225
      %p229 = scmp.eq.s32.totalorder %s21, 0
      %p230 = por %p228, %p229
      %p231 = scmp.ne.s32.totalorder %s223, %s225
      %p232 = scmp.eq.s32.totalorder %s26, 1
      %p233 = por %p231, %p232
      %p234 = scmp.ne.s32.totalorder %s225, %s226
      %p235 = scmp.eq.s32.totalorder %s26, 0
      %p236 = por %p234, %p235
      %p237 = scmp.ne.s32.totalorder %s225, %s226
      %p238 = scmp.eq.s32.totalorder %s27, 1
      %p239 = por %p237, %p238
      %p241 = scmp.ne.s32.totalorder %s226, %s240
      %p242 = scmp.eq.s32.totalorder %s27, 0
      %p243 = por %p241, %p242
      %s245 = sadd.s32 %s244, 1
      %p248 = scmp.eq.s32.totalorder %s21, 1
      %p249 = scmp.ne.s32.totalorder %s244, %s246
      %p250 = scmp.eq.s32.totalorder %s21, 0
      %p251 = por %p249, %p250
      %p252 = scmp.ne.s32.totalorder %s244, %s246
      %p253 = scmp.eq.s32.totalorder %s26, 1
      %p254 = por %p252, %p253
      %p255 = scmp.ne.s32.totalorder %s246, %s247
      %p256 = scmp.eq.s32.totalorder %s26, 0
      %p257 = por %p255, %p256
      %p258 = scmp.ne.s32.totalorder %s246, %s247
      %p259 = scmp.eq.s32.totalorder %s27, 1
      %p260 = por %p258, %p259
      %p262 = scmp.ne.s32.totalorder %s247, %s261
      %p263 = scmp.eq.s32.totalorder %s27, 0
      %p264 = por %p262, %p263
      %s266 = sadd.s32 %s265, 1
      %p269 = scmp.eq.s32.totalorder %s21, 1
      %p270 = scmp.ne.s32.totalorder %s265, %s267
      %p271 = scmp.eq.s32.totalorder %s21, 0
      %p272 = por %p270, %p271
      %p273 = scmp.ne.s32.totalorder %s265, %s267
      %p274 = scmp.eq.s32.totalorder %s26, 1
      %p275 = por %p273, %p274
      %p276 = scmp.ne.s32.totalorder %s267, %s268
      %p277 = scmp.eq.s32.totalorder %s26, 0
      %p278 = por %p276, %p277
      %p279 = scmp.ne.s32.totalorder %s267, %s268
      %p280 = scmp.eq.s32.totalorder %s27, 1
      %p281 = por %p279, %p280
      %p283 = scmp.ne.s32.totalorder %s268, %s282
      %p284 = scmp.eq.s32.totalorder %s27, 0
      %p285 = por %p283, %p284
      %s286 = ssub.s32 %s21, %s28
      %p287 = scmp.eq.s32.totalorder %s286, 0
      %s289 = sadd.s32 %s288, 1
      %s290 = scalar_select %p287, %s288, %s289
      %p293 = pneg %p287
      %p294 = scmp.eq.s32.totalorder %s21, 1
      %p295 = por %p293, %p294
      %p296 = scmp.ne.s32.totalorder %s288, %s291
      %p297 = scmp.eq.s32.totalorder %s21, 0
      %p298 = por %p296, %p297
      %p299 = scmp.ne.s32.totalorder %s288, %s291
      %p300 = scmp.eq.s32.totalorder %s26, 1
      %p301 = por %p299, %p300
      %p302 = scmp.ne.s32.totalorder %s291, %s292
      %p303 = scmp.eq.s32.totalorder %s26, 0
      %p304 = por %p302, %p303
      %p305 = scmp.ne.s32.totalorder %s291, %s292
      %p306 = scmp.eq.s32.totalorder %s27, 1
      %p307 = por %p305, %p306
      %p309 = scmp.ne.s32.totalorder %s292, %s308
      %p310 = scmp.eq.s32.totalorder %s27, 0
      %p311 = por %p309, %p310
      %p312 = scmp.le.s32.totalorder 1, %s21
      %p313 = scmp.lt.s32.totalorder %s21, 3
      %p314 = pnand %p312, %p313
      %p315 = pneg %p314
      // Predicated region
      $region9: #{tpu_custom_call.1} parent=5 // pred_check
        _
      $region10: #{tpu_custom_call.1} parent=5 // pred_check_branch
        %317 = sbr.rel (%p314) target = $region12
      $region11: #{tpu_custom_call.1} parent=5 // pred_region
        %s318 = ssub.s32 %s21, 1
        // Predicated region
        $region13: #{tpu_custom_call.1} parent=11 // pred_check
          %p319 = pneg %p68
        $region14: #{tpu_custom_call.1} parent=11 // pred_check_branch
          %321 = sbr.rel (%p319) target = $region16
        $region15: #{tpu_custom_call.1} parent=11 // pred_region
          _
        $region16: #{tpu_custom_call.1} parent=11 // pred_fallthru
          _
        // Predicated region
        $region17: #{tpu_custom_call.1} parent=11 // pred_check
          %p322 = pneg %p89
        $region18: #{tpu_custom_call.1} parent=11 // pred_check_branch
          %324 = sbr.rel (%p322) target = $region20
        $region19: #{tpu_custom_call.1} parent=11 // pred_region
          _
        $region20: #{tpu_custom_call.1} parent=11 // pred_fallthru
          _
        // Predicated region
        $region21: #{tpu_custom_call.1} parent=11 // pred_check
          %p325 = pneg %p110
        $region22: #{tpu_custom_call.1} parent=11 // pred_check_branch
          %327 = sbr.rel (%p325) target = $region24
        $region23: #{tpu_custom_call.1} parent=11 // pred_region
          _
        $region24: #{tpu_custom_call.1} parent=11 // pred_fallthru
          _
        // Predicated region
        $region25: #{tpu_custom_call.1} parent=11 // pred_check
          %p328 = pneg %p131
        $region26: #{tpu_custom_call.1} parent=11 // pred_check_branch
          %330 = sbr.rel (%p328) target = $region28
        $region27: #{tpu_custom_call.1} parent=11 // pred_region
          _
        $region28: #{tpu_custom_call.1} parent=11 // pred_fallthru
          _
        // Predicated region
        $region29: #{tpu_custom_call.1} parent=11 // pred_check
          %p331 = pneg %p152
        $region30: #{tpu_custom_call.1} parent=11 // pred_check_branch
          %333 = sbr.rel (%p331) target = $region32
        $region31: #{tpu_custom_call.1} parent=11 // pred_region
          _
        $region32: #{tpu_custom_call.1} parent=11 // pred_fallthru
          _
        // Predicated region
        $region33: #{tpu_custom_call.1} parent=11 // pred_check
          %p334 = pneg %p173
        $region34: #{tpu_custom_call.1} parent=11 // pred_check_branch
          %336 = sbr.rel (%p334) target = $region36
        $region35: #{tpu_custom_call.1} parent=11 // pred_region
          _
        $region36: #{tpu_custom_call.1} parent=11 // pred_fallthru
          _
        // Predicated region
        $region37: #{tpu_custom_call.1} parent=11 // pred_check
          %p337 = pneg %p194
        $region38: #{tpu_custom_call.1} parent=11 // pred_check_branch
          %339 = sbr.rel (%p337) target = $region40
        $region39: #{tpu_custom_call.1} parent=11 // pred_region
          _
        $region40: #{tpu_custom_call.1} parent=11 // pred_fallthru
          _
        // Predicated region
        $region41: #{tpu_custom_call.1} parent=11 // pred_check
          %p340 = pneg %p215
        $region42: #{tpu_custom_call.1} parent=11 // pred_check_branch
          %342 = sbr.rel (%p340) target = $region44
        $region43: #{tpu_custom_call.1} parent=11 // pred_region
          _
        $region44: #{tpu_custom_call.1} parent=11 // pred_fallthru
          _
        // Predicated region
        $region45: #{tpu_custom_call.1} parent=11 // pred_check
          %p343 = pneg %p236
        $region46: #{tpu_custom_call.1} parent=11 // pred_check_branch
          %345 = sbr.rel (%p343) target = $region48
        $region47: #{tpu_custom_call.1} parent=11 // pred_region
          _
        $region48: #{tpu_custom_call.1} parent=11 // pred_fallthru
          _
        // Predicated region
        $region49: #{tpu_custom_call.1} parent=11 // pred_check
          %p346 = pneg %p257
        $region50: #{tpu_custom_call.1} parent=11 // pred_check_branch
          %348 = sbr.rel (%p346) target = $region52
        $region51: #{tpu_custom_call.1} parent=11 // pred_region
          _
        $region52: #{tpu_custom_call.1} parent=11 // pred_fallthru
          _
        // Predicated region
        $region53: #{tpu_custom_call.1} parent=11 // pred_check
          %p349 = pneg %p278
        $region54: #{tpu_custom_call.1} parent=11 // pred_check_branch
          %351 = sbr.rel (%p349) target = $region56
        $region55: #{tpu_custom_call.1} parent=11 // pred_region
          _
        $region56: #{tpu_custom_call.1} parent=11 // pred_fallthru
          _
      $region12: #{tpu_custom_call.1} parent=5 // pred_fallthru
        _
      %p352 = scmp.lt.s32.totalorder %s21, 2
      // Predicated region
      $region57: #{tpu_custom_call.1} parent=5 // pred_check
        %p353 = pneg %p352
      $region58: #{tpu_custom_call.1} parent=5 // pred_check_branch
        %355 = sbr.rel (%p353) target = $region60
      $region59: #{tpu_custom_call.1} parent=5 // pred_region
        // Predicated region
        $region61: #{tpu_custom_call.1} parent=59 // pred_check
          %p356 = pneg %p41
        $region62: #{tpu_custom_call.1} parent=59 // pred_check_branch
          %358 = sbr.rel (%p356) target = $region64
        $region63: #{tpu_custom_call.1} parent=59 // pred_region
          %s359 = smul.u32 8, %s21
          %p360 = scmp.lt.s32.totalorder %s359, 15
          %s361 = scalar_select %p360, %s359, 15
          %s362 = smul.addr %s361, 2
          %s363 = smul.addr %s362, 8
          %s364 = scalar_lea.vmem %s0, %s363
          %s365 = smul.u32 8, %s21
        $region64: #{tpu_custom_call.1} parent=59 // pred_fallthru
          _
      $region60: #{tpu_custom_call.1} parent=5 // pred_fallthru
        _
      %p366 = scmp.le.s32.totalorder 1, %s21
      %p367 = scmp.lt.s32.totalorder %s21, 3
      %p368 = pnand %p366, %p367
      %p369 = pneg %p368
      // Predicated region
      $region65: #{tpu_custom_call.1} parent=5 // pred_check
        _
      $region66: #{tpu_custom_call.1} parent=5 // pred_check_branch
        %371 = sbr.rel (%p368) target = $region68
      $region67: #{tpu_custom_call.1} parent=5 // pred_region
        %s372 = ssub.s32 %s21, 1
        %s373 = smul.u32 8, %s26
        %p374 = scmp.lt.s32.totalorder %s373, 15
        %s375 = scalar_select %p374, %s373, 15
        %s376 = smul.addr %s375, 2
        %s377 = smul.addr %s376, 8
        %s378 = scalar_lea.vmem %s0, %s377
        %p379 = pneg %p47
        %p380 = pneg %p44
        %p381 = pneg %p68
        %p382 = pneg %p65
        %p383 = pneg %p89
        %p384 = pneg %p86
        %p385 = pneg %p110
        %p386 = pneg %p107
        %p387 = pneg %p131
        %p388 = pneg %p128
        %p389 = pneg %p152
        %p390 = pneg %p149
        %p391 = pneg %p173
        %p392 = pneg %p170
        %p393 = pneg %p194
        %p394 = pneg %p191
        %p395 = pneg %p215
        %p396 = pneg %p212
        %p397 = pneg %p236
        %p398 = pneg %p233
        %p399 = pneg %p257
        %p400 = pneg %p254
        %p401 = pneg %p278
        %p402 = pneg %p275
        %p403 = pneg %p304
        %p404 = pneg %p301
        %s405 = sand.u32 %s291, 1
        %s406 = scalar_lea.sflag [#allocation3], %s405
        %s407 = sand.u32 %s291, 1
        %s408 = smul.addr %s407, 8
        %s409 = scalar_lea.vmem [#allocation2], %s408
        %s410 = smul.u32 8, %s26
        %p411 = scmp.lt.s32.totalorder %s410, 15
        %s412 = scalar_select %p411, %s410, 15
        %s413 = smul.addr %s412, 2
        %s414 = smul.addr %s413, 8
        %s415 = scalar_lea.vmem %s0, %s414
        %s416 = smul.u32 8, %s26
        %v418 = vld [vmem:[%s415] sm:$0xff]
        %v419 = vld [vmem:[%s415 + $0x8] sm:$0xff]
        %v420 = vld [vmem:[%s415 + $0x10] sm:$0xff]
        %v421 = vld [vmem:[%s415 + $0x18] sm:$0xff]
        %v422 = vld [vmem:[%s415 + $0x20] sm:$0xff]
        %v423 = vld [vmem:[%s415 + $0x28] sm:$0xff]
        %v424 = vld [vmem:[%s415 + $0x30] sm:$0xff]
        %v425 = vld [vmem:[%s415 + $0x38] sm:$0xff]
        %v426 = vld [vmem:[%s415 + $0x40] sm:$0xff]
        %v427 = vld [vmem:[%s415 + $0x48] sm:$0xff]
        %v428 = vld [vmem:[%s415 + $0x50] sm:$0xff]
        %v429 = vld [vmem:[%s415 + $0x58] sm:$0xff]
        %v430 = vld [vmem:[%s415 + $0x60] sm:$0xff]
        %v431 = vld [vmem:[%s415 + $0x68] sm:$0xff]
        %v432 = vld [vmem:[%s415 + $0x70] sm:$0xff]
        %v433 = vld [vmem:[%s415 + $0x78] sm:$0xff]
        %v434 = vld [vmem:[%s1] sm:$0x7]
        %436 = vset.pattern.permute.xlu0 0
        %437 = vperm.xlu0 %436, %v418
        %v438 = vpop.permute.xlu0 %437
        %441 = vset.pattern.permute.xlu0 0
        %442 = vperm.xlu0 %441, %v419
        %v443 = vpop.permute.xlu0 %442
        %446 = vset.pattern.permute.xlu0 0
        %447 = vperm.xlu0 %446, %v420
        %v448 = vpop.permute.xlu0 %447
        %451 = vset.pattern.permute.xlu0 0
        %452 = vperm.xlu0 %451, %v421
        %v453 = vpop.permute.xlu0 %452
        %456 = vset.pattern.permute.xlu0 0
        %457 = vperm.xlu0 %456, %v422
        %v458 = vpop.permute.xlu0 %457
        %461 = vset.pattern.permute.xlu0 0
        %462 = vperm.xlu0 %461, %v423
        %v463 = vpop.permute.xlu0 %462
        %466 = vset.pattern.permute.xlu0 0
        %467 = vperm.xlu0 %466, %v424
        %v468 = vpop.permute.xlu0 %467
        %471 = vset.pattern.permute.xlu0 0
        %472 = vperm.xlu0 %471, %v425
        %v473 = vpop.permute.xlu0 %472
        %476 = vset.pattern.permute.xlu0 0
        %477 = vperm.xlu0 %476, %v426
        %v478 = vpop.permute.xlu0 %477
        %481 = vset.pattern.permute.xlu0 0
        %482 = vperm.xlu0 %481, %v427
        %v483 = vpop.permute.xlu0 %482
        %486 = vset.pattern.permute.xlu0 0
        %487 = vperm.xlu0 %486, %v428
        %v488 = vpop.permute.xlu0 %487
        %491 = vset.pattern.permute.xlu0 0
        %492 = vperm.xlu0 %491, %v429
        %v493 = vpop.permute.xlu0 %492
        %496 = vset.pattern.permute.xlu0 0
        %497 = vperm.xlu0 %496, %v430
        %v498 = vpop.permute.xlu0 %497
        %501 = vset.pattern.permute.xlu0 0
        %502 = vperm.xlu0 %501, %v431
        %v503 = vpop.permute.xlu0 %502
        %506 = vset.pattern.permute.xlu0 0
        %507 = vperm.xlu0 %506, %v432
        %v508 = vpop.permute.xlu0 %507
        %511 = vset.pattern.permute.xlu0 0
        %512 = vperm.xlu0 %511, %v433
        %v513 = vpop.permute.xlu0 %512
        %v515 = vlaneseq
        %v516 = vshrl.u32 %v515, 7
        %v517 = vsub.s32 0, %v516
        %v518 = vrot.slane %v434, %v517
        %v519 = vmul.f32 %v438, %v518
        %v520 = vmul.f32 %v443, %v518
        %v521 = vmul.f32 %v448, %v518
        %v522 = vmul.f32 %v453, %v518
        %v523 = vmul.f32 %v458, %v518
        %v524 = vmul.f32 %v463, %v518
        %v525 = vmul.f32 %v468, %v518
        %v526 = vmul.f32 %v473, %v518
        %v527 = vmul.f32 %v478, %v518
        %v528 = vmul.f32 %v483, %v518
        %v529 = vmul.f32 %v488, %v518
        %v530 = vmul.f32 %v493, %v518
        %v531 = vmul.f32 %v498, %v518
        %v532 = vmul.f32 %v503, %v518
        %v533 = vmul.f32 %v508, %v518
        %v534 = vmul.f32 %v513, %v518
        %535 = vset.pattern.permute.xlu0 1
        %536 = vperm.xlu0 %535, %v418
        %v537 = vpop.permute.xlu0 %536
        %539 = vset.pattern.permute.xlu0 1
        %540 = vperm.xlu0 %539, %v419
        %v541 = vpop.permute.xlu0 %540
        %543 = vset.pattern.permute.xlu0 1
        %544 = vperm.xlu0 %543, %v420
        %v545 = vpop.permute.xlu0 %544
        %547 = vset.pattern.permute.xlu0 1
        %548 = vperm.xlu0 %547, %v421
        %v549 = vpop.permute.xlu0 %548
        %551 = vset.pattern.permute.xlu0 1
        %552 = vperm.xlu0 %551, %v422
        %v553 = vpop.permute.xlu0 %552
        %555 = vset.pattern.permute.xlu0 1
        %556 = vperm.xlu0 %555, %v423
        %v557 = vpop.permute.xlu0 %556
        %559 = vset.pattern.permute.xlu0 1
        %560 = vperm.xlu0 %559, %v424
        %v561 = vpop.permute.xlu0 %560
        %563 = vset.pattern.permute.xlu0 1
        %564 = vperm.xlu0 %563, %v425
        %v565 = vpop.permute.xlu0 %564
        %567 = vset.pattern.permute.xlu0 1
        %568 = vperm.xlu0 %567, %v426
        %v569 = vpop.permute.xlu0 %568
        %571 = vset.pattern.permute.xlu0 1
        %572 = vperm.xlu0 %571, %v427
        %v573 = vpop.permute.xlu0 %572
        %575 = vset.pattern.permute.xlu0 1
        %576 = vperm.xlu0 %575, %v428
        %v577 = vpop.permute.xlu0 %576
        %579 = vset.pattern.permute.xlu0 1
        %580 = vperm.xlu0 %579, %v429
        %v581 = vpop.permute.xlu0 %580
        %583 = vset.pattern.permute.xlu0 1
        %584 = vperm.xlu0 %583, %v430
        %v585 = vpop.permute.xlu0 %584
        %587 = vset.pattern.permute.xlu0 1
        %588 = vperm.xlu0 %587, %v431
        %v589 = vpop.permute.xlu0 %588
        %591 = vset.pattern.permute.xlu0 1
        %592 = vperm.xlu0 %591, %v432
        %v593 = vpop.permute.xlu0 %592
        %595 = vset.pattern.permute.xlu0 1
        %596 = vperm.xlu0 %595, %v433
        %v597 = vpop.permute.xlu0 %596
        %v599 = vlaneseq
        %v600 = vshrl.u32 %v599, 7
        %v601 = vsub.s32 1, %v600
        %v602 = vrot.slane %v434, %v601
        %v603 = vmul.f32 %v537, %v602
        %v604 = vmul.f32 %v541, %v602
        %v605 = vmul.f32 %v545, %v602
        %v606 = vmul.f32 %v549, %v602
        %v607 = vmul.f32 %v553, %v602
        %v608 = vmul.f32 %v557, %v602
        %v609 = vmul.f32 %v561, %v602
        %v610 = vmul.f32 %v565, %v602
        %v611 = vmul.f32 %v569, %v602
        %v612 = vmul.f32 %v573, %v602
        %v613 = vmul.f32 %v577, %v602
        %v614 = vmul.f32 %v581, %v602
        %v615 = vmul.f32 %v585, %v602
        %v616 = vmul.f32 %v589, %v602
        %v617 = vmul.f32 %v593, %v602
        %v618 = vmul.f32 %v597, %v602
        %v619 = vadd.f32 %v519, %v603
        %v620 = vadd.f32 %v520, %v604
        %v621 = vadd.f32 %v521, %v605
        %v622 = vadd.f32 %v522, %v606
        %v623 = vadd.f32 %v523, %v607
        %v624 = vadd.f32 %v524, %v608
        %v625 = vadd.f32 %v525, %v609
        %v626 = vadd.f32 %v526, %v610
        %v627 = vadd.f32 %v527, %v611
        %v628 = vadd.f32 %v528, %v612
        %v629 = vadd.f32 %v529, %v613
        %v630 = vadd.f32 %v530, %v614
        %v631 = vadd.f32 %v531, %v615
        %v632 = vadd.f32 %v532, %v616
        %v633 = vadd.f32 %v533, %v617
        %v634 = vadd.f32 %v534, %v618
        %635 = vset.pattern.permute.xlu0 2
        %636 = vperm.xlu0 %635, %v418
        %v637 = vpop.permute.xlu0 %636
        %639 = vset.pattern.permute.xlu0 2
        %640 = vperm.xlu0 %639, %v419
        %v641 = vpop.permute.xlu0 %640
        %643 = vset.pattern.permute.xlu0 2
        %644 = vperm.xlu0 %643, %v420
        %v645 = vpop.permute.xlu0 %644
        %647 = vset.pattern.permute.xlu0 2
        %648 = vperm.xlu0 %647, %v421
        %v649 = vpop.permute.xlu0 %648
        %651 = vset.pattern.permute.xlu0 2
        %652 = vperm.xlu0 %651, %v422
        %v653 = vpop.permute.xlu0 %652
        %655 = vset.pattern.permute.xlu0 2
        %656 = vperm.xlu0 %655, %v423
        %v657 = vpop.permute.xlu0 %656
        %659 = vset.pattern.permute.xlu0 2
        %660 = vperm.xlu0 %659, %v424
        %v661 = vpop.permute.xlu0 %660
        %663 = vset.pattern.permute.xlu0 2
        %664 = vperm.xlu0 %663, %v425
        %v665 = vpop.permute.xlu0 %664
        %667 = vset.pattern.permute.xlu0 2
        %668 = vperm.xlu0 %667, %v426
        %v669 = vpop.permute.xlu0 %668
        %671 = vset.pattern.permute.xlu0 2
        %672 = vperm.xlu0 %671, %v427
        %v673 = vpop.permute.xlu0 %672
        %675 = vset.pattern.permute.xlu0 2
        %676 = vperm.xlu0 %675, %v428
        %v677 = vpop.permute.xlu0 %676
        %679 = vset.pattern.permute.xlu0 2
        %680 = vperm.xlu0 %679, %v429
        %v681 = vpop.permute.xlu0 %680
        %683 = vset.pattern.permute.xlu0 2
        %684 = vperm.xlu0 %683, %v430
        %v685 = vpop.permute.xlu0 %684
        %687 = vset.pattern.permute.xlu0 2
        %688 = vperm.xlu0 %687, %v431
        %v689 = vpop.permute.xlu0 %688
        %691 = vset.pattern.permute.xlu0 2
        %692 = vperm.xlu0 %691, %v432
        %v693 = vpop.permute.xlu0 %692
        %695 = vset.pattern.permute.xlu0 2
        %696 = vperm.xlu0 %695, %v433
        %v697 = vpop.permute.xlu0 %696
        %v699 = vlaneseq
        %v700 = vshrl.u32 %v699, 7
        %v701 = vsub.s32 2, %v700
        %v702 = vrot.slane %v434, %v701
        %v703 = vmul.f32 %v637, %v702
        %v704 = vmul.f32 %v641, %v702
        %v705 = vmul.f32 %v645, %v702
        %v706 = vmul.f32 %v649, %v702
        %v707 = vmul.f32 %v653, %v702
        %v708 = vmul.f32 %v657, %v702
        %v709 = vmul.f32 %v661, %v702
        %v710 = vmul.f32 %v665, %v702
        %v711 = vmul.f32 %v669, %v702
        %v712 = vmul.f32 %v673, %v702
        %v713 = vmul.f32 %v677, %v702
        %v714 = vmul.f32 %v681, %v702
        %v715 = vmul.f32 %v685, %v702
        %v716 = vmul.f32 %v689, %v702
        %v717 = vmul.f32 %v693, %v702
        %v718 = vmul.f32 %v697, %v702
        %v719 = vadd.f32 %v619, %v703
        %v720 = vadd.f32 %v620, %v704
        %v721 = vadd.f32 %v621, %v705
        %v722 = vadd.f32 %v622, %v706
        %v723 = vadd.f32 %v623, %v707
        %v724 = vadd.f32 %v624, %v708
        %v725 = vadd.f32 %v625, %v709
        %v726 = vadd.f32 %v626, %v710
        %v727 = vadd.f32 %v627, %v711
        %v728 = vadd.f32 %v628, %v712
        %v729 = vadd.f32 %v629, %v713
        %v730 = vadd.f32 %v630, %v714
        %v731 = vadd.f32 %v631, %v715
        %v732 = vadd.f32 %v632, %v716
        %v733 = vadd.f32 %v633, %v717
        %v734 = vadd.f32 %v634, %v718
        %v735 = vld [vmem:[%s2] sm:$0x1]
        %v737 = vlaneseq
        %v738 = vshrl.u32 %v737, 7
        %v739 = vsub.s32 0, %v738
        %v740 = vrot.slane %v735, %v739
        %v742 = vadd.f32 %v719, %v740
        %v743 = vadd.f32 %v720, %v740
        %v744 = vadd.f32 %v721, %v740
        %v745 = vadd.f32 %v722, %v740
        %v746 = vadd.f32 %v723, %v740
        %v747 = vadd.f32 %v724, %v740
        %v748 = vadd.f32 %v725, %v740
        %v749 = vadd.f32 %v726, %v740
        %v750 = vadd.f32 %v727, %v740
        %v751 = vadd.f32 %v728, %v740
        %v752 = vadd.f32 %v729, %v740
        %v753 = vadd.f32 %v730, %v740
        %v754 = vadd.f32 %v731, %v740
        %v755 = vadd.f32 %v732, %v740
        %v756 = vadd.f32 %v733, %v740
        %v757 = vadd.f32 %v734, %v740
        %v758 = vpack.c.bf16 %v743, %v742
        %v759 = vpack.c.bf16 %v745, %v744
        %v760 = vpack.c.bf16 %v747, %v746
        %v761 = vpack.c.bf16 %v749, %v748
        %v762 = vpack.c.bf16 %v751, %v750
        %v763 = vpack.c.bf16 %v753, %v752
        %v764 = vpack.c.bf16 %v755, %v754
        %v765 = vpack.c.bf16 %v757, %v756
        %v766 = vmax.bf16 %v758, 0
        %v767 = vmax.bf16 %v759, 0
        %v768 = vmax.bf16 %v760, 0
        %v769 = vmax.bf16 %v761, 0
        %v770 = vmax.bf16 %v762, 0
        %v771 = vmax.bf16 %v763, 0
        %v772 = vmax.bf16 %v764, 0
        %v773 = vmax.bf16 %v765, 0
        %v774 = vld [vmem:[%s3] sm:$0xf]
        %v775 = vld [vmem:[%s3 + $0x4] sm:$0xf]
        %v776 = vld [vmem:[%s3 + $0x8] sm:$0xf]
        %v777 = vld [vmem:[%s3 + $0xc] sm:$0xf]
        %v778 = vld [vmem:[%s3 + $0x10] sm:$0xf]
        %v779 = vld [vmem:[%s3 + $0x14] sm:$0xf]
        %v780 = vld [vmem:[%s3 + $0x18] sm:$0xf]
        %v781 = vld [vmem:[%s3 + $0x1c] sm:$0xf]
        %v782 = vld [vmem:[%s4] sm:$0x1]
        %v784 = vlaneseq
        %v785 = vshrl.u32 %v784, 7
        %v786 = vsub.s32 0, %v785
        %v787 = vrot.slane %v782, %v786
        %v797 = vunpack.c.l.b16 %v774
        %v798 = vunpack.c.l.b16 %v775
        %v799 = vunpack.c.l.b16 %v776
        %v800 = vunpack.c.l.b16 %v777
        %v801 = vunpack.c.l.b16 %v778
        %v802 = vunpack.c.l.b16 %v779
        %v803 = vunpack.c.l.b16 %v780
        %v804 = vunpack.c.l.b16 %v781
        %v805 = vpack.c.b16 %v798, %v797
        %v806 = vpack.c.b16 %v800, %v799
        %v807 = vpack.c.b16 %v802, %v801
        %v808 = vpack.c.b16 %v804, %v803
        %vm813 = vcmask 523264
        %v815 = vsel %vm813, %v766, 0
        %v818 = vsel %vm813, %v767, 0
        %v821 = vsel %vm813, %v768, 0
        %v824 = vsel %vm813, %v769, 0
        %v827 = vsel %vm813, %v770, 0
        %v830 = vsel %vm813, %v771, 0
        %v833 = vsel %vm813, %v772, 0
        %v836 = vsel %vm813, %v773, 0
        %838 = vmatprep.subr.bf16.mxu0 0
        %839 = vmatpush1.bf16.msra.mxu0 0
        %840 = vmatprep.subr.bf16.mxu0 0
        %841 = vmatpush1.bf16.msra.mxu0 0
        %842 = vmatprep.subr.bf16.mxu0 0
        %843 = vmatpush1.bf16.msra.mxu0 0
        %844 = vmatprep.subr.bf16.mxu0 0
        %845 = vmatpush1.bf16.msra.mxu0 0
        %846 = vmatprep.subr.bf16.mxu0 0
        %847 = vmatpush1.bf16.msra.mxu0 %v808
        %848 = vmatprep.subr.bf16.mxu0 0
        %849 = vmatpush1.bf16.msra.mxu0 %v807
        %850 = vmatprep.subr.bf16.mxu0 0
        %851 = vmatpush1.bf16.msra.mxu0 %v806
        %852 = vmatprep.subr.bf16.mxu0 0
        %853 = vmatpush1.bf16.msra.mxu0 %v805
        %854 = vmatprep.subr.bf16.mxu0 0
        %855 = vmatpush2.bf16.msra.mxu0 0
        %856 = vmatprep.subr.bf16.mxu0 0
        %857 = vmatpush2.bf16.msra.mxu0 0
        %858 = vmatprep.subr.bf16.mxu0 0
        %859 = vmatpush2.bf16.msra.mxu0 0
        %860 = vmatprep.subr.bf16.mxu0 0
        %861 = vmatpush2.bf16.msra.mxu0 0
        %862 = vmatprep.subr.bf16.mxu0 0
        %863 = vmatpush2.bf16.msra.mxu0 0
        %864 = vmatprep.subr.bf16.mxu0 0
        %865 = vmatpush2.bf16.msra.mxu0 0
        %866 = vmatprep.subr.bf16.mxu0 0
        %867 = vmatpush2.bf16.msra.mxu0 0
        %868 = vmatprep.subr.bf16.mxu0 0
        %869 = vmatpush2.bf16.msra.mxu0 0
        %870 = vmatprep.mubr.bf16.mxu0 0
        %871 = vmatmul.mubr.bf16.gmra.mxu0 %v815
        %v872 = vpop.f32.mrf.mxu0
        %v873 = vadd.f32 %v787, %v872
        %v874 = vpop.f32.mrf.mxu0
        %v875 = vpop.f32.mrf.mxu0
        %v876 = vadd.f32 %v787, %v875
        %v877 = vpop.f32.mrf.mxu0
        %878 = vmatprep.mubr.bf16.mxu0 0
        %879 = vmatmul.mubr.bf16.gmra.mxu0 %v818
        %v880 = vpop.f32.mrf.mxu0
        %v881 = vadd.f32 %v787, %v880
        %v882 = vpop.f32.mrf.mxu0
        %v883 = vpop.f32.mrf.mxu0
        %v884 = vadd.f32 %v787, %v883
        %v885 = vpop.f32.mrf.mxu0
        %886 = vmatprep.mubr.bf16.mxu0 0
        %887 = vmatmul.mubr.bf16.gmra.mxu0 %v821
        %v888 = vpop.f32.mrf.mxu0
        %v889 = vadd.f32 %v787, %v888
        %v890 = vpop.f32.mrf.mxu0
        %v891 = vpop.f32.mrf.mxu0
        %v892 = vadd.f32 %v787, %v891
        %v893 = vpop.f32.mrf.mxu0
        %894 = vmatprep.mubr.bf16.mxu0 0
        %895 = vmatmul.mubr.bf16.gmra.mxu0 %v824
        %v896 = vpop.f32.mrf.mxu0
        %v897 = vadd.f32 %v787, %v896
        %v898 = vpop.f32.mrf.mxu0
        %v899 = vpop.f32.mrf.mxu0
        %v900 = vadd.f32 %v787, %v899
        %v901 = vpop.f32.mrf.mxu0
        %902 = vmatprep.mubr.bf16.mxu0 0
        %903 = vmatmul.mubr.bf16.gmra.mxu0 %v827
        %v904 = vpop.f32.mrf.mxu0
        %v905 = vadd.f32 %v787, %v904
        %v906 = vpop.f32.mrf.mxu0
        %v907 = vpop.f32.mrf.mxu0
        %v908 = vadd.f32 %v787, %v907
        %v909 = vpop.f32.mrf.mxu0
        %910 = vmatprep.mubr.bf16.mxu0 0
        %911 = vmatmul.mubr.bf16.gmra.mxu0 %v830
        %v912 = vpop.f32.mrf.mxu0
        %v913 = vadd.f32 %v787, %v912
        %v914 = vpop.f32.mrf.mxu0
        %v915 = vpop.f32.mrf.mxu0
        %v916 = vadd.f32 %v787, %v915
        %v917 = vpop.f32.mrf.mxu0
        %918 = vmatprep.mubr.bf16.mxu0 0
        %919 = vmatmul.mubr.bf16.gmra.mxu0 %v833
        %v920 = vpop.f32.mrf.mxu0
        %v921 = vadd.f32 %v787, %v920
        %v922 = vpop.f32.mrf.mxu0
        %v923 = vpop.f32.mrf.mxu0
        %v924 = vadd.f32 %v787, %v923
        %v925 = vpop.f32.mrf.mxu0
        %926 = vmatprep.mubr.bf16.mxu0 0
        %927 = vmatmul.mubr.bf16.gmra.mxu0 %v836
        %v928 = vpop.f32.mrf.mxu0
        %v929 = vadd.f32 %v787, %v928
        %v930 = vpop.f32.mrf.mxu0
        %v931 = vpop.f32.mrf.mxu0
        %v932 = vadd.f32 %v787, %v931
        %v933 = vpop.f32.mrf.mxu0
        %934 = vdwg.mxu0
        %v935 = vmax.f32 %v873, 0.0
        %v936 = vmax.f32 %v876, 0.0
        %v937 = vmax.f32 %v881, 0.0
        %v938 = vmax.f32 %v884, 0.0
        %v939 = vmax.f32 %v889, 0.0
        %v940 = vmax.f32 %v892, 0.0
        %v941 = vmax.f32 %v897, 0.0
        %v942 = vmax.f32 %v900, 0.0
        %v943 = vmax.f32 %v905, 0.0
        %v944 = vmax.f32 %v908, 0.0
        %v945 = vmax.f32 %v913, 0.0
        %v946 = vmax.f32 %v916, 0.0
        %v947 = vmax.f32 %v921, 0.0
        %v948 = vmax.f32 %v924, 0.0
        %v949 = vmax.f32 %v929, 0.0
        %v950 = vmax.f32 %v932, 0.0
        %v951 = vpack.c.bf16 %v936, %v935
        %v952 = vpack.c.bf16 %v938, %v937
        %v953 = vpack.c.bf16 %v940, %v939
        %v954 = vpack.c.bf16 %v942, %v941
        %v955 = vpack.c.bf16 %v944, %v943
        %v956 = vpack.c.bf16 %v946, %v945
        %v957 = vpack.c.bf16 %v948, %v947
        %v958 = vpack.c.bf16 %v950, %v949
        %967 = vrot.lane.b32.xlu0 %v951, 64
        %v968 = vpop.permute.xlu0 %967
        %969 = vrot.lane.b32.xlu0 %v952, 64
        %v970 = vpop.permute.xlu0 %969
        %971 = vrot.lane.b32.xlu0 %v953, 64
        %v972 = vpop.permute.xlu0 %971
        %973 = vrot.lane.b32.xlu0 %v954, 64
        %v974 = vpop.permute.xlu0 %973
        %975 = vrot.lane.b32.xlu0 %v955, 64
        %v976 = vpop.permute.xlu0 %975
        %977 = vrot.lane.b32.xlu0 %v956, 64
        %v978 = vpop.permute.xlu0 %977
        %979 = vrot.lane.b32.xlu0 %v957, 64
        %v980 = vpop.permute.xlu0 %979
        %981 = vrot.lane.b32.xlu0 %v958, 64
        %v982 = vpop.permute.xlu0 %981
        %v985 = vsel %vm813, %v758, %v968
        %v988 = vsel %vm813, %v759, %v970
        %v991 = vsel %vm813, %v760, %v972
        %v994 = vsel %vm813, %v761, %v974
        %v997 = vsel %vm813, %v762, %v976
        %v1000 = vsel %vm813, %v763, %v978
        %v1003 = vsel %vm813, %v764, %v980
        %v1006 = vsel %vm813, %v765, %v982
        %v1007 = vld [vmem:[%s5] sm:$0xf]
        %v1008 = vld [vmem:[%s5 + $0x4] sm:$0xf]
        %v1009 = vld [vmem:[%s5 + $0x8] sm:$0xf]
        %v1010 = vld [vmem:[%s5 + $0xc] sm:$0xf]
        %v1011 = vld [vmem:[%s5 + $0x10] sm:$0xf]
        %v1012 = vld [vmem:[%s5 + $0x14] sm:$0xf]
        %v1013 = vld [vmem:[%s5 + $0x18] sm:$0xf]
        %v1014 = vld [vmem:[%s5 + $0x1c] sm:$0xf]
        %v1015 = vld [vmem:[%s5 + $0x20] sm:$0xf]
        %v1016 = vld [vmem:[%s5 + $0x24] sm:$0xf]
        %v1017 = vld [vmem:[%s5 + $0x28] sm:$0xf]
        %v1018 = vld [vmem:[%s5 + $0x2c] sm:$0xf]
        %v1019 = vld [vmem:[%s6] sm:$0x1]
        %v1021 = vlaneseq
        %v1022 = vshrl.u32 %v1021, 7
        %v1023 = vsub.s32 0, %v1022
        %v1024 = vrot.slane %v1019, %v1023
        %v1038 = vunpack.c.l.b16 %v1007
        %v1039 = vunpack.c.l.b16 %v1008
        %v1040 = vunpack.c.l.b16 %v1009
        %v1041 = vunpack.c.l.b16 %v1010
        %v1042 = vunpack.c.l.b16 %v1011
        %v1043 = vunpack.c.l.b16 %v1012
        %v1044 = vunpack.c.l.b16 %v1013
        %v1045 = vunpack.c.l.b16 %v1014
        %v1046 = vunpack.c.l.b16 %v1015
        %v1047 = vunpack.c.l.b16 %v1016
        %v1048 = vunpack.c.l.b16 %v1017
        %v1049 = vunpack.c.l.b16 %v1018
        %v1050 = vpack.c.b16 %v1039, %v1038
        %v1051 = vpack.c.b16 %v1041, %v1040
        %v1052 = vpack.c.b16 %v1043, %v1042
        %v1053 = vpack.c.b16 %v1045, %v1044
        %v1054 = vpack.c.b16 %v1047, %v1046
        %v1055 = vpack.c.b16 %v1049, %v1048
        %vm1062 = vcmask 785408
        %v1063 = vsel %vm1062, %v985, 0
        %v1065 = vsel %vm1062, %v988, 0
        %v1067 = vsel %vm1062, %v991, 0
        %v1069 = vsel %vm1062, %v994, 0
        %v1071 = vsel %vm1062, %v997, 0
        %v1073 = vsel %vm1062, %v1000, 0
        %v1075 = vsel %vm1062, %v1003, 0
        %v1077 = vsel %vm1062, %v1006, 0
        %1079 = vmatprep.subr.bf16.mxu0 0
        %1080 = vmatpush1.bf16.msra.mxu0 0
        %1081 = vmatprep.subr.bf16.mxu0 0
        %1082 = vmatpush1.bf16.msra.mxu0 0
        %1083 = vmatprep.subr.bf16.mxu0 0
        %1084 = vmatpush1.bf16.msra.mxu0 %v1055
        %1085 = vmatprep.subr.bf16.mxu0 0
        %1086 = vmatpush1.bf16.msra.mxu0 %v1054
        %1087 = vmatprep.subr.bf16.mxu0 0
        %1088 = vmatpush1.bf16.msra.mxu0 %v1053
        %1089 = vmatprep.subr.bf16.mxu0 0
        %1090 = vmatpush1.bf16.msra.mxu0 %v1052
        %1091 = vmatprep.subr.bf16.mxu0 0
        %1092 = vmatpush1.bf16.msra.mxu0 %v1051
        %1093 = vmatprep.subr.bf16.mxu0 0
        %1094 = vmatpush1.bf16.msra.mxu0 %v1050
        %1095 = vmatprep.subr.bf16.mxu0 0
        %1096 = vmatpush2.bf16.msra.mxu0 0
        %1097 = vmatprep.subr.bf16.mxu0 0
        %1098 = vmatpush2.bf16.msra.mxu0 0
        %1099 = vmatprep.subr.bf16.mxu0 0
        %1100 = vmatpush2.bf16.msra.mxu0 0
        %1101 = vmatprep.subr.bf16.mxu0 0
        %1102 = vmatpush2.bf16.msra.mxu0 0
        %1103 = vmatprep.subr.bf16.mxu0 0
        %1104 = vmatpush2.bf16.msra.mxu0 0
        %1105 = vmatprep.subr.bf16.mxu0 0
        %1106 = vmatpush2.bf16.msra.mxu0 0
        %1107 = vmatprep.subr.bf16.mxu0 0
        %1108 = vmatpush2.bf16.msra.mxu0 0
        %1109 = vmatprep.subr.bf16.mxu0 0
        %1110 = vmatpush2.bf16.msra.mxu0 0
        %1111 = vmatprep.mubr.bf16.mxu0 0
        %1112 = vmatmul.mubr.bf16.gmra.mxu0 %v1063
        %v1113 = vpop.f32.mrf.mxu0
        %v1114 = vadd.f32 %v1024, %v1113
        %v1115 = vpop.f32.mrf.mxu0
        %v1116 = vpop.f32.mrf.mxu0
        %v1117 = vadd.f32 %v1024, %v1116
        %v1118 = vpop.f32.mrf.mxu0
        %1119 = vmatprep.mubr.bf16.mxu0 0
        %1120 = vmatmul.mubr.bf16.gmra.mxu0 %v1065
        %v1121 = vpop.f32.mrf.mxu0
        %v1122 = vadd.f32 %v1024, %v1121
        %v1123 = vpop.f32.mrf.mxu0
        %v1124 = vpop.f32.mrf.mxu0
        %v1125 = vadd.f32 %v1024, %v1124
        %v1126 = vpop.f32.mrf.mxu0
        %1127 = vmatprep.mubr.bf16.mxu0 0
        %1128 = vmatmul.mubr.bf16.gmra.mxu0 %v1067
        %v1129 = vpop.f32.mrf.mxu0
        %v1130 = vadd.f32 %v1024, %v1129
        %v1131 = vpop.f32.mrf.mxu0
        %v1132 = vpop.f32.mrf.mxu0
        %v1133 = vadd.f32 %v1024, %v1132
        %v1134 = vpop.f32.mrf.mxu0
        %1135 = vmatprep.mubr.bf16.mxu0 0
        %1136 = vmatmul.mubr.bf16.gmra.mxu0 %v1069
        %v1137 = vpop.f32.mrf.mxu0
        %v1138 = vadd.f32 %v1024, %v1137
        %v1139 = vpop.f32.mrf.mxu0
        %v1140 = vpop.f32.mrf.mxu0
        %v1141 = vadd.f32 %v1024, %v1140
        %v1142 = vpop.f32.mrf.mxu0
        %1143 = vmatprep.mubr.bf16.mxu0 0
        %1144 = vmatmul.mubr.bf16.gmra.mxu0 %v1071
        %v1145 = vpop.f32.mrf.mxu0
        %v1146 = vadd.f32 %v1024, %v1145
        %v1147 = vpop.f32.mrf.mxu0
        %v1148 = vpop.f32.mrf.mxu0
        %v1149 = vadd.f32 %v1024, %v1148
        %v1150 = vpop.f32.mrf.mxu0
        %1151 = vmatprep.mubr.bf16.mxu0 0
        %1152 = vmatmul.mubr.bf16.gmra.mxu0 %v1073
        %v1153 = vpop.f32.mrf.mxu0
        %v1154 = vadd.f32 %v1024, %v1153
        %v1155 = vpop.f32.mrf.mxu0
        %v1156 = vpop.f32.mrf.mxu0
        %v1157 = vadd.f32 %v1024, %v1156
        %v1158 = vpop.f32.mrf.mxu0
        %1159 = vmatprep.mubr.bf16.mxu0 0
        %1160 = vmatmul.mubr.bf16.gmra.mxu0 %v1075
        %v1161 = vpop.f32.mrf.mxu0
        %v1162 = vadd.f32 %v1024, %v1161
        %v1163 = vpop.f32.mrf.mxu0
        %v1164 = vpop.f32.mrf.mxu0
        %v1165 = vadd.f32 %v1024, %v1164
        %v1166 = vpop.f32.mrf.mxu0
        %1167 = vmatprep.mubr.bf16.mxu0 0
        %1168 = vmatmul.mubr.bf16.gmra.mxu0 %v1077
        %v1169 = vpop.f32.mrf.mxu0
        %v1170 = vadd.f32 %v1024, %v1169
        %v1171 = vpop.f32.mrf.mxu0
        %v1172 = vpop.f32.mrf.mxu0
        %v1173 = vadd.f32 %v1024, %v1172
        %v1174 = vpop.f32.mrf.mxu0
        %1175 = vdwg.mxu0
        %vm1176 = vcmask 261120
        %v1177 = vsel %vm1176, %v1114, -inf
        %v1178 = vsel %vm1176, %v1117, -inf
        %v1179 = vmax.f32 %v1177, %v1178
        %v1180 = vrot.slane %v1179, 4
        %v1181 = vmax.f32 %v1179, %v1180
        %v1182 = vrot.slane %v1181, 2
        %v1183 = vmax.f32 %v1181, %v1182
        %v1184 = vrot.slane %v1183, 1
        %v1185 = vmax.f32 %v1183, %v1184
        %v1186 = vsel %vm1176, %v1122, -inf
        %v1187 = vsel %vm1176, %v1125, -inf
        %v1188 = vmax.f32 %v1186, %v1187
        %v1189 = vrot.slane %v1188, 4
        %v1190 = vmax.f32 %v1188, %v1189
        %v1191 = vrot.slane %v1190, 2
        %v1192 = vmax.f32 %v1190, %v1191
        %v1193 = vrot.slane %v1192, 1
        %v1194 = vmax.f32 %v1192, %v1193
        %v1195 = vsel %vm1176, %v1130, -inf
        %v1196 = vsel %vm1176, %v1133, -inf
        %v1197 = vmax.f32 %v1195, %v1196
        %v1198 = vrot.slane %v1197, 4
        %v1199 = vmax.f32 %v1197, %v1198
        %v1200 = vrot.slane %v1199, 2
        %v1201 = vmax.f32 %v1199, %v1200
        %v1202 = vrot.slane %v1201, 1
        %v1203 = vmax.f32 %v1201, %v1202
        %v1204 = vsel %vm1176, %v1138, -inf
        %v1205 = vsel %vm1176, %v1141, -inf
        %v1206 = vmax.f32 %v1204, %v1205
        %v1207 = vrot.slane %v1206, 4
        %v1208 = vmax.f32 %v1206, %v1207
        %v1209 = vrot.slane %v1208, 2
        %v1210 = vmax.f32 %v1208, %v1209
        %v1211 = vrot.slane %v1210, 1
        %v1212 = vmax.f32 %v1210, %v1211
        %v1213 = vsel %vm1176, %v1146, -inf
        %v1214 = vsel %vm1176, %v1149, -inf
        %v1215 = vmax.f32 %v1213, %v1214
        %v1216 = vrot.slane %v1215, 4
        %v1217 = vmax.f32 %v1215, %v1216
        %v1218 = vrot.slane %v1217, 2
        %v1219 = vmax.f32 %v1217, %v1218
        %v1220 = vrot.slane %v1219, 1
        %v1221 = vmax.f32 %v1219, %v1220
        %v1222 = vsel %vm1176, %v1154, -inf
        %v1223 = vsel %vm1176, %v1157, -inf
        %v1224 = vmax.f32 %v1222, %v1223
        %v1225 = vrot.slane %v1224, 4
        %v1226 = vmax.f32 %v1224, %v1225
        %v1227 = vrot.slane %v1226, 2
        %v1228 = vmax.f32 %v1226, %v1227
        %v1229 = vrot.slane %v1228, 1
        %v1230 = vmax.f32 %v1228, %v1229
        %v1231 = vsel %vm1176, %v1162, -inf
        %v1232 = vsel %vm1176, %v1165, -inf
        %v1233 = vmax.f32 %v1231, %v1232
        %v1234 = vrot.slane %v1233, 4
        %v1235 = vmax.f32 %v1233, %v1234
        %v1236 = vrot.slane %v1235, 2
        %v1237 = vmax.f32 %v1235, %v1236
        %v1238 = vrot.slane %v1237, 1
        %v1239 = vmax.f32 %v1237, %v1238
        %v1240 = vsel %vm1176, %v1170, -inf
        %v1241 = vsel %vm1176, %v1173, -inf
        %v1242 = vmax.f32 %v1240, %v1241
        %v1243 = vrot.slane %v1242, 4
        %v1244 = vmax.f32 %v1242, %v1243
        %v1245 = vrot.slane %v1244, 2
        %v1246 = vmax.f32 %v1244, %v1245
        %v1247 = vrot.slane %v1246, 1
        %v1248 = vmax.f32 %v1246, %v1247
        %v1249 = vpack.c.bf16 %v1117, %v1114
        %v1250 = vpack.c.bf16 %v1125, %v1122
        %v1251 = vpack.c.bf16 %v1133, %v1130
        %v1252 = vpack.c.bf16 %v1141, %v1138
        %v1253 = vpack.c.bf16 %v1149, %v1146
        %v1254 = vpack.c.bf16 %v1157, %v1154
        %v1255 = vpack.c.bf16 %v1165, %v1162
        %v1256 = vpack.c.bf16 %v1173, %v1170
        %v1257 = vmax.bf16 %v1249, 0
        %v1258 = vmax.bf16 %v1250, 0
        %v1259 = vmax.bf16 %v1251, 0
        %v1260 = vmax.bf16 %v1252, 0
        %v1261 = vmax.bf16 %v1253, 0
        %v1262 = vmax.bf16 %v1254, 0
        %v1263 = vmax.bf16 %v1255, 0
        %v1264 = vmax.bf16 %v1256, 0
        %v1265 = vmax.f32 %v1185, 0.0
        %v1266 = vmax.f32 %v1194, 0.0
        %v1267 = vmax.f32 %v1203, 0.0
        %v1268 = vmax.f32 %v1212, 0.0
        %v1269 = vmax.f32 %v1221, 0.0
        %v1270 = vmax.f32 %v1230, 0.0
        %v1271 = vmax.f32 %v1239, 0.0
        %v1272 = vmax.f32 %v1248, 0.0
        %vm1281 = vcmask 1041409
        %v1282 = vsel %vm1281, %v1266, %v1265
        %vm1283 = vcmask 1042434
        %v1284 = vsel %vm1283, %v1267, %v1282
        %vm1285 = vcmask 1043459
        %v1286 = vsel %vm1285, %v1268, %v1284
        %vm1287 = vcmask 1044484
        %v1288 = vsel %vm1287, %v1269, %v1286
        %vm1289 = vcmask 1045509
        %v1290 = vsel %vm1289, %v1270, %v1288
        %vm1291 = vcmask 1046534
        %v1292 = vsel %vm1291, %v1271, %v1290
        %vm1293 = vcmask 1047559
        %v1294 = vsel %vm1293, %v1272, %v1292
        %v1304 = vsel %vm1281, %v1194, %v1185
        %v1305 = vsel %vm1283, %v1203, %v1304
        %v1306 = vsel %vm1285, %v1212, %v1305
        %v1307 = vsel %vm1287, %v1221, %v1306
        %v1308 = vsel %vm1289, %v1230, %v1307
        %v1309 = vsel %vm1291, %v1239, %v1308
        %v1310 = vsel %vm1293, %v1248, %v1309
        %v1312 = vpack.c.bf16 %v1310, %v1294
        %v1313 = vld [vmem:[%s9] sm:$0xf]
        %v1314 = vld [vmem:[%s9 + $0x4] sm:$0xf]
        %v1315 = vld [vmem:[%s9 + $0x8] sm:$0xf]
        %v1316 = vld [vmem:[%s9 + $0xc] sm:$0xf]
        %v1321 = vunpack.c.l.b16 %v1313
        %v1322 = vunpack.c.l.b16 %v1314
        %v1323 = vunpack.c.l.b16 %v1315
        %v1324 = vunpack.c.l.b16 %v1316
        %v1325 = vpack.c.b16 %v1322, %v1321
        %v1326 = vpack.c.b16 %v1324, %v1323
        %v1330 = vsel %vm1176, %v1312, 0
        %1332 = vmatprep.subr.bf16.mxu0 0
        %1333 = vmatpush1.bf16.msra.mxu0 0
        %1334 = vmatprep.subr.bf16.mxu0 0
        %1335 = vmatpush1.bf16.msra.mxu0 0
        %1336 = vmatprep.subr.bf16.mxu0 0
        %1337 = vmatpush1.bf16.msra.mxu0 0
        %1338 = vmatprep.subr.bf16.mxu0 0
        %1339 = vmatpush1.bf16.msra.mxu0 0
        %1340 = vmatprep.subr.bf16.mxu0 0
        %1341 = vmatpush1.bf16.msra.mxu0 0
        %1342 = vmatprep.subr.bf16.mxu0 0
        %1343 = vmatpush1.bf16.msra.mxu0 0
        %1344 = vmatprep.subr.bf16.mxu0 0
        %1345 = vmatpush1.bf16.msra.mxu0 %v1326
        %1346 = vmatprep.subr.bf16.mxu0 0
        %1347 = vmatpush1.bf16.msra.mxu0 %v1325
        %1348 = vmatprep.subr.bf16.mxu0 0
        %1349 = vmatpush2.bf16.msra.mxu0 0
        %1350 = vmatprep.subr.bf16.mxu0 0
        %1351 = vmatpush2.bf16.msra.mxu0 0
        %1352 = vmatprep.subr.bf16.mxu0 0
        %1353 = vmatpush2.bf16.msra.mxu0 0
        %1354 = vmatprep.subr.bf16.mxu0 0
        %1355 = vmatpush2.bf16.msra.mxu0 0
        %1356 = vmatprep.subr.bf16.mxu0 0
        %1357 = vmatpush2.bf16.msra.mxu0 0
        %1358 = vmatprep.subr.bf16.mxu0 0
        %1359 = vmatpush2.bf16.msra.mxu0 0
        %1360 = vmatprep.subr.bf16.mxu0 0
        %1361 = vmatpush2.bf16.msra.mxu0 0
        %1362 = vmatprep.subr.bf16.mxu0 0
        %1363 = vmatpush2.bf16.msra.mxu0 0
        %1364 = vmatprep.mubr.bf16.mxu0 0
        %1365 = vmatmul.mubr.bf16.gmra.mxu0 %v1330
        %v1366 = vpop.f32.mrf.mxu0
        %v1367 = vadd.f32 0.0, %v1366
        %v1368 = vpop.f32.mrf.mxu0
        %v1369 = vpop.f32.mrf.mxu0
        %v1370 = vadd.f32 0.0, %v1369
        %v1371 = vpop.f32.mrf.mxu0
        %1372 = vdwg.mxu0
        %v1373 = vld [vmem:[%s8] sm:$0x1]
        %v1375 = vlaneseq
        %v1376 = vshrl.u32 %v1375, 7
        %v1377 = vsub.s32 0, %v1376
        %v1378 = vrot.slane %v1373, %v1377
        %v1380 = vadd.f32 %v1367, %v1378
        %v1381 = vld [vmem:[%s7] sm:$0xf]
        %v1382 = vld [vmem:[%s7 + $0x4] sm:$0xf]
        %v1383 = vld [vmem:[%s7 + $0x8] sm:$0xf]
        %v1384 = vld [vmem:[%s7 + $0xc] sm:$0xf]
        %v1389 = vunpack.c.l.b16 %v1381
        %v1390 = vunpack.c.l.b16 %v1382
        %v1391 = vunpack.c.l.b16 %v1383
        %v1392 = vunpack.c.l.b16 %v1384
        %v1393 = vpack.c.b16 %v1390, %v1389
        %v1394 = vpack.c.b16 %v1392, %v1391
        %v1398 = vsel %vm1176, %v1257, 0
        %v1401 = vsel %vm1176, %v1258, 0
        %v1404 = vsel %vm1176, %v1259, 0
        %v1407 = vsel %vm1176, %v1260, 0
        %v1410 = vsel %vm1176, %v1261, 0
        %v1413 = vsel %vm1176, %v1262, 0
        %v1416 = vsel %vm1176, %v1263, 0
        %v1419 = vsel %vm1176, %v1264, 0
        %1421 = vmatprep.subr.bf16.mxu0 0
        %1422 = vmatpush1.bf16.msra.mxu0 0
        %1423 = vmatprep.subr.bf16.mxu0 0
        %1424 = vmatpush1.bf16.msra.mxu0 0
        %1425 = vmatprep.subr.bf16.mxu0 0
        %1426 = vmatpush1.bf16.msra.mxu0 0
        %1427 = vmatprep.subr.bf16.mxu0 0
        %1428 = vmatpush1.bf16.msra.mxu0 0
        %1429 = vmatprep.subr.bf16.mxu0 0
        %1430 = vmatpush1.bf16.msra.mxu0 0
        %1431 = vmatprep.subr.bf16.mxu0 0
        %1432 = vmatpush1.bf16.msra.mxu0 0
        %1433 = vmatprep.subr.bf16.mxu0 0
        %1434 = vmatpush1.bf16.msra.mxu0 %v1394
        %1435 = vmatprep.subr.bf16.mxu0 0
        %1436 = vmatpush1.bf16.msra.mxu0 %v1393
        %1437 = vmatprep.subr.bf16.mxu0 0
        %1438 = vmatpush2.bf16.msra.mxu0 0
        %1439 = vmatprep.subr.bf16.mxu0 0
        %1440 = vmatpush2.bf16.msra.mxu0 0
        %1441 = vmatprep.subr.bf16.mxu0 0
        %1442 = vmatpush2.bf16.msra.mxu0 0
        %1443 = vmatprep.subr.bf16.mxu0 0
        %1444 = vmatpush2.bf16.msra.mxu0 0
        %1445 = vmatprep.subr.bf16.mxu0 0
        %1446 = vmatpush2.bf16.msra.mxu0 0
        %1447 = vmatprep.subr.bf16.mxu0 0
        %1448 = vmatpush2.bf16.msra.mxu0 0
        %1449 = vmatprep.subr.bf16.mxu0 0
        %1450 = vmatpush2.bf16.msra.mxu0 0
        %1451 = vmatprep.subr.bf16.mxu0 0
        %1452 = vmatpush2.bf16.msra.mxu0 0
        %1453 = vmatprep.mubr.bf16.mxu0 0
        %1454 = vmatmul.mubr.bf16.gmra.mxu0 %v1398
        %v1455 = vpop.f32.mrf.mxu0
        %v1456 = vadd.f32 0.0, %v1455
        %v1457 = vpop.f32.mrf.mxu0
        %v1458 = vpop.f32.mrf.mxu0
        %v1459 = vadd.f32 0.0, %v1458
        %v1460 = vpop.f32.mrf.mxu0
        %1461 = vmatprep.mubr.bf16.mxu0 0
        %1462 = vmatmul.mubr.bf16.gmra.mxu0 %v1401
        %v1463 = vpop.f32.mrf.mxu0
        %v1464 = vadd.f32 0.0, %v1463
        %v1465 = vpop.f32.mrf.mxu0
        %v1466 = vpop.f32.mrf.mxu0
        %v1467 = vadd.f32 0.0, %v1466
        %v1468 = vpop.f32.mrf.mxu0
        %1469 = vmatprep.mubr.bf16.mxu0 0
        %1470 = vmatmul.mubr.bf16.gmra.mxu0 %v1404
        %v1471 = vpop.f32.mrf.mxu0
        %v1472 = vadd.f32 0.0, %v1471
        %v1473 = vpop.f32.mrf.mxu0
        %v1474 = vpop.f32.mrf.mxu0
        %v1475 = vadd.f32 0.0, %v1474
        %v1476 = vpop.f32.mrf.mxu0
        %1477 = vmatprep.mubr.bf16.mxu0 0
        %1478 = vmatmul.mubr.bf16.gmra.mxu0 %v1407
        %v1479 = vpop.f32.mrf.mxu0
        %v1480 = vadd.f32 0.0, %v1479
        %v1481 = vpop.f32.mrf.mxu0
        %v1482 = vpop.f32.mrf.mxu0
        %v1483 = vadd.f32 0.0, %v1482
        %v1484 = vpop.f32.mrf.mxu0
        %1485 = vmatprep.mubr.bf16.mxu0 0
        %1486 = vmatmul.mubr.bf16.gmra.mxu0 %v1410
        %v1487 = vpop.f32.mrf.mxu0
        %v1488 = vadd.f32 0.0, %v1487
        %v1489 = vpop.f32.mrf.mxu0
        %v1490 = vpop.f32.mrf.mxu0
        %v1491 = vadd.f32 0.0, %v1490
        %v1492 = vpop.f32.mrf.mxu0
        %1493 = vmatprep.mubr.bf16.mxu0 0
        %1494 = vmatmul.mubr.bf16.gmra.mxu0 %v1413
        %v1495 = vpop.f32.mrf.mxu0
        %v1496 = vadd.f32 0.0, %v1495
        %v1497 = vpop.f32.mrf.mxu0
        %v1498 = vpop.f32.mrf.mxu0
        %v1499 = vadd.f32 0.0, %v1498
        %v1500 = vpop.f32.mrf.mxu0
        %1501 = vmatprep.mubr.bf16.mxu0 0
        %1502 = vmatmul.mubr.bf16.gmra.mxu0 %v1416
        %v1503 = vpop.f32.mrf.mxu0
        %v1504 = vadd.f32 0.0, %v1503
        %v1505 = vpop.f32.mrf.mxu0
        %v1506 = vpop.f32.mrf.mxu0
        %v1507 = vadd.f32 0.0, %v1506
        %v1508 = vpop.f32.mrf.mxu0
        %1509 = vmatprep.mubr.bf16.mxu0 0
        %1510 = vmatmul.mubr.bf16.gmra.mxu0 %v1419
        %v1511 = vpop.f32.mrf.mxu0
        %v1512 = vadd.f32 0.0, %v1511
        %v1513 = vpop.f32.mrf.mxu0
        %v1514 = vpop.f32.mrf.mxu0
        %v1515 = vadd.f32 0.0, %v1514
        %v1516 = vpop.f32.mrf.mxu0
        %1517 = vdwg.mxu0
        %v1519 = vcombine.high %v1380, %v1380
        %v1521 = vunpack.c.l.s4 1966171168
        %v1522 = vunpack.c.0.s8 %v1521
        %v1523 = vlaneseq
        %v1524 = vshrl.u32 %v1523, 7
        %v1525 = vsub.s32 %v1522, %v1524
        %v1526 = vrot.slane %v1380, %v1525
        %v1528 = vunpack.c.l.s4 1966171168
        %v1529 = vunpack.c.0.s8 %v1528
        %v1530 = vlaneseq
        %v1531 = vshrl.u32 %v1530, 7
        %v1532 = vsub.s32 %v1529, %v1531
        %v1533 = vrot.slane %v1519, %v1532
        %v1534 = vcombine.high %v1526, %v1526
        %v1535 = vcombine.high %v1533, %v1533
        %v1537 = vunpack.c.l.s4 1966171168
        %v1538 = vunpack.c.0.s8 %v1537
        %v1539 = vlaneseq
        %v1540 = vshrl.u32 %v1539, 7
        %v1541 = vsub.s32 %v1538, %v1540
        %v1542 = vrot.slane %v1526, %v1541
        %v1544 = vunpack.c.l.s4 1966171168
        %v1545 = vunpack.c.0.s8 %v1544
        %v1546 = vlaneseq
        %v1547 = vshrl.u32 %v1546, 7
        %v1548 = vsub.s32 %v1545, %v1547
        %v1549 = vrot.slane %v1533, %v1548
        %v1551 = vunpack.c.l.s4 1966171168
        %v1552 = vunpack.c.0.s8 %v1551
        %v1553 = vlaneseq
        %v1554 = vshrl.u32 %v1553, 7
        %v1555 = vsub.s32 %v1552, %v1554
        %v1556 = vrot.slane %v1534, %v1555
        %v1558 = vunpack.c.l.s4 1966171168
        %v1559 = vunpack.c.0.s8 %v1558
        %v1560 = vlaneseq
        %v1561 = vshrl.u32 %v1560, 7
        %v1562 = vsub.s32 %v1559, %v1561
        %v1563 = vrot.slane %v1535, %v1562
        %v1564 = vcombine.high %v1542, %v1542
        %v1565 = vcombine.high %v1549, %v1549
        %v1566 = vcombine.high %v1556, %v1556
        %v1567 = vcombine.high %v1563, %v1563
        %v1568 = vlaneseq
        %v1569 = vshrl.u32 %v1568, 7
        %v1570 = vsub.s32 0, %v1569
        %v1571 = vrot.slane %v1542, %v1570
        %v1572 = vlaneseq
        %v1573 = vshrl.u32 %v1572, 7
        %v1574 = vsub.s32 0, %v1573
        %v1575 = vrot.slane %v1556, %v1574
        %v1576 = vlaneseq
        %v1577 = vshrl.u32 %v1576, 7
        %v1578 = vsub.s32 0, %v1577
        %v1579 = vrot.slane %v1564, %v1578
        %v1580 = vlaneseq
        %v1581 = vshrl.u32 %v1580, 7
        %v1582 = vsub.s32 0, %v1581
        %v1583 = vrot.slane %v1566, %v1582
        %v1584 = vlaneseq
        %v1585 = vshrl.u32 %v1584, 7
        %v1586 = vsub.s32 0, %v1585
        %v1587 = vrot.slane %v1549, %v1586
        %v1588 = vlaneseq
        %v1589 = vshrl.u32 %v1588, 7
        %v1590 = vsub.s32 0, %v1589
        %v1591 = vrot.slane %v1563, %v1590
        %v1592 = vlaneseq
        %v1593 = vshrl.u32 %v1592, 7
        %v1594 = vsub.s32 0, %v1593
        %v1595 = vrot.slane %v1565, %v1594
        %v1596 = vlaneseq
        %v1597 = vshrl.u32 %v1596, 7
        %v1598 = vsub.s32 0, %v1597
        %v1599 = vrot.slane %v1567, %v1598
        %v1608 = vadd.f32 %v1456, %v1571
        %v1609 = vadd.f32 %v1459, %v1571
        %v1610 = vadd.f32 %v1464, %v1575
        %v1611 = vadd.f32 %v1467, %v1575
        %v1612 = vadd.f32 %v1472, %v1579
        %v1613 = vadd.f32 %v1475, %v1579
        %v1614 = vadd.f32 %v1480, %v1583
        %v1615 = vadd.f32 %v1483, %v1583
        %v1616 = vadd.f32 %v1488, %v1587
        %v1617 = vadd.f32 %v1491, %v1587
        %v1618 = vadd.f32 %v1496, %v1591
        %v1619 = vadd.f32 %v1499, %v1591
        %v1620 = vadd.f32 %v1504, %v1595
        %v1621 = vadd.f32 %v1507, %v1595
        %v1622 = vadd.f32 %v1512, %v1599
        %v1623 = vadd.f32 %v1515, %v1599
        %v1624 = vmax.f32 %v1608, 0.0
        %v1625 = vmax.f32 %v1609, 0.0
        %v1626 = vmax.f32 %v1610, 0.0
        %v1627 = vmax.f32 %v1611, 0.0
        %v1628 = vmax.f32 %v1612, 0.0
        %v1629 = vmax.f32 %v1613, 0.0
        %v1630 = vmax.f32 %v1614, 0.0
        %v1631 = vmax.f32 %v1615, 0.0
        %v1632 = vmax.f32 %v1616, 0.0
        %v1633 = vmax.f32 %v1617, 0.0
        %v1634 = vmax.f32 %v1618, 0.0
        %v1635 = vmax.f32 %v1619, 0.0
        %v1636 = vmax.f32 %v1620, 0.0
        %v1637 = vmax.f32 %v1621, 0.0
        %v1638 = vmax.f32 %v1622, 0.0
        %v1639 = vmax.f32 %v1623, 0.0
        %v1640 = vpack.c.bf16 %v1625, %v1624
        %v1641 = vpack.c.bf16 %v1627, %v1626
        %v1642 = vpack.c.bf16 %v1629, %v1628
        %v1643 = vpack.c.bf16 %v1631, %v1630
        %v1644 = vpack.c.bf16 %v1633, %v1632
        %v1645 = vpack.c.bf16 %v1635, %v1634
        %v1646 = vpack.c.bf16 %v1637, %v1636
        %v1647 = vpack.c.bf16 %v1639, %v1638
        %1656 = vrot.lane.b32.xlu0 %v1640, 32
        %v1657 = vpop.permute.xlu0 %1656
        %1658 = vrot.lane.b32.xlu0 %v1641, 32
        %v1659 = vpop.permute.xlu0 %1658
        %1660 = vrot.lane.b32.xlu0 %v1642, 32
        %v1661 = vpop.permute.xlu0 %1660
        %1662 = vrot.lane.b32.xlu0 %v1643, 32
        %v1663 = vpop.permute.xlu0 %1662
        %1664 = vrot.lane.b32.xlu0 %v1644, 32
        %v1665 = vpop.permute.xlu0 %1664
        %1666 = vrot.lane.b32.xlu0 %v1645, 32
        %v1667 = vpop.permute.xlu0 %1666
        %1668 = vrot.lane.b32.xlu0 %v1646, 32
        %v1669 = vpop.permute.xlu0 %1668
        %1670 = vrot.lane.b32.xlu0 %v1647, 32
        %v1671 = vpop.permute.xlu0 %1670
        %v1674 = vsel %vm1176, %v1249, %v1657
        %v1677 = vsel %vm1176, %v1250, %v1659
        %v1680 = vsel %vm1176, %v1251, %v1661
        %v1683 = vsel %vm1176, %v1252, %v1663
        %v1686 = vsel %vm1176, %v1253, %v1665
        %v1689 = vsel %vm1176, %v1254, %v1667
        %v1692 = vsel %vm1176, %v1255, %v1669
        %v1695 = vsel %vm1176, %v1256, %v1671
        %v1696 = vld [vmem:[%s10] sm:$0xf]
        %v1697 = vld [vmem:[%s10 + $0x4] sm:$0xf]
        %v1698 = vld [vmem:[%s10 + $0x8] sm:$0xf]
        %v1699 = vld [vmem:[%s10 + $0xc] sm:$0xf]
        %v1700 = vld [vmem:[%s10 + $0x10] sm:$0xf]
        %v1701 = vld [vmem:[%s10 + $0x14] sm:$0xf]
        %v1702 = vld [vmem:[%s10 + $0x18] sm:$0xf]
        %v1703 = vld [vmem:[%s10 + $0x1c] sm:$0xf]
        %v1704 = vld [vmem:[%s11] sm:$0x1]
        %v1706 = vlaneseq
        %v1707 = vshrl.u32 %v1706, 7
        %v1708 = vsub.s32 0, %v1707
        %v1709 = vrot.slane %v1704, %v1708
        %v1719 = vunpack.c.l.b16 %v1696
        %v1720 = vunpack.c.l.b16 %v1697
        %v1721 = vunpack.c.l.b16 %v1698
        %v1722 = vunpack.c.l.b16 %v1699
        %v1723 = vunpack.c.l.b16 %v1700
        %v1724 = vunpack.c.l.b16 %v1701
        %v1725 = vunpack.c.l.b16 %v1702
        %v1726 = vunpack.c.l.b16 %v1703
        %v1727 = vpack.c.b16 %v1720, %v1719
        %v1728 = vpack.c.b16 %v1722, %v1721
        %v1729 = vpack.c.b16 %v1724, %v1723
        %v1730 = vpack.c.b16 %v1726, %v1725
        %v1735 = vsel %vm813, %v1674, 0
        %v1737 = vsel %vm813, %v1677, 0
        %v1739 = vsel %vm813, %v1680, 0
        %v1741 = vsel %vm813, %v1683, 0
        %v1743 = vsel %vm813, %v1686, 0
        %v1745 = vsel %vm813, %v1689, 0
        %v1747 = vsel %vm813, %v1692, 0
        %v1749 = vsel %vm813, %v1695, 0
        %1751 = vmatprep.subr.bf16.mxu0 0
        %1752 = vmatpush1.bf16.msra.mxu0 0
        %1753 = vmatprep.subr.bf16.mxu0 0
        %1754 = vmatpush1.bf16.msra.mxu0 0
        %1755 = vmatprep.subr.bf16.mxu0 0
        %1756 = vmatpush1.bf16.msra.mxu0 0
        %1757 = vmatprep.subr.bf16.mxu0 0
        %1758 = vmatpush1.bf16.msra.mxu0 0
        %1759 = vmatprep.subr.bf16.mxu0 0
        %1760 = vmatpush1.bf16.msra.mxu0 %v1730
        %1761 = vmatprep.subr.bf16.mxu0 0
        %1762 = vmatpush1.bf16.msra.mxu0 %v1729
        %1763 = vmatprep.subr.bf16.mxu0 0
        %1764 = vmatpush1.bf16.msra.mxu0 %v1728
        %1765 = vmatprep.subr.bf16.mxu0 0
        %1766 = vmatpush1.bf16.msra.mxu0 %v1727
        %1767 = vmatprep.subr.bf16.mxu0 0
        %1768 = vmatpush2.bf16.msra.mxu0 0
        %1769 = vmatprep.subr.bf16.mxu0 0
        %1770 = vmatpush2.bf16.msra.mxu0 0
        %1771 = vmatprep.subr.bf16.mxu0 0
        %1772 = vmatpush2.bf16.msra.mxu0 0
        %1773 = vmatprep.subr.bf16.mxu0 0
        %1774 = vmatpush2.bf16.msra.mxu0 0
        %1775 = vmatprep.subr.bf16.mxu0 0
        %1776 = vmatpush2.bf16.msra.mxu0 0
        %1777 = vmatprep.subr.bf16.mxu0 0
        %1778 = vmatpush2.bf16.msra.mxu0 0
        %1779 = vmatprep.subr.bf16.mxu0 0
        %1780 = vmatpush2.bf16.msra.mxu0 0
        %1781 = vmatprep.subr.bf16.mxu0 0
        %1782 = vmatpush2.bf16.msra.mxu0 0
        %1783 = vmatprep.mubr.bf16.mxu0 0
        %1784 = vmatmul.mubr.bf16.gmra.mxu0 %v1735
        %v1785 = vpop.f32.mrf.mxu0
        %v1786 = vadd.f32 %v1709, %v1785
        %v1787 = vpop.f32.mrf.mxu0
        %v1788 = vpop.f32.mrf.mxu0
        %v1789 = vadd.f32 %v1709, %v1788
        %v1790 = vpop.f32.mrf.mxu0
        %1791 = vmatprep.mubr.bf16.mxu0 0
        %1792 = vmatmul.mubr.bf16.gmra.mxu0 %v1737
        %v1793 = vpop.f32.mrf.mxu0
        %v1794 = vadd.f32 %v1709, %v1793
        %v1795 = vpop.f32.mrf.mxu0
        %v1796 = vpop.f32.mrf.mxu0
        %v1797 = vadd.f32 %v1709, %v1796
        %v1798 = vpop.f32.mrf.mxu0
        %1799 = vmatprep.mubr.bf16.mxu0 0
        %1800 = vmatmul.mubr.bf16.gmra.mxu0 %v1739
        %v1801 = vpop.f32.mrf.mxu0
        %v1802 = vadd.f32 %v1709, %v1801
        %v1803 = vpop.f32.mrf.mxu0
        %v1804 = vpop.f32.mrf.mxu0
        %v1805 = vadd.f32 %v1709, %v1804
        %v1806 = vpop.f32.mrf.mxu0
        %1807 = vmatprep.mubr.bf16.mxu0 0
        %1808 = vmatmul.mubr.bf16.gmra.mxu0 %v1741
        %v1809 = vpop.f32.mrf.mxu0
        %v1810 = vadd.f32 %v1709, %v1809
        %v1811 = vpop.f32.mrf.mxu0
        %v1812 = vpop.f32.mrf.mxu0
        %v1813 = vadd.f32 %v1709, %v1812
        %v1814 = vpop.f32.mrf.mxu0
        %1815 = vmatprep.mubr.bf16.mxu0 0
        %1816 = vmatmul.mubr.bf16.gmra.mxu0 %v1743
        %v1817 = vpop.f32.mrf.mxu0
        %v1818 = vadd.f32 %v1709, %v1817
        %v1819 = vpop.f32.mrf.mxu0
        %v1820 = vpop.f32.mrf.mxu0
        %v1821 = vadd.f32 %v1709, %v1820
        %v1822 = vpop.f32.mrf.mxu0
        %1823 = vmatprep.mubr.bf16.mxu0 0
        %1824 = vmatmul.mubr.bf16.gmra.mxu0 %v1745
        %v1825 = vpop.f32.mrf.mxu0
        %v1826 = vadd.f32 %v1709, %v1825
        %v1827 = vpop.f32.mrf.mxu0
        %v1828 = vpop.f32.mrf.mxu0
        %v1829 = vadd.f32 %v1709, %v1828
        %v1830 = vpop.f32.mrf.mxu0
        %1831 = vmatprep.mubr.bf16.mxu0 0
        %1832 = vmatmul.mubr.bf16.gmra.mxu0 %v1747
        %v1833 = vpop.f32.mrf.mxu0
        %v1834 = vadd.f32 %v1709, %v1833
        %v1835 = vpop.f32.mrf.mxu0
        %v1836 = vpop.f32.mrf.mxu0
        %v1837 = vadd.f32 %v1709, %v1836
        %v1838 = vpop.f32.mrf.mxu0
        %1839 = vmatprep.mubr.bf16.mxu0 0
        %1840 = vmatmul.mubr.bf16.gmra.mxu0 %v1749
        %v1841 = vpop.f32.mrf.mxu0
        %v1842 = vadd.f32 %v1709, %v1841
        %v1843 = vpop.f32.mrf.mxu0
        %v1844 = vpop.f32.mrf.mxu0
        %v1845 = vadd.f32 %v1709, %v1844
        %v1846 = vpop.f32.mrf.mxu0
        %1847 = vdwg.mxu0
        %v1849 = vcombine.high %v1370, %v1370
        %v1851 = vunpack.c.l.s4 1966171168
        %v1852 = vunpack.c.0.s8 %v1851
        %v1853 = vlaneseq
        %v1854 = vshrl.u32 %v1853, 7
        %v1855 = vsub.s32 %v1852, %v1854
        %v1856 = vrot.slane %v1370, %v1855
        %v1858 = vunpack.c.l.s4 1966171168
        %v1859 = vunpack.c.0.s8 %v1858
        %v1860 = vlaneseq
        %v1861 = vshrl.u32 %v1860, 7
        %v1862 = vsub.s32 %v1859, %v1861
        %v1863 = vrot.slane %v1849, %v1862
        %v1864 = vcombine.high %v1856, %v1856
        %v1865 = vcombine.high %v1863, %v1863
        %v1867 = vunpack.c.l.s4 1966171168
        %v1868 = vunpack.c.0.s8 %v1867
        %v1869 = vlaneseq
        %v1870 = vshrl.u32 %v1869, 7
        %v1871 = vsub.s32 %v1868, %v1870
        %v1872 = vrot.slane %v1856, %v1871
        %v1874 = vunpack.c.l.s4 1966171168
        %v1875 = vunpack.c.0.s8 %v1874
        %v1876 = vlaneseq
        %v1877 = vshrl.u32 %v1876, 7
        %v1878 = vsub.s32 %v1875, %v1877
        %v1879 = vrot.slane %v1863, %v1878
        %v1881 = vunpack.c.l.s4 1966171168
        %v1882 = vunpack.c.0.s8 %v1881
        %v1883 = vlaneseq
        %v1884 = vshrl.u32 %v1883, 7
        %v1885 = vsub.s32 %v1882, %v1884
        %v1886 = vrot.slane %v1864, %v1885
        %v1888 = vunpack.c.l.s4 1966171168
        %v1889 = vunpack.c.0.s8 %v1888
        %v1890 = vlaneseq
        %v1891 = vshrl.u32 %v1890, 7
        %v1892 = vsub.s32 %v1889, %v1891
        %v1893 = vrot.slane %v1865, %v1892
        %v1894 = vcombine.high %v1872, %v1872
        %v1895 = vcombine.high %v1879, %v1879
        %v1896 = vcombine.high %v1886, %v1886
        %v1897 = vcombine.high %v1893, %v1893
        %v1898 = vlaneseq
        %v1899 = vshrl.u32 %v1898, 7
        %v1900 = vsub.s32 0, %v1899
        %v1901 = vrot.slane %v1872, %v1900
        %v1902 = vlaneseq
        %v1903 = vshrl.u32 %v1902, 7
        %v1904 = vsub.s32 0, %v1903
        %v1905 = vrot.slane %v1886, %v1904
        %v1906 = vlaneseq
        %v1907 = vshrl.u32 %v1906, 7
        %v1908 = vsub.s32 0, %v1907
        %v1909 = vrot.slane %v1894, %v1908
        %v1910 = vlaneseq
        %v1911 = vshrl.u32 %v1910, 7
        %v1912 = vsub.s32 0, %v1911
        %v1913 = vrot.slane %v1896, %v1912
        %v1914 = vlaneseq
        %v1915 = vshrl.u32 %v1914, 7
        %v1916 = vsub.s32 0, %v1915
        %v1917 = vrot.slane %v1879, %v1916
        %v1918 = vlaneseq
        %v1919 = vshrl.u32 %v1918, 7
        %v1920 = vsub.s32 0, %v1919
        %v1921 = vrot.slane %v1893, %v1920
        %v1922 = vlaneseq
        %v1923 = vshrl.u32 %v1922, 7
        %v1924 = vsub.s32 0, %v1923
        %v1925 = vrot.slane %v1895, %v1924
        %v1926 = vlaneseq
        %v1927 = vshrl.u32 %v1926, 7
        %v1928 = vsub.s32 0, %v1927
        %v1929 = vrot.slane %v1897, %v1928
        %1930 = vrot.lane.b32.xlu0 %v1901, 96
        %v1931 = vpop.permute.xlu0 %1930
        %1932 = vrot.lane.b32.xlu0 %v1905, 96
        %v1933 = vpop.permute.xlu0 %1932
        %1934 = vrot.lane.b32.xlu0 %v1909, 96
        %v1935 = vpop.permute.xlu0 %1934
        %1936 = vrot.lane.b32.xlu0 %v1913, 96
        %v1937 = vpop.permute.xlu0 %1936
        %1938 = vrot.lane.b32.xlu0 %v1917, 96
        %v1939 = vpop.permute.xlu0 %1938
        %1940 = vrot.lane.b32.xlu0 %v1921, 96
        %v1941 = vpop.permute.xlu0 %1940
        %1942 = vrot.lane.b32.xlu0 %v1925, 96
        %v1943 = vpop.permute.xlu0 %1942
        %1944 = vrot.lane.b32.xlu0 %v1929, 96
        %v1945 = vpop.permute.xlu0 %1944
        %v1954 = vadd.f32 %v1786, %v1931
        %v1955 = vadd.f32 %v1789, %v1931
        %v1956 = vadd.f32 %v1794, %v1933
        %v1957 = vadd.f32 %v1797, %v1933
        %v1958 = vadd.f32 %v1802, %v1935
        %v1959 = vadd.f32 %v1805, %v1935
        %v1960 = vadd.f32 %v1810, %v1937
        %v1961 = vadd.f32 %v1813, %v1937
        %v1962 = vadd.f32 %v1818, %v1939
        %v1963 = vadd.f32 %v1821, %v1939
        %v1964 = vadd.f32 %v1826, %v1941
        %v1965 = vadd.f32 %v1829, %v1941
        %v1966 = vadd.f32 %v1834, %v1943
        %v1967 = vadd.f32 %v1837, %v1943
        %v1968 = vadd.f32 %v1842, %v1945
        %v1969 = vadd.f32 %v1845, %v1945
        %v1970 = vsel %vm1176, %v1954, -inf
        %v1971 = vsel %vm1176, %v1955, -inf
        %v1972 = vmax.f32 %v1970, %v1971
        %v1973 = vrot.slane %v1972, 4
        %v1974 = vmax.f32 %v1972, %v1973
        %v1975 = vrot.slane %v1974, 2
        %v1976 = vmax.f32 %v1974, %v1975
        %v1977 = vrot.slane %v1976, 1
        %v1978 = vmax.f32 %v1976, %v1977
        %v1979 = vsel %vm1176, %v1956, -inf
        %v1980 = vsel %vm1176, %v1957, -inf
        %v1981 = vmax.f32 %v1979, %v1980
        %v1982 = vrot.slane %v1981, 4
        %v1983 = vmax.f32 %v1981, %v1982
        %v1984 = vrot.slane %v1983, 2
        %v1985 = vmax.f32 %v1983, %v1984
        %v1986 = vrot.slane %v1985, 1
        %v1987 = vmax.f32 %v1985, %v1986
        %v1988 = vsel %vm1176, %v1958, -inf
        %v1989 = vsel %vm1176, %v1959, -inf
        %v1990 = vmax.f32 %v1988, %v1989
        %v1991 = vrot.slane %v1990, 4
        %v1992 = vmax.f32 %v1990, %v1991
        %v1993 = vrot.slane %v1992, 2
        %v1994 = vmax.f32 %v1992, %v1993
        %v1995 = vrot.slane %v1994, 1
        %v1996 = vmax.f32 %v1994, %v1995
        %v1997 = vsel %vm1176, %v1960, -inf
        %v1998 = vsel %vm1176, %v1961, -inf
        %v1999 = vmax.f32 %v1997, %v1998
        %v2000 = vrot.slane %v1999, 4
        %v2001 = vmax.f32 %v1999, %v2000
        %v2002 = vrot.slane %v2001, 2
        %v2003 = vmax.f32 %v2001, %v2002
        %v2004 = vrot.slane %v2003, 1
        %v2005 = vmax.f32 %v2003, %v2004
        %v2006 = vsel %vm1176, %v1962, -inf
        %v2007 = vsel %vm1176, %v1963, -inf
        %v2008 = vmax.f32 %v2006, %v2007
        %v2009 = vrot.slane %v2008, 4
        %v2010 = vmax.f32 %v2008, %v2009
        %v2011 = vrot.slane %v2010, 2
        %v2012 = vmax.f32 %v2010, %v2011
        %v2013 = vrot.slane %v2012, 1
        %v2014 = vmax.f32 %v2012, %v2013
        %v2015 = vsel %vm1176, %v1964, -inf
        %v2016 = vsel %vm1176, %v1965, -inf
        %v2017 = vmax.f32 %v2015, %v2016
        %v2018 = vrot.slane %v2017, 4
        %v2019 = vmax.f32 %v2017, %v2018
        %v2020 = vrot.slane %v2019, 2
        %v2021 = vmax.f32 %v2019, %v2020
        %v2022 = vrot.slane %v2021, 1
        %v2023 = vmax.f32 %v2021, %v2022
        %v2024 = vsel %vm1176, %v1966, -inf
        %v2025 = vsel %vm1176, %v1967, -inf
        %v2026 = vmax.f32 %v2024, %v2025
        %v2027 = vrot.slane %v2026, 4
        %v2028 = vmax.f32 %v2026, %v2027
        %v2029 = vrot.slane %v2028, 2
        %v2030 = vmax.f32 %v2028, %v2029
        %v2031 = vrot.slane %v2030, 1
        %v2032 = vmax.f32 %v2030, %v2031
        %v2033 = vsel %vm1176, %v1968, -inf
        %v2034 = vsel %vm1176, %v1969, -inf
        %v2035 = vmax.f32 %v2033, %v2034
        %v2036 = vrot.slane %v2035, 4
        %v2037 = vmax.f32 %v2035, %v2036
        %v2038 = vrot.slane %v2037, 2
        %v2039 = vmax.f32 %v2037, %v2038
        %v2040 = vrot.slane %v2039, 1
        %v2041 = vmax.f32 %v2039, %v2040
        %v2042 = vpack.c.bf16 %v1955, %v1954
        %v2043 = vpack.c.bf16 %v1957, %v1956
        %v2044 = vpack.c.bf16 %v1959, %v1958
        %v2045 = vpack.c.bf16 %v1961, %v1960
        %v2046 = vpack.c.bf16 %v1963, %v1962
        %v2047 = vpack.c.bf16 %v1965, %v1964
        %v2048 = vpack.c.bf16 %v1967, %v1966
        %v2049 = vpack.c.bf16 %v1969, %v1968
        %v2050 = vmax.bf16 %v2042, 0
        %v2051 = vmax.bf16 %v2043, 0
        %v2052 = vmax.bf16 %v2044, 0
        %v2053 = vmax.bf16 %v2045, 0
        %v2054 = vmax.bf16 %v2046, 0
        %v2055 = vmax.bf16 %v2047, 0
        %v2056 = vmax.bf16 %v2048, 0
        %v2057 = vmax.bf16 %v2049, 0
        %v2058 = vmax.f32 %v1978, 0.0
        %v2059 = vmax.f32 %v1987, 0.0
        %v2060 = vmax.f32 %v1996, 0.0
        %v2061 = vmax.f32 %v2005, 0.0
        %v2062 = vmax.f32 %v2014, 0.0
        %v2063 = vmax.f32 %v2023, 0.0
        %v2064 = vmax.f32 %v2032, 0.0
        %v2065 = vmax.f32 %v2041, 0.0
        %v2074 = vsel %vm1281, %v2059, %v2058
        %v2075 = vsel %vm1283, %v2060, %v2074
        %v2076 = vsel %vm1285, %v2061, %v2075
        %v2077 = vsel %vm1287, %v2062, %v2076
        %v2078 = vsel %vm1289, %v2063, %v2077
        %v2079 = vsel %vm1291, %v2064, %v2078
        %v2080 = vsel %vm1293, %v2065, %v2079
        %v2090 = vsel %vm1281, %v1987, %v1978
        %v2091 = vsel %vm1283, %v1996, %v2090
        %v2092 = vsel %vm1285, %v2005, %v2091
        %v2093 = vsel %vm1287, %v2014, %v2092
        %v2094 = vsel %vm1289, %v2023, %v2093
        %v2095 = vsel %vm1291, %v2032, %v2094
        %v2096 = vsel %vm1293, %v2041, %v2095
        %v2098 = vpack.c.bf16 %v2096, %v2080
        %s2099 = scalar_lea.vmem %s9, 16
        %v2100 = vld [vmem:[%s2099] sm:$0xf]
        %v2101 = vld [vmem:[%s2099 + $0x4] sm:$0xf]
        %v2102 = vld [vmem:[%s2099 + $0x8] sm:$0xf]
        %v2103 = vld [vmem:[%s2099 + $0xc] sm:$0xf]
        %v2108 = vunpack.c.l.b16 %v2100
        %v2109 = vunpack.c.l.b16 %v2101
        %v2110 = vunpack.c.l.b16 %v2102
        %v2111 = vunpack.c.l.b16 %v2103
        %v2112 = vpack.c.b16 %v2109, %v2108
        %v2113 = vpack.c.b16 %v2111, %v2110
        %v2117 = vsel %vm1176, %v2098, 0
        %2119 = vmatprep.subr.bf16.mxu0 0
        %2120 = vmatpush1.bf16.msra.mxu0 0
        %2121 = vmatprep.subr.bf16.mxu0 0
        %2122 = vmatpush1.bf16.msra.mxu0 0
        %2123 = vmatprep.subr.bf16.mxu0 0
        %2124 = vmatpush1.bf16.msra.mxu0 0
        %2125 = vmatprep.subr.bf16.mxu0 0
        %2126 = vmatpush1.bf16.msra.mxu0 0
        %2127 = vmatprep.subr.bf16.mxu0 0
        %2128 = vmatpush1.bf16.msra.mxu0 0
        %2129 = vmatprep.subr.bf16.mxu0 0
        %2130 = vmatpush1.bf16.msra.mxu0 0
        %2131 = vmatprep.subr.bf16.mxu0 0
        %2132 = vmatpush1.bf16.msra.mxu0 %v2113
        %2133 = vmatprep.subr.bf16.mxu0 0
        %2134 = vmatpush1.bf16.msra.mxu0 %v2112
        %2135 = vmatprep.subr.bf16.mxu0 0
        %2136 = vmatpush2.bf16.msra.mxu0 0
        %2137 = vmatprep.subr.bf16.mxu0 0
        %2138 = vmatpush2.bf16.msra.mxu0 0
        %2139 = vmatprep.subr.bf16.mxu0 0
        %2140 = vmatpush2.bf16.msra.mxu0 0
        %2141 = vmatprep.subr.bf16.mxu0 0
        %2142 = vmatpush2.bf16.msra.mxu0 0
        %2143 = vmatprep.subr.bf16.mxu0 0
        %2144 = vmatpush2.bf16.msra.mxu0 0
        %2145 = vmatprep.subr.bf16.mxu0 0
        %2146 = vmatpush2.bf16.msra.mxu0 0
        %2147 = vmatprep.subr.bf16.mxu0 0
        %2148 = vmatpush2.bf16.msra.mxu0 0
        %2149 = vmatprep.subr.bf16.mxu0 0
        %2150 = vmatpush2.bf16.msra.mxu0 0
        %2151 = vmatprep.mubr.bf16.mxu0 0
        %2152 = vmatmul.mubr.bf16.gmra.mxu0 %v2117
        %v2153 = vpop.f32.mrf.mxu0
        %v2154 = vadd.f32 0.0, %v2153
        %v2155 = vpop.f32.mrf.mxu0
        %v2156 = vpop.f32.mrf.mxu0
        %v2157 = vadd.f32 0.0, %v2156
        %v2158 = vpop.f32.mrf.mxu0
        %2159 = vdwg.mxu0
        %s2160 = scalar_lea.vmem %s8, 1
        %v2161 = vld [vmem:[%s2160] sm:$0x1]
        %v2163 = vlaneseq
        %v2164 = vshrl.u32 %v2163, 7
        %v2165 = vsub.s32 0, %v2164
        %v2166 = vrot.slane %v2161, %v2165
        %v2168 = vadd.f32 %v2154, %v2166
        %s2169 = scalar_lea.vmem %s7, 16
        %v2170 = vld [vmem:[%s2169] sm:$0xf]
        %v2171 = vld [vmem:[%s2169 + $0x4] sm:$0xf]
        %v2172 = vld [vmem:[%s2169 + $0x8] sm:$0xf]
        %v2173 = vld [vmem:[%s2169 + $0xc] sm:$0xf]
        %v2178 = vunpack.c.l.b16 %v2170
        %v2179 = vunpack.c.l.b16 %v2171
        %v2180 = vunpack.c.l.b16 %v2172
        %v2181 = vunpack.c.l.b16 %v2173
        %v2182 = vpack.c.b16 %v2179, %v2178
        %v2183 = vpack.c.b16 %v2181, %v2180
        %v2187 = vsel %vm1176, %v2050, 0
        %v2190 = vsel %vm1176, %v2051, 0
        %v2193 = vsel %vm1176, %v2052, 0
        %v2196 = vsel %vm1176, %v2053, 0
        %v2199 = vsel %vm1176, %v2054, 0
        %v2202 = vsel %vm1176, %v2055, 0
        %v2205 = vsel %vm1176, %v2056, 0
        %v2208 = vsel %vm1176, %v2057, 0
        %2210 = vmatprep.subr.bf16.mxu0 0
        %2211 = vmatpush1.bf16.msra.mxu0 0
        %2212 = vmatprep.subr.bf16.mxu0 0
        %2213 = vmatpush1.bf16.msra.mxu0 0
        %2214 = vmatprep.subr.bf16.mxu0 0
        %2215 = vmatpush1.bf16.msra.mxu0 0
        %2216 = vmatprep.subr.bf16.mxu0 0
        %2217 = vmatpush1.bf16.msra.mxu0 0
        %2218 = vmatprep.subr.bf16.mxu0 0
        %2219 = vmatpush1.bf16.msra.mxu0 0
        %2220 = vmatprep.subr.bf16.mxu0 0
        %2221 = vmatpush1.bf16.msra.mxu0 0
        %2222 = vmatprep.subr.bf16.mxu0 0
        %2223 = vmatpush1.bf16.msra.mxu0 %v2183
        %2224 = vmatprep.subr.bf16.mxu0 0
        %2225 = vmatpush1.bf16.msra.mxu0 %v2182
        %2226 = vmatprep.subr.bf16.mxu0 0
        %2227 = vmatpush2.bf16.msra.mxu0 0
        %2228 = vmatprep.subr.bf16.mxu0 0
        %2229 = vmatpush2.bf16.msra.mxu0 0
        %2230 = vmatprep.subr.bf16.mxu0 0
        %2231 = vmatpush2.bf16.msra.mxu0 0
        %2232 = vmatprep.subr.bf16.mxu0 0
        %2233 = vmatpush2.bf16.msra.mxu0 0
        %2234 = vmatprep.subr.bf16.mxu0 0
        %2235 = vmatpush2.bf16.msra.mxu0 0
        %2236 = vmatprep.subr.bf16.mxu0 0
        %2237 = vmatpush2.bf16.msra.mxu0 0
        %2238 = vmatprep.subr.bf16.mxu0 0
        %2239 = vmatpush2.bf16.msra.mxu0 0
        %2240 = vmatprep.subr.bf16.mxu0 0
        %2241 = vmatpush2.bf16.msra.mxu0 0
        %2242 = vmatprep.mubr.bf16.mxu0 0
        %2243 = vmatmul.mubr.bf16.gmra.mxu0 %v2187
        %v2244 = vpop.f32.mrf.mxu0
        %v2245 = vadd.f32 0.0, %v2244
        %v2246 = vpop.f32.mrf.mxu0
        %v2247 = vpop.f32.mrf.mxu0
        %v2248 = vadd.f32 0.0, %v2247
        %v2249 = vpop.f32.mrf.mxu0
        %2250 = vmatprep.mubr.bf16.mxu0 0
        %2251 = vmatmul.mubr.bf16.gmra.mxu0 %v2190
        %v2252 = vpop.f32.mrf.mxu0
        %v2253 = vadd.f32 0.0, %v2252
        %v2254 = vpop.f32.mrf.mxu0
        %v2255 = vpop.f32.mrf.mxu0
        %v2256 = vadd.f32 0.0, %v2255
        %v2257 = vpop.f32.mrf.mxu0
        %2258 = vmatprep.mubr.bf16.mxu0 0
        %2259 = vmatmul.mubr.bf16.gmra.mxu0 %v2193
        %v2260 = vpop.f32.mrf.mxu0
        %v2261 = vadd.f32 0.0, %v2260
        %v2262 = vpop.f32.mrf.mxu0
        %v2263 = vpop.f32.mrf.mxu0
        %v2264 = vadd.f32 0.0, %v2263
        %v2265 = vpop.f32.mrf.mxu0
        %2266 = vmatprep.mubr.bf16.mxu0 0
        %2267 = vmatmul.mubr.bf16.gmra.mxu0 %v2196
        %v2268 = vpop.f32.mrf.mxu0
        %v2269 = vadd.f32 0.0, %v2268
        %v2270 = vpop.f32.mrf.mxu0
        %v2271 = vpop.f32.mrf.mxu0
        %v2272 = vadd.f32 0.0, %v2271
        %v2273 = vpop.f32.mrf.mxu0
        %2274 = vmatprep.mubr.bf16.mxu0 0
        %2275 = vmatmul.mubr.bf16.gmra.mxu0 %v2199
        %v2276 = vpop.f32.mrf.mxu0
        %v2277 = vadd.f32 0.0, %v2276
        %v2278 = vpop.f32.mrf.mxu0
        %v2279 = vpop.f32.mrf.mxu0
        %v2280 = vadd.f32 0.0, %v2279
        %v2281 = vpop.f32.mrf.mxu0
        %2282 = vmatprep.mubr.bf16.mxu0 0
        %2283 = vmatmul.mubr.bf16.gmra.mxu0 %v2202
        %v2284 = vpop.f32.mrf.mxu0
        %v2285 = vadd.f32 0.0, %v2284
        %v2286 = vpop.f32.mrf.mxu0
        %v2287 = vpop.f32.mrf.mxu0
        %v2288 = vadd.f32 0.0, %v2287
        %v2289 = vpop.f32.mrf.mxu0
        %2290 = vmatprep.mubr.bf16.mxu0 0
        %2291 = vmatmul.mubr.bf16.gmra.mxu0 %v2205
        %v2292 = vpop.f32.mrf.mxu0
        %v2293 = vadd.f32 0.0, %v2292
        %v2294 = vpop.f32.mrf.mxu0
        %v2295 = vpop.f32.mrf.mxu0
        %v2296 = vadd.f32 0.0, %v2295
        %v2297 = vpop.f32.mrf.mxu0
        %2298 = vmatprep.mubr.bf16.mxu0 0
        %2299 = vmatmul.mubr.bf16.gmra.mxu0 %v2208
        %v2300 = vpop.f32.mrf.mxu0
        %v2301 = vadd.f32 0.0, %v2300
        %v2302 = vpop.f32.mrf.mxu0
        %v2303 = vpop.f32.mrf.mxu0
        %v2304 = vadd.f32 0.0, %v2303
        %v2305 = vpop.f32.mrf.mxu0
        %2306 = vdwg.mxu0
        %v2308 = vcombine.high %v2168, %v2168
        %v2310 = vunpack.c.l.s4 1966171168
        %v2311 = vunpack.c.0.s8 %v2310
        %v2312 = vlaneseq
        %v2313 = vshrl.u32 %v2312, 7
        %v2314 = vsub.s32 %v2311, %v2313
        %v2315 = vrot.slane %v2168, %v2314
        %v2317 = vunpack.c.l.s4 1966171168
        %v2318 = vunpack.c.0.s8 %v2317
        %v2319 = vlaneseq
        %v2320 = vshrl.u32 %v2319, 7
        %v2321 = vsub.s32 %v2318, %v2320
        %v2322 = vrot.slane %v2308, %v2321
        %v2323 = vcombine.high %v2315, %v2315
        %v2324 = vcombine.high %v2322, %v2322
        %v2326 = vunpack.c.l.s4 1966171168
        %v2327 = vunpack.c.0.s8 %v2326
        %v2328 = vlaneseq
        %v2329 = vshrl.u32 %v2328, 7
        %v2330 = vsub.s32 %v2327, %v2329
        %v2331 = vrot.slane %v2315, %v2330
        %v2333 = vunpack.c.l.s4 1966171168
        %v2334 = vunpack.c.0.s8 %v2333
        %v2335 = vlaneseq
        %v2336 = vshrl.u32 %v2335, 7
        %v2337 = vsub.s32 %v2334, %v2336
        %v2338 = vrot.slane %v2322, %v2337
        %v2340 = vunpack.c.l.s4 1966171168
        %v2341 = vunpack.c.0.s8 %v2340
        %v2342 = vlaneseq
        %v2343 = vshrl.u32 %v2342, 7
        %v2344 = vsub.s32 %v2341, %v2343
        %v2345 = vrot.slane %v2323, %v2344
        %v2347 = vunpack.c.l.s4 1966171168
        %v2348 = vunpack.c.0.s8 %v2347
        %v2349 = vlaneseq
        %v2350 = vshrl.u32 %v2349, 7
        %v2351 = vsub.s32 %v2348, %v2350
        %v2352 = vrot.slane %v2324, %v2351
        %v2353 = vcombine.high %v2331, %v2331
        %v2354 = vcombine.high %v2338, %v2338
        %v2355 = vcombine.high %v2345, %v2345
        %v2356 = vcombine.high %v2352, %v2352
        %v2357 = vlaneseq
        %v2358 = vshrl.u32 %v2357, 7
        %v2359 = vsub.s32 0, %v2358
        %v2360 = vrot.slane %v2331, %v2359
        %v2361 = vlaneseq
        %v2362 = vshrl.u32 %v2361, 7
        %v2363 = vsub.s32 0, %v2362
        %v2364 = vrot.slane %v2345, %v2363
        %v2365 = vlaneseq
        %v2366 = vshrl.u32 %v2365, 7
        %v2367 = vsub.s32 0, %v2366
        %v2368 = vrot.slane %v2353, %v2367
        %v2369 = vlaneseq
        %v2370 = vshrl.u32 %v2369, 7
        %v2371 = vsub.s32 0, %v2370
        %v2372 = vrot.slane %v2355, %v2371
        %v2373 = vlaneseq
        %v2374 = vshrl.u32 %v2373, 7
        %v2375 = vsub.s32 0, %v2374
        %v2376 = vrot.slane %v2338, %v2375
        %v2377 = vlaneseq
        %v2378 = vshrl.u32 %v2377, 7
        %v2379 = vsub.s32 0, %v2378
        %v2380 = vrot.slane %v2352, %v2379
        %v2381 = vlaneseq
        %v2382 = vshrl.u32 %v2381, 7
        %v2383 = vsub.s32 0, %v2382
        %v2384 = vrot.slane %v2354, %v2383
        %v2385 = vlaneseq
        %v2386 = vshrl.u32 %v2385, 7
        %v2387 = vsub.s32 0, %v2386
        %v2388 = vrot.slane %v2356, %v2387
        %v2397 = vadd.f32 %v2245, %v2360
        %v2398 = vadd.f32 %v2248, %v2360
        %v2399 = vadd.f32 %v2253, %v2364
        %v2400 = vadd.f32 %v2256, %v2364
        %v2401 = vadd.f32 %v2261, %v2368
        %v2402 = vadd.f32 %v2264, %v2368
        %v2403 = vadd.f32 %v2269, %v2372
        %v2404 = vadd.f32 %v2272, %v2372
        %v2405 = vadd.f32 %v2277, %v2376
        %v2406 = vadd.f32 %v2280, %v2376
        %v2407 = vadd.f32 %v2285, %v2380
        %v2408 = vadd.f32 %v2288, %v2380
        %v2409 = vadd.f32 %v2293, %v2384
        %v2410 = vadd.f32 %v2296, %v2384
        %v2411 = vadd.f32 %v2301, %v2388
        %v2412 = vadd.f32 %v2304, %v2388
        %v2413 = vmax.f32 %v2397, 0.0
        %v2414 = vmax.f32 %v2398, 0.0
        %v2415 = vmax.f32 %v2399, 0.0
        %v2416 = vmax.f32 %v2400, 0.0
        %v2417 = vmax.f32 %v2401, 0.0
        %v2418 = vmax.f32 %v2402, 0.0
        %v2419 = vmax.f32 %v2403, 0.0
        %v2420 = vmax.f32 %v2404, 0.0
        %v2421 = vmax.f32 %v2405, 0.0
        %v2422 = vmax.f32 %v2406, 0.0
        %v2423 = vmax.f32 %v2407, 0.0
        %v2424 = vmax.f32 %v2408, 0.0
        %v2425 = vmax.f32 %v2409, 0.0
        %v2426 = vmax.f32 %v2410, 0.0
        %v2427 = vmax.f32 %v2411, 0.0
        %v2428 = vmax.f32 %v2412, 0.0
        %v2429 = vpack.c.bf16 %v2414, %v2413
        %v2430 = vpack.c.bf16 %v2416, %v2415
        %v2431 = vpack.c.bf16 %v2418, %v2417
        %v2432 = vpack.c.bf16 %v2420, %v2419
        %v2433 = vpack.c.bf16 %v2422, %v2421
        %v2434 = vpack.c.bf16 %v2424, %v2423
        %v2435 = vpack.c.bf16 %v2426, %v2425
        %v2436 = vpack.c.bf16 %v2428, %v2427
        %2445 = vrot.lane.b32.xlu0 %v2429, 32
        %v2446 = vpop.permute.xlu0 %2445
        %2447 = vrot.lane.b32.xlu0 %v2430, 32
        %v2448 = vpop.permute.xlu0 %2447
        %2449 = vrot.lane.b32.xlu0 %v2431, 32
        %v2450 = vpop.permute.xlu0 %2449
        %2451 = vrot.lane.b32.xlu0 %v2432, 32
        %v2452 = vpop.permute.xlu0 %2451
        %2453 = vrot.lane.b32.xlu0 %v2433, 32
        %v2454 = vpop.permute.xlu0 %2453
        %2455 = vrot.lane.b32.xlu0 %v2434, 32
        %v2456 = vpop.permute.xlu0 %2455
        %2457 = vrot.lane.b32.xlu0 %v2435, 32
        %v2458 = vpop.permute.xlu0 %2457
        %2459 = vrot.lane.b32.xlu0 %v2436, 32
        %v2460 = vpop.permute.xlu0 %2459
        %v2463 = vsel %vm1176, %v2042, %v2446
        %v2466 = vsel %vm1176, %v2043, %v2448
        %v2469 = vsel %vm1176, %v2044, %v2450
        %v2472 = vsel %vm1176, %v2045, %v2452
        %v2475 = vsel %vm1176, %v2046, %v2454
        %v2478 = vsel %vm1176, %v2047, %v2456
        %v2481 = vsel %vm1176, %v2048, %v2458
        %v2484 = vsel %vm1176, %v2049, %v2460
        %s2485 = scalar_lea.vmem %s10, 32
        %v2486 = vld [vmem:[%s2485] sm:$0xf]
        %v2487 = vld [vmem:[%s2485 + $0x4] sm:$0xf]
        %v2488 = vld [vmem:[%s2485 + $0x8] sm:$0xf]
        %v2489 = vld [vmem:[%s2485 + $0xc] sm:$0xf]
        %v2490 = vld [vmem:[%s2485 + $0x10] sm:$0xf]
        %v2491 = vld [vmem:[%s2485 + $0x14] sm:$0xf]
        %v2492 = vld [vmem:[%s2485 + $0x18] sm:$0xf]
        %v2493 = vld [vmem:[%s2485 + $0x1c] sm:$0xf]
        %s2494 = scalar_lea.vmem %s11, 1
        %v2495 = vld [vmem:[%s2494] sm:$0x1]
        %v2497 = vlaneseq
        %v2498 = vshrl.u32 %v2497, 7
        %v2499 = vsub.s32 0, %v2498
        %v2500 = vrot.slane %v2495, %v2499
        %v2510 = vunpack.c.l.b16 %v2486
        %v2511 = vunpack.c.l.b16 %v2487
        %v2512 = vunpack.c.l.b16 %v2488
        %v2513 = vunpack.c.l.b16 %v2489
        %v2514 = vunpack.c.l.b16 %v2490
        %v2515 = vunpack.c.l.b16 %v2491
        %v2516 = vunpack.c.l.b16 %v2492
        %v2517 = vunpack.c.l.b16 %v2493
        %v2518 = vpack.c.b16 %v2511, %v2510
        %v2519 = vpack.c.b16 %v2513, %v2512
        %v2520 = vpack.c.b16 %v2515, %v2514
        %v2521 = vpack.c.b16 %v2517, %v2516
        %v2526 = vsel %vm813, %v2463, 0
        %v2528 = vsel %vm813, %v2466, 0
        %v2530 = vsel %vm813, %v2469, 0
        %v2532 = vsel %vm813, %v2472, 0
        %v2534 = vsel %vm813, %v2475, 0
        %v2536 = vsel %vm813, %v2478, 0
        %v2538 = vsel %vm813, %v2481, 0
        %v2540 = vsel %vm813, %v2484, 0
        %2542 = vmatprep.subr.bf16.mxu0 0
        %2543 = vmatpush1.bf16.msra.mxu0 0
        %2544 = vmatprep.subr.bf16.mxu0 0
        %2545 = vmatpush1.bf16.msra.mxu0 0
        %2546 = vmatprep.subr.bf16.mxu0 0
        %2547 = vmatpush1.bf16.msra.mxu0 0
        %2548 = vmatprep.subr.bf16.mxu0 0
        %2549 = vmatpush1.bf16.msra.mxu0 0
        %2550 = vmatprep.subr.bf16.mxu0 0
        %2551 = vmatpush1.bf16.msra.mxu0 %v2521
        %2552 = vmatprep.subr.bf16.mxu0 0
        %2553 = vmatpush1.bf16.msra.mxu0 %v2520
        %2554 = vmatprep.subr.bf16.mxu0 0
        %2555 = vmatpush1.bf16.msra.mxu0 %v2519
        %2556 = vmatprep.subr.bf16.mxu0 0
        %2557 = vmatpush1.bf16.msra.mxu0 %v2518
        %2558 = vmatprep.subr.bf16.mxu0 0
        %2559 = vmatpush2.bf16.msra.mxu0 0
        %2560 = vmatprep.subr.bf16.mxu0 0
        %2561 = vmatpush2.bf16.msra.mxu0 0
        %2562 = vmatprep.subr.bf16.mxu0 0
        %2563 = vmatpush2.bf16.msra.mxu0 0
        %2564 = vmatprep.subr.bf16.mxu0 0
        %2565 = vmatpush2.bf16.msra.mxu0 0
        %2566 = vmatprep.subr.bf16.mxu0 0
        %2567 = vmatpush2.bf16.msra.mxu0 0
        %2568 = vmatprep.subr.bf16.mxu0 0
        %2569 = vmatpush2.bf16.msra.mxu0 0
        %2570 = vmatprep.subr.bf16.mxu0 0
        %2571 = vmatpush2.bf16.msra.mxu0 0
        %2572 = vmatprep.subr.bf16.mxu0 0
        %2573 = vmatpush2.bf16.msra.mxu0 0
        %2574 = vmatprep.mubr.bf16.mxu0 0
        %2575 = vmatmul.mubr.bf16.gmra.mxu0 %v2526
        %v2576 = vpop.f32.mrf.mxu0
        %v2577 = vadd.f32 %v2500, %v2576
        %v2578 = vpop.f32.mrf.mxu0
        %v2579 = vpop.f32.mrf.mxu0
        %v2580 = vadd.f32 %v2500, %v2579
        %v2581 = vpop.f32.mrf.mxu0
        %2582 = vmatprep.mubr.bf16.mxu0 0
        %2583 = vmatmul.mubr.bf16.gmra.mxu0 %v2528
        %v2584 = vpop.f32.mrf.mxu0
        %v2585 = vadd.f32 %v2500, %v2584
        %v2586 = vpop.f32.mrf.mxu0
        %v2587 = vpop.f32.mrf.mxu0
        %v2588 = vadd.f32 %v2500, %v2587
        %v2589 = vpop.f32.mrf.mxu0
        %2590 = vmatprep.mubr.bf16.mxu0 0
        %2591 = vmatmul.mubr.bf16.gmra.mxu0 %v2530
        %v2592 = vpop.f32.mrf.mxu0
        %v2593 = vadd.f32 %v2500, %v2592
        %v2594 = vpop.f32.mrf.mxu0
        %v2595 = vpop.f32.mrf.mxu0
        %v2596 = vadd.f32 %v2500, %v2595
        %v2597 = vpop.f32.mrf.mxu0
        %2598 = vmatprep.mubr.bf16.mxu0 0
        %2599 = vmatmul.mubr.bf16.gmra.mxu0 %v2532
        %v2600 = vpop.f32.mrf.mxu0
        %v2601 = vadd.f32 %v2500, %v2600
        %v2602 = vpop.f32.mrf.mxu0
        %v2603 = vpop.f32.mrf.mxu0
        %v2604 = vadd.f32 %v2500, %v2603
        %v2605 = vpop.f32.mrf.mxu0
        %2606 = vmatprep.mubr.bf16.mxu0 0
        %2607 = vmatmul.mubr.bf16.gmra.mxu0 %v2534
        %v2608 = vpop.f32.mrf.mxu0
        %v2609 = vadd.f32 %v2500, %v2608
        %v2610 = vpop.f32.mrf.mxu0
        %v2611 = vpop.f32.mrf.mxu0
        %v2612 = vadd.f32 %v2500, %v2611
        %v2613 = vpop.f32.mrf.mxu0
        %2614 = vmatprep.mubr.bf16.mxu0 0
        %2615 = vmatmul.mubr.bf16.gmra.mxu0 %v2536
        %v2616 = vpop.f32.mrf.mxu0
        %v2617 = vadd.f32 %v2500, %v2616
        %v2618 = vpop.f32.mrf.mxu0
        %v2619 = vpop.f32.mrf.mxu0
        %v2620 = vadd.f32 %v2500, %v2619
        %v2621 = vpop.f32.mrf.mxu0
        %2622 = vmatprep.mubr.bf16.mxu0 0
        %2623 = vmatmul.mubr.bf16.gmra.mxu0 %v2538
        %v2624 = vpop.f32.mrf.mxu0
        %v2625 = vadd.f32 %v2500, %v2624
        %v2626 = vpop.f32.mrf.mxu0
        %v2627 = vpop.f32.mrf.mxu0
        %v2628 = vadd.f32 %v2500, %v2627
        %v2629 = vpop.f32.mrf.mxu0
        %2630 = vmatprep.mubr.bf16.mxu0 0
        %2631 = vmatmul.mubr.bf16.gmra.mxu0 %v2540
        %v2632 = vpop.f32.mrf.mxu0
        %v2633 = vadd.f32 %v2500, %v2632
        %v2634 = vpop.f32.mrf.mxu0
        %v2635 = vpop.f32.mrf.mxu0
        %v2636 = vadd.f32 %v2500, %v2635
        %v2637 = vpop.f32.mrf.mxu0
        %2638 = vdwg.mxu0
        %v2640 = vcombine.high %v2157, %v2157
        %v2642 = vunpack.c.l.s4 1966171168
        %v2643 = vunpack.c.0.s8 %v2642
        %v2644 = vlaneseq
        %v2645 = vshrl.u32 %v2644, 7
        %v2646 = vsub.s32 %v2643, %v2645
        %v2647 = vrot.slane %v2157, %v2646
        %v2649 = vunpack.c.l.s4 1966171168
        %v2650 = vunpack.c.0.s8 %v2649
        %v2651 = vlaneseq
        %v2652 = vshrl.u32 %v2651, 7
        %v2653 = vsub.s32 %v2650, %v2652
        %v2654 = vrot.slane %v2640, %v2653
        %v2655 = vcombine.high %v2647, %v2647
        %v2656 = vcombine.high %v2654, %v2654
        %v2658 = vunpack.c.l.s4 1966171168
        %v2659 = vunpack.c.0.s8 %v2658
        %v2660 = vlaneseq
        %v2661 = vshrl.u32 %v2660, 7
        %v2662 = vsub.s32 %v2659, %v2661
        %v2663 = vrot.slane %v2647, %v2662
        %v2665 = vunpack.c.l.s4 1966171168
        %v2666 = vunpack.c.0.s8 %v2665
        %v2667 = vlaneseq
        %v2668 = vshrl.u32 %v2667, 7
        %v2669 = vsub.s32 %v2666, %v2668
        %v2670 = vrot.slane %v2654, %v2669
        %v2672 = vunpack.c.l.s4 1966171168
        %v2673 = vunpack.c.0.s8 %v2672
        %v2674 = vlaneseq
        %v2675 = vshrl.u32 %v2674, 7
        %v2676 = vsub.s32 %v2673, %v2675
        %v2677 = vrot.slane %v2655, %v2676
        %v2679 = vunpack.c.l.s4 1966171168
        %v2680 = vunpack.c.0.s8 %v2679
        %v2681 = vlaneseq
        %v2682 = vshrl.u32 %v2681, 7
        %v2683 = vsub.s32 %v2680, %v2682
        %v2684 = vrot.slane %v2656, %v2683
        %v2685 = vcombine.high %v2663, %v2663
        %v2686 = vcombine.high %v2670, %v2670
        %v2687 = vcombine.high %v2677, %v2677
        %v2688 = vcombine.high %v2684, %v2684
        %v2689 = vlaneseq
        %v2690 = vshrl.u32 %v2689, 7
        %v2691 = vsub.s32 0, %v2690
        %v2692 = vrot.slane %v2663, %v2691
        %v2693 = vlaneseq
        %v2694 = vshrl.u32 %v2693, 7
        %v2695 = vsub.s32 0, %v2694
        %v2696 = vrot.slane %v2677, %v2695
        %v2697 = vlaneseq
        %v2698 = vshrl.u32 %v2697, 7
        %v2699 = vsub.s32 0, %v2698
        %v2700 = vrot.slane %v2685, %v2699
        %v2701 = vlaneseq
        %v2702 = vshrl.u32 %v2701, 7
        %v2703 = vsub.s32 0, %v2702
        %v2704 = vrot.slane %v2687, %v2703
        %v2705 = vlaneseq
        %v2706 = vshrl.u32 %v2705, 7
        %v2707 = vsub.s32 0, %v2706
        %v2708 = vrot.slane %v2670, %v2707
        %v2709 = vlaneseq
        %v2710 = vshrl.u32 %v2709, 7
        %v2711 = vsub.s32 0, %v2710
        %v2712 = vrot.slane %v2684, %v2711
        %v2713 = vlaneseq
        %v2714 = vshrl.u32 %v2713, 7
        %v2715 = vsub.s32 0, %v2714
        %v2716 = vrot.slane %v2686, %v2715
        %v2717 = vlaneseq
        %v2718 = vshrl.u32 %v2717, 7
        %v2719 = vsub.s32 0, %v2718
        %v2720 = vrot.slane %v2688, %v2719
        %2721 = vrot.lane.b32.xlu0 %v2692, 96
        %v2722 = vpop.permute.xlu0 %2721
        %2723 = vrot.lane.b32.xlu0 %v2696, 96
        %v2724 = vpop.permute.xlu0 %2723
        %2725 = vrot.lane.b32.xlu0 %v2700, 96
        %v2726 = vpop.permute.xlu0 %2725
        %2727 = vrot.lane.b32.xlu0 %v2704, 96
        %v2728 = vpop.permute.xlu0 %2727
        %2729 = vrot.lane.b32.xlu0 %v2708, 96
        %v2730 = vpop.permute.xlu0 %2729
        %2731 = vrot.lane.b32.xlu0 %v2712, 96
        %v2732 = vpop.permute.xlu0 %2731
        %2733 = vrot.lane.b32.xlu0 %v2716, 96
        %v2734 = vpop.permute.xlu0 %2733
        %2735 = vrot.lane.b32.xlu0 %v2720, 96
        %v2736 = vpop.permute.xlu0 %2735
        %v2745 = vadd.f32 %v2577, %v2722
        %v2746 = vadd.f32 %v2580, %v2722
        %v2747 = vadd.f32 %v2585, %v2724
        %v2748 = vadd.f32 %v2588, %v2724
        %v2749 = vadd.f32 %v2593, %v2726
        %v2750 = vadd.f32 %v2596, %v2726
        %v2751 = vadd.f32 %v2601, %v2728
        %v2752 = vadd.f32 %v2604, %v2728
        %v2753 = vadd.f32 %v2609, %v2730
        %v2754 = vadd.f32 %v2612, %v2730
        %v2755 = vadd.f32 %v2617, %v2732
        %v2756 = vadd.f32 %v2620, %v2732
        %v2757 = vadd.f32 %v2625, %v2734
        %v2758 = vadd.f32 %v2628, %v2734
        %v2759 = vadd.f32 %v2633, %v2736
        %v2760 = vadd.f32 %v2636, %v2736
        %v2761 = vsel %vm1176, %v2745, -inf
        %v2762 = vsel %vm1176, %v2746, -inf
        %v2763 = vmax.f32 %v2761, %v2762
        %v2764 = vrot.slane %v2763, 4
        %v2765 = vmax.f32 %v2763, %v2764
        %v2766 = vrot.slane %v2765, 2
        %v2767 = vmax.f32 %v2765, %v2766
        %v2768 = vrot.slane %v2767, 1
        %v2769 = vmax.f32 %v2767, %v2768
        %v2770 = vsel %vm1176, %v2747, -inf
        %v2771 = vsel %vm1176, %v2748, -inf
        %v2772 = vmax.f32 %v2770, %v2771
        %v2773 = vrot.slane %v2772, 4
        %v2774 = vmax.f32 %v2772, %v2773
        %v2775 = vrot.slane %v2774, 2
        %v2776 = vmax.f32 %v2774, %v2775
        %v2777 = vrot.slane %v2776, 1
        %v2778 = vmax.f32 %v2776, %v2777
        %v2779 = vsel %vm1176, %v2749, -inf
        %v2780 = vsel %vm1176, %v2750, -inf
        %v2781 = vmax.f32 %v2779, %v2780
        %v2782 = vrot.slane %v2781, 4
        %v2783 = vmax.f32 %v2781, %v2782
        %v2784 = vrot.slane %v2783, 2
        %v2785 = vmax.f32 %v2783, %v2784
        %v2786 = vrot.slane %v2785, 1
        %v2787 = vmax.f32 %v2785, %v2786
        %v2788 = vsel %vm1176, %v2751, -inf
        %v2789 = vsel %vm1176, %v2752, -inf
        %v2790 = vmax.f32 %v2788, %v2789
        %v2791 = vrot.slane %v2790, 4
        %v2792 = vmax.f32 %v2790, %v2791
        %v2793 = vrot.slane %v2792, 2
        %v2794 = vmax.f32 %v2792, %v2793
        %v2795 = vrot.slane %v2794, 1
        %v2796 = vmax.f32 %v2794, %v2795
        %v2797 = vsel %vm1176, %v2753, -inf
        %v2798 = vsel %vm1176, %v2754, -inf
        %v2799 = vmax.f32 %v2797, %v2798
        %v2800 = vrot.slane %v2799, 4
        %v2801 = vmax.f32 %v2799, %v2800
        %v2802 = vrot.slane %v2801, 2
        %v2803 = vmax.f32 %v2801, %v2802
        %v2804 = vrot.slane %v2803, 1
        %v2805 = vmax.f32 %v2803, %v2804
        %v2806 = vsel %vm1176, %v2755, -inf
        %v2807 = vsel %vm1176, %v2756, -inf
        %v2808 = vmax.f32 %v2806, %v2807
        %v2809 = vrot.slane %v2808, 4
        %v2810 = vmax.f32 %v2808, %v2809
        %v2811 = vrot.slane %v2810, 2
        %v2812 = vmax.f32 %v2810, %v2811
        %v2813 = vrot.slane %v2812, 1
        %v2814 = vmax.f32 %v2812, %v2813
        %v2815 = vsel %vm1176, %v2757, -inf
        %v2816 = vsel %vm1176, %v2758, -inf
        %v2817 = vmax.f32 %v2815, %v2816
        %v2818 = vrot.slane %v2817, 4
        %v2819 = vmax.f32 %v2817, %v2818
        %v2820 = vrot.slane %v2819, 2
        %v2821 = vmax.f32 %v2819, %v2820
        %v2822 = vrot.slane %v2821, 1
        %v2823 = vmax.f32 %v2821, %v2822
        %v2824 = vsel %vm1176, %v2759, -inf
        %v2825 = vsel %vm1176, %v2760, -inf
        %v2826 = vmax.f32 %v2824, %v2825
        %v2827 = vrot.slane %v2826, 4
        %v2828 = vmax.f32 %v2826, %v2827
        %v2829 = vrot.slane %v2828, 2
        %v2830 = vmax.f32 %v2828, %v2829
        %v2831 = vrot.slane %v2830, 1
        %v2832 = vmax.f32 %v2830, %v2831
        %v2833 = vpack.c.bf16 %v2746, %v2745
        %v2834 = vpack.c.bf16 %v2748, %v2747
        %v2835 = vpack.c.bf16 %v2750, %v2749
        %v2836 = vpack.c.bf16 %v2752, %v2751
        %v2837 = vpack.c.bf16 %v2754, %v2753
        %v2838 = vpack.c.bf16 %v2756, %v2755
        %v2839 = vpack.c.bf16 %v2758, %v2757
        %v2840 = vpack.c.bf16 %v2760, %v2759
        %v2841 = vmax.bf16 %v2833, 0
        %v2842 = vmax.bf16 %v2834, 0
        %v2843 = vmax.bf16 %v2835, 0
        %v2844 = vmax.bf16 %v2836, 0
        %v2845 = vmax.bf16 %v2837, 0
        %v2846 = vmax.bf16 %v2838, 0
        %v2847 = vmax.bf16 %v2839, 0
        %v2848 = vmax.bf16 %v2840, 0
        %v2849 = vmax.f32 %v2769, 0.0
        %v2850 = vmax.f32 %v2778, 0.0
        %v2851 = vmax.f32 %v2787, 0.0
        %v2852 = vmax.f32 %v2796, 0.0
        %v2853 = vmax.f32 %v2805, 0.0
        %v2854 = vmax.f32 %v2814, 0.0
        %v2855 = vmax.f32 %v2823, 0.0
        %v2856 = vmax.f32 %v2832, 0.0
        %v2865 = vsel %vm1281, %v2850, %v2849
        %v2866 = vsel %vm1283, %v2851, %v2865
        %v2867 = vsel %vm1285, %v2852, %v2866
        %v2868 = vsel %vm1287, %v2853, %v2867
        %v2869 = vsel %vm1289, %v2854, %v2868
        %v2870 = vsel %vm1291, %v2855, %v2869
        %v2871 = vsel %vm1293, %v2856, %v2870
        %v2881 = vsel %vm1281, %v2778, %v2769
        %v2882 = vsel %vm1283, %v2787, %v2881
        %v2883 = vsel %vm1285, %v2796, %v2882
        %v2884 = vsel %vm1287, %v2805, %v2883
        %v2885 = vsel %vm1289, %v2814, %v2884
        %v2886 = vsel %vm1291, %v2823, %v2885
        %v2887 = vsel %vm1293, %v2832, %v2886
        %v2889 = vpack.c.bf16 %v2887, %v2871
        %s2890 = scalar_lea.vmem %s9, 32
        %v2891 = vld [vmem:[%s2890] sm:$0xf]
        %v2892 = vld [vmem:[%s2890 + $0x4] sm:$0xf]
        %v2893 = vld [vmem:[%s2890 + $0x8] sm:$0xf]
        %v2894 = vld [vmem:[%s2890 + $0xc] sm:$0xf]
        %v2899 = vunpack.c.l.b16 %v2891
        %v2900 = vunpack.c.l.b16 %v2892
        %v2901 = vunpack.c.l.b16 %v2893
        %v2902 = vunpack.c.l.b16 %v2894
        %v2903 = vpack.c.b16 %v2900, %v2899
        %v2904 = vpack.c.b16 %v2902, %v2901
        %v2908 = vsel %vm1176, %v2889, 0
        %2910 = vmatprep.subr.bf16.mxu0 0
        %2911 = vmatpush1.bf16.msra.mxu0 0
        %2912 = vmatprep.subr.bf16.mxu0 0
        %2913 = vmatpush1.bf16.msra.mxu0 0
        %2914 = vmatprep.subr.bf16.mxu0 0
        %2915 = vmatpush1.bf16.msra.mxu0 0
        %2916 = vmatprep.subr.bf16.mxu0 0
        %2917 = vmatpush1.bf16.msra.mxu0 0
        %2918 = vmatprep.subr.bf16.mxu0 0
        %2919 = vmatpush1.bf16.msra.mxu0 0
        %2920 = vmatprep.subr.bf16.mxu0 0
        %2921 = vmatpush1.bf16.msra.mxu0 0
        %2922 = vmatprep.subr.bf16.mxu0 0
        %2923 = vmatpush1.bf16.msra.mxu0 %v2904
        %2924 = vmatprep.subr.bf16.mxu0 0
        %2925 = vmatpush1.bf16.msra.mxu0 %v2903
        %2926 = vmatprep.subr.bf16.mxu0 0
        %2927 = vmatpush2.bf16.msra.mxu0 0
        %2928 = vmatprep.subr.bf16.mxu0 0
        %2929 = vmatpush2.bf16.msra.mxu0 0
        %2930 = vmatprep.subr.bf16.mxu0 0
        %2931 = vmatpush2.bf16.msra.mxu0 0
        %2932 = vmatprep.subr.bf16.mxu0 0
        %2933 = vmatpush2.bf16.msra.mxu0 0
        %2934 = vmatprep.subr.bf16.mxu0 0
        %2935 = vmatpush2.bf16.msra.mxu0 0
        %2936 = vmatprep.subr.bf16.mxu0 0
        %2937 = vmatpush2.bf16.msra.mxu0 0
        %2938 = vmatprep.subr.bf16.mxu0 0
        %2939 = vmatpush2.bf16.msra.mxu0 0
        %2940 = vmatprep.subr.bf16.mxu0 0
        %2941 = vmatpush2.bf16.msra.mxu0 0
        %2942 = vmatprep.mubr.bf16.mxu0 0
        %2943 = vmatmul.mubr.bf16.gmra.mxu0 %v2908
        %v2944 = vpop.f32.mrf.mxu0
        %v2945 = vadd.f32 0.0, %v2944
        %v2946 = vpop.f32.mrf.mxu0
        %v2947 = vpop.f32.mrf.mxu0
        %v2948 = vadd.f32 0.0, %v2947
        %v2949 = vpop.f32.mrf.mxu0
        %2950 = vdwg.mxu0
        %s2951 = scalar_lea.vmem %s8, 2
        %v2952 = vld [vmem:[%s2951] sm:$0x1]
        %v2954 = vlaneseq
        %v2955 = vshrl.u32 %v2954, 7
        %v2956 = vsub.s32 0, %v2955
        %v2957 = vrot.slane %v2952, %v2956
        %v2959 = vadd.f32 %v2945, %v2957
        %s2960 = scalar_lea.vmem %s7, 32
        %v2961 = vld [vmem:[%s2960] sm:$0xf]
        %v2962 = vld [vmem:[%s2960 + $0x4] sm:$0xf]
        %v2963 = vld [vmem:[%s2960 + $0x8] sm:$0xf]
        %v2964 = vld [vmem:[%s2960 + $0xc] sm:$0xf]
        %v2969 = vunpack.c.l.b16 %v2961
        %v2970 = vunpack.c.l.b16 %v2962
        %v2971 = vunpack.c.l.b16 %v2963
        %v2972 = vunpack.c.l.b16 %v2964
        %v2973 = vpack.c.b16 %v2970, %v2969
        %v2974 = vpack.c.b16 %v2972, %v2971
        %v2978 = vsel %vm1176, %v2841, 0
        %v2981 = vsel %vm1176, %v2842, 0
        %v2984 = vsel %vm1176, %v2843, 0
        %v2987 = vsel %vm1176, %v2844, 0
        %v2990 = vsel %vm1176, %v2845, 0
        %v2993 = vsel %vm1176, %v2846, 0
        %v2996 = vsel %vm1176, %v2847, 0
        %v2999 = vsel %vm1176, %v2848, 0
        %3001 = vmatprep.subr.bf16.mxu0 0
        %3002 = vmatpush1.bf16.msra.mxu0 0
        %3003 = vmatprep.subr.bf16.mxu0 0
        %3004 = vmatpush1.bf16.msra.mxu0 0
        %3005 = vmatprep.subr.bf16.mxu0 0
        %3006 = vmatpush1.bf16.msra.mxu0 0
        %3007 = vmatprep.subr.bf16.mxu0 0
        %3008 = vmatpush1.bf16.msra.mxu0 0
        %3009 = vmatprep.subr.bf16.mxu0 0
        %3010 = vmatpush1.bf16.msra.mxu0 0
        %3011 = vmatprep.subr.bf16.mxu0 0
        %3012 = vmatpush1.bf16.msra.mxu0 0
        %3013 = vmatprep.subr.bf16.mxu0 0
        %3014 = vmatpush1.bf16.msra.mxu0 %v2974
        %3015 = vmatprep.subr.bf16.mxu0 0
        %3016 = vmatpush1.bf16.msra.mxu0 %v2973
        %3017 = vmatprep.subr.bf16.mxu0 0
        %3018 = vmatpush2.bf16.msra.mxu0 0
        %3019 = vmatprep.subr.bf16.mxu0 0
        %3020 = vmatpush2.bf16.msra.mxu0 0
        %3021 = vmatprep.subr.bf16.mxu0 0
        %3022 = vmatpush2.bf16.msra.mxu0 0
        %3023 = vmatprep.subr.bf16.mxu0 0
        %3024 = vmatpush2.bf16.msra.mxu0 0
        %3025 = vmatprep.subr.bf16.mxu0 0
        %3026 = vmatpush2.bf16.msra.mxu0 0
        %3027 = vmatprep.subr.bf16.mxu0 0
        %3028 = vmatpush2.bf16.msra.mxu0 0
        %3029 = vmatprep.subr.bf16.mxu0 0
        %3030 = vmatpush2.bf16.msra.mxu0 0
        %3031 = vmatprep.subr.bf16.mxu0 0
        %3032 = vmatpush2.bf16.msra.mxu0 0
        %3033 = vmatprep.mubr.bf16.mxu0 0
        %3034 = vmatmul.mubr.bf16.gmra.mxu0 %v2978
        %v3035 = vpop.f32.mrf.mxu0
        %v3036 = vadd.f32 0.0, %v3035
        %v3037 = vpop.f32.mrf.mxu0
        %v3038 = vpop.f32.mrf.mxu0
        %v3039 = vadd.f32 0.0, %v3038
        %v3040 = vpop.f32.mrf.mxu0
        %3041 = vmatprep.mubr.bf16.mxu0 0
        %3042 = vmatmul.mubr.bf16.gmra.mxu0 %v2981
        %v3043 = vpop.f32.mrf.mxu0
        %v3044 = vadd.f32 0.0, %v3043
        %v3045 = vpop.f32.mrf.mxu0
        %v3046 = vpop.f32.mrf.mxu0
        %v3047 = vadd.f32 0.0, %v3046
        %v3048 = vpop.f32.mrf.mxu0
        %3049 = vmatprep.mubr.bf16.mxu0 0
        %3050 = vmatmul.mubr.bf16.gmra.mxu0 %v2984
        %v3051 = vpop.f32.mrf.mxu0
        %v3052 = vadd.f32 0.0, %v3051
        %v3053 = vpop.f32.mrf.mxu0
        %v3054 = vpop.f32.mrf.mxu0
        %v3055 = vadd.f32 0.0, %v3054
        %v3056 = vpop.f32.mrf.mxu0
        %3057 = vmatprep.mubr.bf16.mxu0 0
        %3058 = vmatmul.mubr.bf16.gmra.mxu0 %v2987
        %v3059 = vpop.f32.mrf.mxu0
        %v3060 = vadd.f32 0.0, %v3059
        %v3061 = vpop.f32.mrf.mxu0
        %v3062 = vpop.f32.mrf.mxu0
        %v3063 = vadd.f32 0.0, %v3062
        %v3064 = vpop.f32.mrf.mxu0
        %3065 = vmatprep.mubr.bf16.mxu0 0
        %3066 = vmatmul.mubr.bf16.gmra.mxu0 %v2990
        %v3067 = vpop.f32.mrf.mxu0
        %v3068 = vadd.f32 0.0, %v3067
        %v3069 = vpop.f32.mrf.mxu0
        %v3070 = vpop.f32.mrf.mxu0
        %v3071 = vadd.f32 0.0, %v3070
        %v3072 = vpop.f32.mrf.mxu0
        %3073 = vmatprep.mubr.bf16.mxu0 0
        %3074 = vmatmul.mubr.bf16.gmra.mxu0 %v2993
        %v3075 = vpop.f32.mrf.mxu0
        %v3076 = vadd.f32 0.0, %v3075
        %v3077 = vpop.f32.mrf.mxu0
        %v3078 = vpop.f32.mrf.mxu0
        %v3079 = vadd.f32 0.0, %v3078
        %v3080 = vpop.f32.mrf.mxu0
        %3081 = vmatprep.mubr.bf16.mxu0 0
        %3082 = vmatmul.mubr.bf16.gmra.mxu0 %v2996
        %v3083 = vpop.f32.mrf.mxu0
        %v3084 = vadd.f32 0.0, %v3083
        %v3085 = vpop.f32.mrf.mxu0
        %v3086 = vpop.f32.mrf.mxu0
        %v3087 = vadd.f32 0.0, %v3086
        %v3088 = vpop.f32.mrf.mxu0
        %3089 = vmatprep.mubr.bf16.mxu0 0
        %3090 = vmatmul.mubr.bf16.gmra.mxu0 %v2999
        %v3091 = vpop.f32.mrf.mxu0
        %v3092 = vadd.f32 0.0, %v3091
        %v3093 = vpop.f32.mrf.mxu0
        %v3094 = vpop.f32.mrf.mxu0
        %v3095 = vadd.f32 0.0, %v3094
        %v3096 = vpop.f32.mrf.mxu0
        %3097 = vdwg.mxu0
        %v3099 = vcombine.high %v2959, %v2959
        %v3101 = vunpack.c.l.s4 1966171168
        %v3102 = vunpack.c.0.s8 %v3101
        %v3103 = vlaneseq
        %v3104 = vshrl.u32 %v3103, 7
        %v3105 = vsub.s32 %v3102, %v3104
        %v3106 = vrot.slane %v2959, %v3105
        %v3108 = vunpack.c.l.s4 1966171168
        %v3109 = vunpack.c.0.s8 %v3108
        %v3110 = vlaneseq
        %v3111 = vshrl.u32 %v3110, 7
        %v3112 = vsub.s32 %v3109, %v3111
        %v3113 = vrot.slane %v3099, %v3112
        %v3114 = vcombine.high %v3106, %v3106
        %v3115 = vcombine.high %v3113, %v3113
        %v3117 = vunpack.c.l.s4 1966171168
        %v3118 = vunpack.c.0.s8 %v3117
        %v3119 = vlaneseq
        %v3120 = vshrl.u32 %v3119, 7
        %v3121 = vsub.s32 %v3118, %v3120
        %v3122 = vrot.slane %v3106, %v3121
        %v3124 = vunpack.c.l.s4 1966171168
        %v3125 = vunpack.c.0.s8 %v3124
        %v3126 = vlaneseq
        %v3127 = vshrl.u32 %v3126, 7
        %v3128 = vsub.s32 %v3125, %v3127
        %v3129 = vrot.slane %v3113, %v3128
        %v3131 = vunpack.c.l.s4 1966171168
        %v3132 = vunpack.c.0.s8 %v3131
        %v3133 = vlaneseq
        %v3134 = vshrl.u32 %v3133, 7
        %v3135 = vsub.s32 %v3132, %v3134
        %v3136 = vrot.slane %v3114, %v3135
        %v3138 = vunpack.c.l.s4 1966171168
        %v3139 = vunpack.c.0.s8 %v3138
        %v3140 = vlaneseq
        %v3141 = vshrl.u32 %v3140, 7
        %v3142 = vsub.s32 %v3139, %v3141
        %v3143 = vrot.slane %v3115, %v3142
        %v3144 = vcombine.high %v3122, %v3122
        %v3145 = vcombine.high %v3129, %v3129
        %v3146 = vcombine.high %v3136, %v3136
        %v3147 = vcombine.high %v3143, %v3143
        %v3148 = vlaneseq
        %v3149 = vshrl.u32 %v3148, 7
        %v3150 = vsub.s32 0, %v3149
        %v3151 = vrot.slane %v3122, %v3150
        %v3152 = vlaneseq
        %v3153 = vshrl.u32 %v3152, 7
        %v3154 = vsub.s32 0, %v3153
        %v3155 = vrot.slane %v3136, %v3154
        %v3156 = vlaneseq
        %v3157 = vshrl.u32 %v3156, 7
        %v3158 = vsub.s32 0, %v3157
        %v3159 = vrot.slane %v3144, %v3158
        %v3160 = vlaneseq
        %v3161 = vshrl.u32 %v3160, 7
        %v3162 = vsub.s32 0, %v3161
        %v3163 = vrot.slane %v3146, %v3162
        %v3164 = vlaneseq
        %v3165 = vshrl.u32 %v3164, 7
        %v3166 = vsub.s32 0, %v3165
        %v3167 = vrot.slane %v3129, %v3166
        %v3168 = vlaneseq
        %v3169 = vshrl.u32 %v3168, 7
        %v3170 = vsub.s32 0, %v3169
        %v3171 = vrot.slane %v3143, %v3170
        %v3172 = vlaneseq
        %v3173 = vshrl.u32 %v3172, 7
        %v3174 = vsub.s32 0, %v3173
        %v3175 = vrot.slane %v3145, %v3174
        %v3176 = vlaneseq
        %v3177 = vshrl.u32 %v3176, 7
        %v3178 = vsub.s32 0, %v3177
        %v3179 = vrot.slane %v3147, %v3178
        %v3188 = vadd.f32 %v3036, %v3151
        %v3189 = vadd.f32 %v3039, %v3151
        %v3190 = vadd.f32 %v3044, %v3155
        %v3191 = vadd.f32 %v3047, %v3155
        %v3192 = vadd.f32 %v3052, %v3159
        %v3193 = vadd.f32 %v3055, %v3159
        %v3194 = vadd.f32 %v3060, %v3163
        %v3195 = vadd.f32 %v3063, %v3163
        %v3196 = vadd.f32 %v3068, %v3167
        %v3197 = vadd.f32 %v3071, %v3167
        %v3198 = vadd.f32 %v3076, %v3171
        %v3199 = vadd.f32 %v3079, %v3171
        %v3200 = vadd.f32 %v3084, %v3175
        %v3201 = vadd.f32 %v3087, %v3175
        %v3202 = vadd.f32 %v3092, %v3179
        %v3203 = vadd.f32 %v3095, %v3179
        %v3204 = vmax.f32 %v3188, 0.0
        %v3205 = vmax.f32 %v3189, 0.0
        %v3206 = vmax.f32 %v3190, 0.0
        %v3207 = vmax.f32 %v3191, 0.0
        %v3208 = vmax.f32 %v3192, 0.0
        %v3209 = vmax.f32 %v3193, 0.0
        %v3210 = vmax.f32 %v3194, 0.0
        %v3211 = vmax.f32 %v3195, 0.0
        %v3212 = vmax.f32 %v3196, 0.0
        %v3213 = vmax.f32 %v3197, 0.0
        %v3214 = vmax.f32 %v3198, 0.0
        %v3215 = vmax.f32 %v3199, 0.0
        %v3216 = vmax.f32 %v3200, 0.0
        %v3217 = vmax.f32 %v3201, 0.0
        %v3218 = vmax.f32 %v3202, 0.0
        %v3219 = vmax.f32 %v3203, 0.0
        %v3220 = vpack.c.bf16 %v3205, %v3204
        %v3221 = vpack.c.bf16 %v3207, %v3206
        %v3222 = vpack.c.bf16 %v3209, %v3208
        %v3223 = vpack.c.bf16 %v3211, %v3210
        %v3224 = vpack.c.bf16 %v3213, %v3212
        %v3225 = vpack.c.bf16 %v3215, %v3214
        %v3226 = vpack.c.bf16 %v3217, %v3216
        %v3227 = vpack.c.bf16 %v3219, %v3218
        %3236 = vrot.lane.b32.xlu0 %v3220, 32
        %v3237 = vpop.permute.xlu0 %3236
        %3238 = vrot.lane.b32.xlu0 %v3221, 32
        %v3239 = vpop.permute.xlu0 %3238
        %3240 = vrot.lane.b32.xlu0 %v3222, 32
        %v3241 = vpop.permute.xlu0 %3240
        %3242 = vrot.lane.b32.xlu0 %v3223, 32
        %v3243 = vpop.permute.xlu0 %3242
        %3244 = vrot.lane.b32.xlu0 %v3224, 32
        %v3245 = vpop.permute.xlu0 %3244
        %3246 = vrot.lane.b32.xlu0 %v3225, 32
        %v3247 = vpop.permute.xlu0 %3246
        %3248 = vrot.lane.b32.xlu0 %v3226, 32
        %v3249 = vpop.permute.xlu0 %3248
        %3250 = vrot.lane.b32.xlu0 %v3227, 32
        %v3251 = vpop.permute.xlu0 %3250
        %v3254 = vsel %vm1176, %v2833, %v3237
        %v3257 = vsel %vm1176, %v2834, %v3239
        %v3260 = vsel %vm1176, %v2835, %v3241
        %v3263 = vsel %vm1176, %v2836, %v3243
        %v3266 = vsel %vm1176, %v2837, %v3245
        %v3269 = vsel %vm1176, %v2838, %v3247
        %v3272 = vsel %vm1176, %v2839, %v3249
        %v3275 = vsel %vm1176, %v2840, %v3251
        %s3276 = scalar_lea.vmem %s10, 64
        %v3277 = vld [vmem:[%s3276] sm:$0xf]
        %v3278 = vld [vmem:[%s3276 + $0x4] sm:$0xf]
        %v3279 = vld [vmem:[%s3276 + $0x8] sm:$0xf]
        %v3280 = vld [vmem:[%s3276 + $0xc] sm:$0xf]
        %v3281 = vld [vmem:[%s3276 + $0x10] sm:$0xf]
        %v3282 = vld [vmem:[%s3276 + $0x14] sm:$0xf]
        %v3283 = vld [vmem:[%s3276 + $0x18] sm:$0xf]
        %v3284 = vld [vmem:[%s3276 + $0x1c] sm:$0xf]
        %s3285 = scalar_lea.vmem %s11, 2
        %v3286 = vld [vmem:[%s3285] sm:$0x1]
        %v3288 = vlaneseq
        %v3289 = vshrl.u32 %v3288, 7
        %v3290 = vsub.s32 0, %v3289
        %v3291 = vrot.slane %v3286, %v3290
        %v3301 = vunpack.c.l.b16 %v3277
        %v3302 = vunpack.c.l.b16 %v3278
        %v3303 = vunpack.c.l.b16 %v3279
        %v3304 = vunpack.c.l.b16 %v3280
        %v3305 = vunpack.c.l.b16 %v3281
        %v3306 = vunpack.c.l.b16 %v3282
        %v3307 = vunpack.c.l.b16 %v3283
        %v3308 = vunpack.c.l.b16 %v3284
        %v3309 = vpack.c.b16 %v3302, %v3301
        %v3310 = vpack.c.b16 %v3304, %v3303
        %v3311 = vpack.c.b16 %v3306, %v3305
        %v3312 = vpack.c.b16 %v3308, %v3307
        %v3317 = vsel %vm813, %v3254, 0
        %v3319 = vsel %vm813, %v3257, 0
        %v3321 = vsel %vm813, %v3260, 0
        %v3323 = vsel %vm813, %v3263, 0
        %v3325 = vsel %vm813, %v3266, 0
        %v3327 = vsel %vm813, %v3269, 0
        %v3329 = vsel %vm813, %v3272, 0
        %v3331 = vsel %vm813, %v3275, 0
        %3333 = vmatprep.subr.bf16.mxu0 0
        %3334 = vmatpush1.bf16.msra.mxu0 0
        %3335 = vmatprep.subr.bf16.mxu0 0
        %3336 = vmatpush1.bf16.msra.mxu0 0
        %3337 = vmatprep.subr.bf16.mxu0 0
        %3338 = vmatpush1.bf16.msra.mxu0 0
        %3339 = vmatprep.subr.bf16.mxu0 0
        %3340 = vmatpush1.bf16.msra.mxu0 0
        %3341 = vmatprep.subr.bf16.mxu0 0
        %3342 = vmatpush1.bf16.msra.mxu0 %v3312
        %3343 = vmatprep.subr.bf16.mxu0 0
        %3344 = vmatpush1.bf16.msra.mxu0 %v3311
        %3345 = vmatprep.subr.bf16.mxu0 0
        %3346 = vmatpush1.bf16.msra.mxu0 %v3310
        %3347 = vmatprep.subr.bf16.mxu0 0
        %3348 = vmatpush1.bf16.msra.mxu0 %v3309
        %3349 = vmatprep.subr.bf16.mxu0 0
        %3350 = vmatpush2.bf16.msra.mxu0 0
        %3351 = vmatprep.subr.bf16.mxu0 0
        %3352 = vmatpush2.bf16.msra.mxu0 0
        %3353 = vmatprep.subr.bf16.mxu0 0
        %3354 = vmatpush2.bf16.msra.mxu0 0
        %3355 = vmatprep.subr.bf16.mxu0 0
        %3356 = vmatpush2.bf16.msra.mxu0 0
        %3357 = vmatprep.subr.bf16.mxu0 0
        %3358 = vmatpush2.bf16.msra.mxu0 0
        %3359 = vmatprep.subr.bf16.mxu0 0
        %3360 = vmatpush2.bf16.msra.mxu0 0
        %3361 = vmatprep.subr.bf16.mxu0 0
        %3362 = vmatpush2.bf16.msra.mxu0 0
        %3363 = vmatprep.subr.bf16.mxu0 0
        %3364 = vmatpush2.bf16.msra.mxu0 0
        %3365 = vmatprep.mubr.bf16.mxu0 0
        %3366 = vmatmul.mubr.bf16.gmra.mxu0 %v3317
        %v3367 = vpop.f32.mrf.mxu0
        %v3368 = vadd.f32 %v3291, %v3367
        %v3369 = vpop.f32.mrf.mxu0
        %v3370 = vpop.f32.mrf.mxu0
        %v3371 = vadd.f32 %v3291, %v3370
        %v3372 = vpop.f32.mrf.mxu0
        %3373 = vmatprep.mubr.bf16.mxu0 0
        %3374 = vmatmul.mubr.bf16.gmra.mxu0 %v3319
        %v3375 = vpop.f32.mrf.mxu0
        %v3376 = vadd.f32 %v3291, %v3375
        %v3377 = vpop.f32.mrf.mxu0
        %v3378 = vpop.f32.mrf.mxu0
        %v3379 = vadd.f32 %v3291, %v3378
        %v3380 = vpop.f32.mrf.mxu0
        %3381 = vmatprep.mubr.bf16.mxu0 0
        %3382 = vmatmul.mubr.bf16.gmra.mxu0 %v3321
        %v3383 = vpop.f32.mrf.mxu0
        %v3384 = vadd.f32 %v3291, %v3383
        %v3385 = vpop.f32.mrf.mxu0
        %v3386 = vpop.f32.mrf.mxu0
        %v3387 = vadd.f32 %v3291, %v3386
        %v3388 = vpop.f32.mrf.mxu0
        %3389 = vmatprep.mubr.bf16.mxu0 0
        %3390 = vmatmul.mubr.bf16.gmra.mxu0 %v3323
        %v3391 = vpop.f32.mrf.mxu0
        %v3392 = vadd.f32 %v3291, %v3391
        %v3393 = vpop.f32.mrf.mxu0
        %v3394 = vpop.f32.mrf.mxu0
        %v3395 = vadd.f32 %v3291, %v3394
        %v3396 = vpop.f32.mrf.mxu0
        %3397 = vmatprep.mubr.bf16.mxu0 0
        %3398 = vmatmul.mubr.bf16.gmra.mxu0 %v3325
        %v3399 = vpop.f32.mrf.mxu0
        %v3400 = vadd.f32 %v3291, %v3399
        %v3401 = vpop.f32.mrf.mxu0
        %v3402 = vpop.f32.mrf.mxu0
        %v3403 = vadd.f32 %v3291, %v3402
        %v3404 = vpop.f32.mrf.mxu0
        %3405 = vmatprep.mubr.bf16.mxu0 0
        %3406 = vmatmul.mubr.bf16.gmra.mxu0 %v3327
        %v3407 = vpop.f32.mrf.mxu0
        %v3408 = vadd.f32 %v3291, %v3407
        %v3409 = vpop.f32.mrf.mxu0
        %v3410 = vpop.f32.mrf.mxu0
        %v3411 = vadd.f32 %v3291, %v3410
        %v3412 = vpop.f32.mrf.mxu0
        %3413 = vmatprep.mubr.bf16.mxu0 0
        %3414 = vmatmul.mubr.bf16.gmra.mxu0 %v3329
        %v3415 = vpop.f32.mrf.mxu0
        %v3416 = vadd.f32 %v3291, %v3415
        %v3417 = vpop.f32.mrf.mxu0
        %v3418 = vpop.f32.mrf.mxu0
        %v3419 = vadd.f32 %v3291, %v3418
        %v3420 = vpop.f32.mrf.mxu0
        %3421 = vmatprep.mubr.bf16.mxu0 0
        %3422 = vmatmul.mubr.bf16.gmra.mxu0 %v3331
        %v3423 = vpop.f32.mrf.mxu0
        %v3424 = vadd.f32 %v3291, %v3423
        %v3425 = vpop.f32.mrf.mxu0
        %v3426 = vpop.f32.mrf.mxu0
        %v3427 = vadd.f32 %v3291, %v3426
        %v3428 = vpop.f32.mrf.mxu0
        %3429 = vdwg.mxu0
        %v3431 = vcombine.high %v2948, %v2948
        %v3433 = vunpack.c.l.s4 1966171168
        %v3434 = vunpack.c.0.s8 %v3433
        %v3435 = vlaneseq
        %v3436 = vshrl.u32 %v3435, 7
        %v3437 = vsub.s32 %v3434, %v3436
        %v3438 = vrot.slane %v2948, %v3437
        %v3440 = vunpack.c.l.s4 1966171168
        %v3441 = vunpack.c.0.s8 %v3440
        %v3442 = vlaneseq
        %v3443 = vshrl.u32 %v3442, 7
        %v3444 = vsub.s32 %v3441, %v3443
        %v3445 = vrot.slane %v3431, %v3444
        %v3446 = vcombine.high %v3438, %v3438
        %v3447 = vcombine.high %v3445, %v3445
        %v3449 = vunpack.c.l.s4 1966171168
        %v3450 = vunpack.c.0.s8 %v3449
        %v3451 = vlaneseq
        %v3452 = vshrl.u32 %v3451, 7
        %v3453 = vsub.s32 %v3450, %v3452
        %v3454 = vrot.slane %v3438, %v3453
        %v3456 = vunpack.c.l.s4 1966171168
        %v3457 = vunpack.c.0.s8 %v3456
        %v3458 = vlaneseq
        %v3459 = vshrl.u32 %v3458, 7
        %v3460 = vsub.s32 %v3457, %v3459
        %v3461 = vrot.slane %v3445, %v3460
        %v3463 = vunpack.c.l.s4 1966171168
        %v3464 = vunpack.c.0.s8 %v3463
        %v3465 = vlaneseq
        %v3466 = vshrl.u32 %v3465, 7
        %v3467 = vsub.s32 %v3464, %v3466
        %v3468 = vrot.slane %v3446, %v3467
        %v3470 = vunpack.c.l.s4 1966171168
        %v3471 = vunpack.c.0.s8 %v3470
        %v3472 = vlaneseq
        %v3473 = vshrl.u32 %v3472, 7
        %v3474 = vsub.s32 %v3471, %v3473
        %v3475 = vrot.slane %v3447, %v3474
        %v3476 = vcombine.high %v3454, %v3454
        %v3477 = vcombine.high %v3461, %v3461
        %v3478 = vcombine.high %v3468, %v3468
        %v3479 = vcombine.high %v3475, %v3475
        %v3480 = vlaneseq
        %v3481 = vshrl.u32 %v3480, 7
        %v3482 = vsub.s32 0, %v3481
        %v3483 = vrot.slane %v3454, %v3482
        %v3484 = vlaneseq
        %v3485 = vshrl.u32 %v3484, 7
        %v3486 = vsub.s32 0, %v3485
        %v3487 = vrot.slane %v3468, %v3486
        %v3488 = vlaneseq
        %v3489 = vshrl.u32 %v3488, 7
        %v3490 = vsub.s32 0, %v3489
        %v3491 = vrot.slane %v3476, %v3490
        %v3492 = vlaneseq
        %v3493 = vshrl.u32 %v3492, 7
        %v3494 = vsub.s32 0, %v3493
        %v3495 = vrot.slane %v3478, %v3494
        %v3496 = vlaneseq
        %v3497 = vshrl.u32 %v3496, 7
        %v3498 = vsub.s32 0, %v3497
        %v3499 = vrot.slane %v3461, %v3498
        %v3500 = vlaneseq
        %v3501 = vshrl.u32 %v3500, 7
        %v3502 = vsub.s32 0, %v3501
        %v3503 = vrot.slane %v3475, %v3502
        %v3504 = vlaneseq
        %v3505 = vshrl.u32 %v3504, 7
        %v3506 = vsub.s32 0, %v3505
        %v3507 = vrot.slane %v3477, %v3506
        %v3508 = vlaneseq
        %v3509 = vshrl.u32 %v3508, 7
        %v3510 = vsub.s32 0, %v3509
        %v3511 = vrot.slane %v3479, %v3510
        %3512 = vrot.lane.b32.xlu0 %v3483, 96
        %v3513 = vpop.permute.xlu0 %3512
        %3514 = vrot.lane.b32.xlu0 %v3487, 96
        %v3515 = vpop.permute.xlu0 %3514
        %3516 = vrot.lane.b32.xlu0 %v3491, 96
        %v3517 = vpop.permute.xlu0 %3516
        %3518 = vrot.lane.b32.xlu0 %v3495, 96
        %v3519 = vpop.permute.xlu0 %3518
        %3520 = vrot.lane.b32.xlu0 %v3499, 96
        %v3521 = vpop.permute.xlu0 %3520
        %3522 = vrot.lane.b32.xlu0 %v3503, 96
        %v3523 = vpop.permute.xlu0 %3522
        %3524 = vrot.lane.b32.xlu0 %v3507, 96
        %v3525 = vpop.permute.xlu0 %3524
        %3526 = vrot.lane.b32.xlu0 %v3511, 96
        %v3527 = vpop.permute.xlu0 %3526
        %v3536 = vadd.f32 %v3368, %v3513
        %v3537 = vadd.f32 %v3371, %v3513
        %v3538 = vadd.f32 %v3376, %v3515
        %v3539 = vadd.f32 %v3379, %v3515
        %v3540 = vadd.f32 %v3384, %v3517
        %v3541 = vadd.f32 %v3387, %v3517
        %v3542 = vadd.f32 %v3392, %v3519
        %v3543 = vadd.f32 %v3395, %v3519
        %v3544 = vadd.f32 %v3400, %v3521
        %v3545 = vadd.f32 %v3403, %v3521
        %v3546 = vadd.f32 %v3408, %v3523
        %v3547 = vadd.f32 %v3411, %v3523
        %v3548 = vadd.f32 %v3416, %v3525
        %v3549 = vadd.f32 %v3419, %v3525
        %v3550 = vadd.f32 %v3424, %v3527
        %v3551 = vadd.f32 %v3427, %v3527
        %v3552 = vsel %vm1176, %v3536, -inf
        %v3553 = vsel %vm1176, %v3537, -inf
        %v3554 = vmax.f32 %v3552, %v3553
        %v3555 = vrot.slane %v3554, 4
        %v3556 = vmax.f32 %v3554, %v3555
        %v3557 = vrot.slane %v3556, 2
        %v3558 = vmax.f32 %v3556, %v3557
        %v3559 = vrot.slane %v3558, 1
        %v3560 = vmax.f32 %v3558, %v3559
        %v3561 = vsel %vm1176, %v3538, -inf
        %v3562 = vsel %vm1176, %v3539, -inf
        %v3563 = vmax.f32 %v3561, %v3562
        %v3564 = vrot.slane %v3563, 4
        %v3565 = vmax.f32 %v3563, %v3564
        %v3566 = vrot.slane %v3565, 2
        %v3567 = vmax.f32 %v3565, %v3566
        %v3568 = vrot.slane %v3567, 1
        %v3569 = vmax.f32 %v3567, %v3568
        %v3570 = vsel %vm1176, %v3540, -inf
        %v3571 = vsel %vm1176, %v3541, -inf
        %v3572 = vmax.f32 %v3570, %v3571
        %v3573 = vrot.slane %v3572, 4
        %v3574 = vmax.f32 %v3572, %v3573
        %v3575 = vrot.slane %v3574, 2
        %v3576 = vmax.f32 %v3574, %v3575
        %v3577 = vrot.slane %v3576, 1
        %v3578 = vmax.f32 %v3576, %v3577
        %v3579 = vsel %vm1176, %v3542, -inf
        %v3580 = vsel %vm1176, %v3543, -inf
        %v3581 = vmax.f32 %v3579, %v3580
        %v3582 = vrot.slane %v3581, 4
        %v3583 = vmax.f32 %v3581, %v3582
        %v3584 = vrot.slane %v3583, 2
        %v3585 = vmax.f32 %v3583, %v3584
        %v3586 = vrot.slane %v3585, 1
        %v3587 = vmax.f32 %v3585, %v3586
        %v3588 = vsel %vm1176, %v3544, -inf
        %v3589 = vsel %vm1176, %v3545, -inf
        %v3590 = vmax.f32 %v3588, %v3589
        %v3591 = vrot.slane %v3590, 4
        %v3592 = vmax.f32 %v3590, %v3591
        %v3593 = vrot.slane %v3592, 2
        %v3594 = vmax.f32 %v3592, %v3593
        %v3595 = vrot.slane %v3594, 1
        %v3596 = vmax.f32 %v3594, %v3595
        %v3597 = vsel %vm1176, %v3546, -inf
        %v3598 = vsel %vm1176, %v3547, -inf
        %v3599 = vmax.f32 %v3597, %v3598
        %v3600 = vrot.slane %v3599, 4
        %v3601 = vmax.f32 %v3599, %v3600
        %v3602 = vrot.slane %v3601, 2
        %v3603 = vmax.f32 %v3601, %v3602
        %v3604 = vrot.slane %v3603, 1
        %v3605 = vmax.f32 %v3603, %v3604
        %v3606 = vsel %vm1176, %v3548, -inf
        %v3607 = vsel %vm1176, %v3549, -inf
        %v3608 = vmax.f32 %v3606, %v3607
        %v3609 = vrot.slane %v3608, 4
        %v3610 = vmax.f32 %v3608, %v3609
        %v3611 = vrot.slane %v3610, 2
        %v3612 = vmax.f32 %v3610, %v3611
        %v3613 = vrot.slane %v3612, 1
        %v3614 = vmax.f32 %v3612, %v3613
        %v3615 = vsel %vm1176, %v3550, -inf
        %v3616 = vsel %vm1176, %v3551, -inf
        %v3617 = vmax.f32 %v3615, %v3616
        %v3618 = vrot.slane %v3617, 4
        %v3619 = vmax.f32 %v3617, %v3618
        %v3620 = vrot.slane %v3619, 2
        %v3621 = vmax.f32 %v3619, %v3620
        %v3622 = vrot.slane %v3621, 1
        %v3623 = vmax.f32 %v3621, %v3622
        %v3632 = vsel %vm1281, %v3569, %v3560
        %v3633 = vsel %vm1283, %v3578, %v3632
        %v3634 = vsel %vm1285, %v3587, %v3633
        %v3635 = vsel %vm1287, %v3596, %v3634
        %v3636 = vsel %vm1289, %v3605, %v3635
        %v3637 = vsel %vm1291, %v3614, %v3636
        %v3638 = vsel %vm1293, %v3623, %v3637
        %3640 = vst.msk [vmem:[%s409] sm:$0xff] %vm1176, %v3638
        %s3641 = sand.u32 %s291, 1
        %s3642 = scalar_lea.sflag [#allocation3], %s3641
        %s3643 = sand.u32 %s291, 1
        %s3644 = smul.addr %s3643, 8
        %s3645 = scalar_lea.vmem [#allocation2], %s3644
        // Predicated region
        $region69: #{tpu_custom_call.1} parent=67 // pred_check
          %p3646 = pneg %p301
        $region70: #{tpu_custom_call.1} parent=67 // pred_check_branch
          %3648 = sbr.rel (%p3646) target = $region72
        $region71: #{tpu_custom_call.1} parent=67 // pred_region
          %s3650 = ssub.s32 128, 128
          %3651 = vsyncadd %s3642, %s3650
          %s3652 = smul.addr %s26, 128
          %s3653 = scalar_lea.hbm %s12, %s3652
          %s3655 = sshll.u32 %s3645, 4
          %s3656 = int_to_ptr.vmem [resolvable:$true] %s3655
          %3658 = dma.vmem_to_hbm [thread:$0]  %s3656, 128, %s3653, %s3642
        $region72: #{tpu_custom_call.1} parent=67 // pred_fallthru
          _
      $region68: #{tpu_custom_call.1} parent=5 // pred_fallthru
        _
      %p3659 = scmp.le.s32.totalorder 2, %s21
      // Predicated region
      $region73: #{tpu_custom_call.1} parent=5 // pred_check
        %p3660 = pneg %p3659
      $region74: #{tpu_custom_call.1} parent=5 // pred_check_branch
        %3662 = sbr.rel (%p3660) target = $region76
      $region75: #{tpu_custom_call.1} parent=5 // pred_region
        %s3663 = ssub.s32 %s21, 2
        // Predicated region
        $region77: #{tpu_custom_call.1} parent=75 // pred_check
          %p3664 = pneg %p307
        $region78: #{tpu_custom_call.1} parent=75 // pred_check_branch
          %3666 = sbr.rel (%p3664) target = $region80
        $region79: #{tpu_custom_call.1} parent=75 // pred_region
          %s3667 = sand.u32 %s292, 1
          %s3668 = scalar_lea.sflag [#allocation3], %s3667
          %s3669 = sand.u32 %s292, 1
          %s3670 = smul.addr %s3669, 8
          %s3671 = scalar_lea.vmem [#allocation2], %s3670
          %3672 = dma.done %s3668, 128
        $region80: #{tpu_custom_call.1} parent=75 // pred_fallthru
          _
      $region76: #{tpu_custom_call.1} parent=5 // pred_fallthru
        _
    $region6: #{tpu_custom_call.1} parent=1 // loop_footer
      %s25 = sadd.s32 1, %s21
    $region7: #{tpu_custom_call.1} parent=1 // loop_footer_branch
      %20 = sbr.rel target = $region3
    $region8: #{tpu_custom_call.1} parent=1 // loop_exit
      _
    %3673 = vsyncpa [#allocation3], 1
    %s3674 = scalar_lea.sflag [#allocation3], 1
    %3675 = vsyncpa %s3674, 1

</llo_original>
